<compile_context>
chip_gen: v7x
topology: tpu7x:2x2x1
jax: 0.10.0
libtpu: 0.0.40
codegen_flags: <defaults>
</compile_context>

<pallas_src>
import jax
import jax.numpy as jnp
from jax import lax
from jax.experimental import pallas as pl
from jax.experimental.pallas import tpu as pltpu

KSIZE = 7
PAD = 3
LN_EPS = 1e-5
LANE = 128
_SQRT2 = 1.4142135623730951
_GELU_C = 0.7978845608028654  # sqrt(2/pi)


def _round_up(x, m):
    return (x + m - 1) // m * m


def _vmem_capacity_bytes():
    try:
        return int(pltpu.get_tpu_info().vmem_capacity_bytes)
    except Exception:
        return 64 * 1024 * 1024          # conservative (v7x per-core VMEM)


def _bf16_elementwise_default():
    """bf16 VPU/EUP exists on v6e / v7x; keep f32 elementwise math on v2-v5."""
    try:
        kind = jax.devices()[0].device_kind.lower()
    except Exception:
        return True
    return not any(tag in kind for tag in ("v2", "v3", "v4", "v5"))


def _choose_chunk_h(tile_h, out_w, c_pad, target_bytes=64 * 1024, max_chunks=16):
    """Rows per conv chunk: largest divisor of tile_h whose f32 accumulator
    (chunk_h, out_w, c_pad) stays ~vreg-resident, capping the number of
    (fully unrolled) chunks to bound code size."""
    divisors = [d for d in range(1, tile_h + 1) if tile_h % d == 0]
    target = max(1, target_bytes // (out_w * c_pad * 4))
    fitting = [d for d in divisors if d <= target]
    ch = max(fitting) if fitting else 1
    while tile_h // ch > max_chunks:
        ch = min(d for d in divisors if d > ch)
    return ch


def _estimate_vmem_bytes(tile_h, out_w, w_halo, c_pad, hid, chunk_h):
    rows = tile_h + 2 * PAD
    n_rows = tile_h * out_w
    est = 2 * rows * w_halo * c_pad * 2                    # bf16 halo double buffer
    est += 2 * n_rows * c_pad * 4                          # f32 output double buffer
    est += n_rows * c_pad * 2                              # bf16 LN-output scratch
    est += n_rows * (4 * hid + 2 * hid + 4 * c_pad)        # strip-level h / gelu / out
    est += 3 * (chunk_h + 2 * PAD) * w_halo * c_pad * 4    # chunk-local f32 values
    est += 2 * c_pad * hid * 2 + 16 * (c_pad + hid) * 4    # single-buffered weights
    return est


def _choose_tile_h(H, out_w, w_halo, c_pad, hid, budget_bytes):
    for th in range(H, 0, -1):
        if H % th:
            continue
        ch = _choose_chunk_h(th, out_w, c_pad)
        if _estimate_vmem_bytes(th, out_w, w_halo, c_pad, hid, ch) <= budget_bytes:
            return th
    return 1


def _make_kernel(tile_h, out_w, c_pad, c_true, chunk_h, bf16_gelu):
    """ConvNeXt-block kernel for one (tile_h, out_w) spatial strip."""
    rows = tile_h + 2 * PAD           # halo rows DMA'd per strip
    n_chunks = tile_h // chunk_h
    inv_c = 1.0 / float(c_true)

    def kernel(xp_hbm, dww_ref, dwb_ref, g_ref, beta_ref,
               w1_ref, b1_ref, w2_ref, b2_ref, o_ref, xbuf, zbuf, sem):
        b = pl.program_id(0)
        t = pl.program_id(1)
        n_t = pl.num_programs(1)
        slot = lax.rem(t, 2)

        def halo_copy(tile_idx, buf_slot):
            # (rows, w_halo, Cp) bf16 halo window of batch element b.
            return pltpu.make_async_copy(
                xp_hbm.at[b, pl.ds(tile_idx * tile_h, rows)],
                xbuf.at[buf_slot], sem.at[buf_slot])

        # Prime the pipeline at the first strip of each batch element (kept
        # per-batch so megacore batch-sharding stays correct).
        # TODO(synk): cross-batch prefetch of (b+1, t=0) would also hide the
        # first-strip DMA but needs per-core batch-range bookkeeping.
        @pl.when(t == 0)
        def _():
            halo_copy(t, slot).start()

        halo_copy(t, slot).wait()

        # Prefetch the next strip (same batch element) while computing this one.
        @pl.when(t + 1 < n_t)
        def _():
            halo_copy(t + 1, 1 - slot).start()

        dww = dww_ref[...]                  # (7, 7, Cp) f32
        dwb = dwb_ref[...]                  # (1, Cp)
        gamma = g_ref[...]
        beta = beta_ref[...]

        # ---- depthwise 7x7 conv + LayerNorm, chunk by chunk ------------------
        # Each chunk keeps its (chunk_h, out_w, Cp) f32 accumulator live in
        # vregs across all 49 taps and is written out exactly once.
        for ci in range(n_chunks):
            r0 = ci * chunk_h
            # bf16 halo rows of this chunk, upcast once so the width shifts
            # below are plain f32 sublane slices.
            xh = xbuf[slot, r0:r0 + chunk_h + 2 * PAD].astype(jnp.float32)

            acc = None
            x_res = None
            for kw in range(KSIZE):
                # Width shift hoisted out of the kh loop: 7 shifted slabs per
                # chunk instead of 49.
                # TODO(synk): pltpu.roll(xh, w_halo - kw, axis=1)[:, :out_w]
                # would move this shuffle onto the XLU.
                xw = xh[:, kw:kw + out_w, :]            # (chunk_h + 6, out_w, Cp)
                if kw == PAD:
                    # Un-convolved interior -> residual (chunk-sized live range).
                    x_res = xw[PAD:PAD + chunk_h]
                part = None
                for kh in range(KSIZE):
                    tap = xw[kh:kh + chunk_h] * dww[kh, kw]
                    part = tap if part is None else part + tap
                acc = part if acc is None else acc + part

            y = acc + dwb                               # (chunk_h, out_w, Cp)

            # LayerNorm over the true channel count (padded lanes of y and of
            # gamma/beta are exactly zero, so plain sums / c_true are exact).
            mu = jnp.sum(y, axis=-1, keepdims=True) * inv_c
            m2 = jnp.sum(y * y, axis=-1, keepdims=True) * inv_c
            var = jnp.maximum(m2 - mu * mu, 0.0)
            z = (y - mu) * lax.rsqrt(var + LN_EPS) * gamma + beta

            # Stash the bf16 LN output for the strip-level matmuls, and park
            # the residual in the output buffer (read back after pwconv2).
            zbuf[r0 * out_w:(r0 + chunk_h) * out_w, :] = (
                z.reshape(chunk_h * out_w, c_pad).astype(jnp.bfloat16))
            o_ref[0, r0:r0 + chunk_h, :, :] = x_res.astype(o_ref.dtype)

        # ---- pwconv1 -> GELU(tanh approx) -> pwconv2 over the whole strip ----
        # Whole-strip M keeps the MXU well fed; bf16 operands, f32 accumulation.
        z_all = zbuf[...]                               # (n_rows, Cp) bf16
        h = jnp.dot(z_all, w1_ref[...],
                    preferred_element_type=jnp.float32) + b1_ref[...]
        if bf16_gelu:
            hb = h.astype(jnp.bfloat16)                 # bf16 VPU/EUP (v6e / v7x)
            gelu = 0.5 * hb * (1.0 + jnp.tanh(
                _GELU_C * (hb + 0.044715 * (hb * hb * hb))))
        else:
            g32 = 0.5 * h * (1.0 + jnp.tanh(
                _GELU_C * (h + 0.044715 * (h * h * h))))
            gelu = g32.astype(jnp.bfloat16)
        out = jnp.dot(gelu, w2_ref[...],
                      preferred_element_type=jnp.float32) + b2_ref[...]

        # ---- residual add (original input was pre-stored in o_ref) ----------
        o_ref[0] = o_ref[0] + out.reshape(tile_h, out_w, c_pad)

    return kernel


def convnext_block(x_nchw, params, tile_h=None, bf16_elementwise=None):
    """ConvNeXt block forward.  x_nchw: (B, C, H, W) f32 -> (B, C, H, W) f32."""
    B, C, H, W = x_nchw.shape
    if W % 8 != 0:
        raise ValueError("W must be a multiple of 8 (sublane-aligned strips)")
    c_pad = _round_up(C, LANE)            # == C when C % 128 == 0 (no padding)
    hid = _round_up(4 * C, LANE)
    w_halo = _round_up(W + 2 * PAD, 8)    # sublane-aligned halo width

    if bf16_elementwise is None:
        bf16_elementwise = _bf16_elementwise_default()

    cap = _vmem_capacity_bytes()
    if tile_h is None:
        tile_h = _choose_tile_h(H, W, w_halo, c_pad, hid, budget_bytes=cap // 3)
    if H % tile_h != 0:
        raise ValueError("tile_h must divide H")
    chunk_h = _choose_chunk_h(tile_h, W, c_pad)
    n_t = H // tile_h
    rows = tile_h + 2 * PAD

    # NCHW -> NHWC; zero-pad spatially (halo, width rounded to a sublane
    # multiple) and on channels (lane density); store bf16 (halves the halo
    # DMA bytes and the biggest VMEM scratch).
    # TODO(synk): for multi-block models keep activations NHWC(+pad) between
    # blocks so these transpose/pad/slice passes happen once, not per block.
    x = jnp.transpose(x_nchw, (0, 2, 3, 1)).astype(jnp.bfloat16)
    xp = jnp.pad(x, ((0, 0), (PAD, PAD), (PAD, w_halo - W - PAD), (0, c_pad - C)))

    # Channel-pad / cast parameters (in deployment: done once at load time).
    zc = c_pad - C
    zh = hid - 4 * C
    dw_w = jnp.pad(params["dw_w"], ((0, 0), (0, 0), (0, zc))).astype(jnp.float32)
    dw_b = jnp.pad(params["dw_b"], ((0, 0), (0, zc))).astype(jnp.float32)
    gamma = jnp.pad(params["gamma"], ((0, 0), (0, zc))).astype(jnp.float32)
    beta = jnp.pad(params["beta"], ((0, 0), (0, zc))).astype(jnp.float32)
    w1 = jnp.pad(params["w1"], ((0, zc), (0, zh))).astype(jnp.bfloat16)
    b1 = jnp.pad(params["b1"], ((0, 0), (0, zh))).astype(jnp.float32)
    w2 = jnp.pad(params["w2"], ((0, zh), (0, zc))).astype(jnp.bfloat16)
    b2 = jnp.pad(params["b2"], ((0, 0), (0, zc))).astype(jnp.float32)

    kernel = _make_kernel(tile_h, W, c_pad, C, chunk_h, bf16_elementwise)

    def _const_spec(shape):
        # Fetched once (constant index map) and single-buffered: no dead
        # double buffers for the weights (matters for large C on v7x).
        zeros = (0,) * len(shape)
        return pl.BlockSpec(shape, lambda b, t, _z=zeros: _z,
                            pipeline_mode=pl.Buffered(1))

    cost = pl.CostEstimate(
        flops=int(B * H * W * (2 * KSIZE * KSIZE * c_pad + 4 * c_pad * hid)),
        transcendentals=int(B * H * W * hid),
        bytes_accessed=int(xp.size * 2 + B * H * W * c_pad * 4
                           + (w1.size + w2.size) * 2
                           + (dw_w.size + dw_b.size + gamma.size + beta.size
                              + b1.size + b2.size) * 4),
    )

    out_padded = pl.pallas_call(
        kernel,
        out_shape=jax.ShapeDtypeStruct((B, H, W, c_pad), jnp.float32),
        grid_spec=pltpu.PrefetchScalarGridSpec(
            num_scalar_prefetch=0,
            grid=(B, n_t),
            in_specs=[
                pl.BlockSpec(memory_space=pl.ANY),     # padded bf16 input, in HBM
                _const_spec((KSIZE, KSIZE, c_pad)),
                _const_spec((1, c_pad)),
                _const_spec((1, c_pad)),
                _const_spec((1, c_pad)),
                _const_spec((c_pad, hid)),
                _const_spec((1, hid)),
                _const_spec((hid, c_pad)),
                _const_spec((1, c_pad)),
            ],
            out_specs=pl.BlockSpec((1, tile_h, W, c_pad),
                                   lambda b, t: (b, t, 0, 0)),
            scratch_shapes=[
                pltpu.VMEM((2, rows, w_halo, c_pad), jnp.bfloat16),  # halo dbl buf
                pltpu.VMEM((tile_h * W, c_pad), jnp.bfloat16),       # LN output
                pltpu.SemaphoreType.DMA((2,)),
            ],
        ),
        compiler_params=pltpu.CompilerParams(
            # The strip axis carries the manual prefetch, so it must stay
            # sequential ("arbitrary"); the batch axis is parallel (megacore).
            dimension_semantics=("parallel", "arbitrary"),
            vmem_limit_bytes=int(min(cap * 3 // 4, 112 * 1024 * 1024)),
        ),
        cost_estimate=cost,
    )(xp, dw_w, dw_b, gamma, beta, w1, b1, w2, b2)

    return jnp.transpose(out_padded[..., :C], (0, 3, 1, 2))      # back to NCHW


def make_params(key, dim):
    """Deterministic synthetic params.

    Shapes mirror the PyTorch module:
      dwconv.weight (dim,1,7,7) -> stored as (7,7,dim)   [w[kh,kw,c] = pt_w[c,0,kh,kw]]
      pwconv1.weight (4dim,dim) -> stored transposed (dim,4dim)
      pwconv2.weight (dim,4dim) -> stored transposed (4dim,dim)
    """
    ks = jax.random.split(key, 6)
    return {
        "dw_w": 0.1 * jax.random.normal(ks[0], (KSIZE, KSIZE, dim), jnp.float32),
        "dw_b": 0.1 * jax.random.normal(ks[1], (1, dim), jnp.float32),
        "gamma": jnp.ones((1, dim), jnp.float32),
        "beta": jnp.zeros((1, dim), jnp.float32),
        "w1": 0.1 * jax.random.normal(ks[2], (dim, 4 * dim), jnp.float32),
        "b1": 0.1 * jax.random.normal(ks[3], (1, 4 * dim), jnp.float32),
        "w2": 0.1 * jax.random.normal(ks[4], (4 * dim, dim), jnp.float32),
        "b2": 0.1 * jax.random.normal(ks[5], (1, dim), jnp.float32),
    }


def reference(x_nchw, p):
    """Pure-JAX f32 reference of the PyTorch forward (erf GELU), for checking."""
    x = jnp.transpose(x_nchw, (0, 2, 3, 1))
    B, H, W, C = x.shape
    xp = jnp.pad(x, ((0, 0), (PAD, PAD), (PAD, PAD), (0, 0)))
    y = jnp.zeros_like(x)
    for kh in range(KSIZE):
        for kw in range(KSIZE):
            y = y + xp[:, kh:kh + H, kw:kw + W, :] * p["dw_w"][kh, kw, :]
    y = y + p["dw_b"][0]
    mu = y.mean(-1, keepdims=True)
    var = ((y - mu) ** 2).mean(-1, keepdims=True)
    z = (y - mu) / jnp.sqrt(var + LN_EPS) * p["gamma"][0] + p["beta"][0]
    h = z @ p["w1"] + p["b1"][0]
    h = 0.5 * h * (1.0 + lax.erf(h / jnp.float32(_SQRT2)))
    o = h @ p["w2"] + p["b2"][0]
    o = o + x
    return jnp.transpose(o, (0, 3, 1, 2))


if __name__ == "__main__":
    B, C, H, W = 2, 4, 16, 16          # dim = 4
    key = jax.random.PRNGKey(0)
    kx, kp = jax.random.split(key)
    x = jax.random.normal(kx, (B, C, H, W), jnp.float32)
    params = make_params(kp, C)

    # tile_h=8 -> 2 strips per image, exercising the halo DMA + prefetch path.
    out = jax.block_until_ready(convnext_block(x, params, tile_h=8))
    ref = jax.block_until_ready(reference(x, params))

    assert out.shape == (B, C, H, W)
    # Kernel stores the input / halo in bf16, runs the matmuls (and optionally
    # GELU) with bf16 operands and uses the tanh GELU approximation, so the
    # tolerance vs. the pure-f32 erf reference is relaxed accordingly.
    assert jnp.allclose(out, ref, atol=3e-2, rtol=3e-2), (
        float(jnp.max(jnp.abs(out - ref))))
    print("KERNEL_OK")
</pallas_src>

<mosaic_0001>
module attributes {stable_mosaic.version = 11 : i64} {
  func.func @kernel(%arg0: i32, %arg1: i32, %arg2: memref<2x22x24x128xbf16, #tpu.memory_space<any>>, %arg3: memref<7x7x128xf32, #tpu.memory_space<vmem>>, %arg4: memref<1x128xf32, #tpu.memory_space<vmem>>, %arg5: memref<1x128xf32, #tpu.memory_space<vmem>>, %arg6: memref<1x128xf32, #tpu.memory_space<vmem>>, %arg7: memref<128x128xbf16, #tpu.memory_space<vmem>>, %arg8: memref<1x128xf32, #tpu.memory_space<vmem>>, %arg9: memref<128x128xbf16, #tpu.memory_space<vmem>>, %arg10: memref<1x128xf32, #tpu.memory_space<vmem>>, %arg11: memref<1x8x16x128xf32, #tpu.memory_space<vmem>>, %arg12: memref<2x14x24x128xbf16, #tpu.memory_space<vmem>>, %arg13: memref<128x128xbf16, #tpu.memory_space<vmem>>, %arg14: memref<2x!tpu.dma_semaphore, #tpu.memory_space<semaphore_mem>>) attributes {dimension_semantics = [#tpu.dimension_semantics<parallel>, #tpu.dimension_semantics<arbitrary>], iteration_bounds = array<i64: 2, 2>, scalar_prefetch = 0 : i64, scratch_operands = 3 : i64, tpu.core_type = #tpu.core_type<tc>, window_params = [{}, {pipeline_mode = #tpu.pipeline_mode<synchronous>, transform_indices = @transform_1, window_bounds = array<i64: 7, 7, 128>}, {pipeline_mode = #tpu.pipeline_mode<synchronous>, transform_indices = @transform_2, window_bounds = array<i64: 1, 128>}, {pipeline_mode = #tpu.pipeline_mode<synchronous>, transform_indices = @transform_3, window_bounds = array<i64: 1, 128>}, {pipeline_mode = #tpu.pipeline_mode<synchronous>, transform_indices = @transform_4, window_bounds = array<i64: 1, 128>}, {pipeline_mode = #tpu.pipeline_mode<synchronous>, transform_indices = @transform_5, window_bounds = array<i64: 128, 128>}, {pipeline_mode = #tpu.pipeline_mode<synchronous>, transform_indices = @transform_6, window_bounds = array<i64: 1, 128>}, {pipeline_mode = #tpu.pipeline_mode<synchronous>, transform_indices = @transform_7, window_bounds = array<i64: 128, 128>}, {pipeline_mode = #tpu.pipeline_mode<synchronous>, transform_indices = @transform_8, window_bounds = array<i64: 1, 128>}, {transform_indices = @transform_9, window_bounds = array<i64: 1, 8, 16, 128>}]} {
    %c2_i32 = arith.constant 2 : i32
    %0 = arith.remsi %arg1, %c2_i32 : i32
    %c0_i32 = arith.constant 0 : i32
    %1 = arith.cmpi eq, %arg1, %c0_i32 : i32
    %2 = arith.extui %1 : i1 to i32
    %c0_i32_0 = arith.constant 0 : i32
    %3 = arith.cmpi ne, %2, %c0_i32_0 : i32
    scf.if %3 {
      %c8_i32_54 = arith.constant 8 : i32
      %440 = arith.muli %arg1, %c8_i32_54 : i32
      %c0_i32_55 = arith.constant 0 : i32
      %c0_i32_56 = arith.constant 0 : i32
      %441 = tpu.memref_slice %arg2[%arg0, %440, %c0_i32_55, %c0_i32_56] : memref<2x22x24x128xbf16, #tpu.memory_space<any>> -> memref<1x14x24x128xbf16, #tpu.memory_space<any>>
      %442 = tpu.memref_squeeze %441 : memref<1x14x24x128xbf16, #tpu.memory_space<any>> -> memref<14x24x128xbf16, #tpu.memory_space<any>>
      %c0_i32_57 = arith.constant 0 : i32
      %c0_i32_58 = arith.constant 0 : i32
      %c0_i32_59 = arith.constant 0 : i32
      %443 = tpu.memref_slice %arg12[%0, %c0_i32_57, %c0_i32_58, %c0_i32_59] : memref<2x14x24x128xbf16, #tpu.memory_space<vmem>> -> memref<1x14x24x128xbf16, #tpu.memory_space<vmem>>
      %444 = tpu.memref_squeeze %443 : memref<1x14x24x128xbf16, #tpu.memory_space<vmem>> -> memref<14x24x128xbf16, #tpu.memory_space<vmem>>
      %445 = tpu.memref_slice %arg14[%0] : memref<2x!tpu.dma_semaphore, #tpu.memory_space<semaphore_mem>> -> memref<1x!tpu.dma_semaphore, #tpu.memory_space<semaphore_mem>>
      %446 = tpu.memref_squeeze %445 : memref<1x!tpu.dma_semaphore, #tpu.memory_space<semaphore_mem>> -> memref<!tpu.dma_semaphore, #tpu.memory_space<semaphore_mem>>
      tpu.enqueue_dma source(%442 : memref<14x24x128xbf16, #tpu.memory_space<any>>) target(%444 : memref<14x24x128xbf16, #tpu.memory_space<vmem>>) target_semaphore(%446 : memref<!tpu.dma_semaphore, #tpu.memory_space<semaphore_mem>>)
    } else {
    }
    %c8_i32 = arith.constant 8 : i32
    %4 = arith.muli %arg1, %c8_i32 : i32
    %c0_i32_1 = arith.constant 0 : i32
    %c0_i32_2 = arith.constant 0 : i32
    %5 = tpu.memref_slice %arg2[%arg0, %4, %c0_i32_1, %c0_i32_2] : memref<2x22x24x128xbf16, #tpu.memory_space<any>> -> memref<1x14x24x128xbf16, #tpu.memory_space<any>>
    %6 = tpu.memref_squeeze %5 : memref<1x14x24x128xbf16, #tpu.memory_space<any>> -> memref<14x24x128xbf16, #tpu.memory_space<any>>
    %c0_i32_3 = arith.constant 0 : i32
    %c0_i32_4 = arith.constant 0 : i32
    %c0_i32_5 = arith.constant 0 : i32
    %7 = tpu.memref_slice %arg12[%0, %c0_i32_3, %c0_i32_4, %c0_i32_5] : memref<2x14x24x128xbf16, #tpu.memory_space<vmem>> -> memref<1x14x24x128xbf16, #tpu.memory_space<vmem>>
    %8 = tpu.memref_squeeze %7 : memref<1x14x24x128xbf16, #tpu.memory_space<vmem>> -> memref<14x24x128xbf16, #tpu.memory_space<vmem>>
    %9 = tpu.memref_slice %arg14[%0] : memref<2x!tpu.dma_semaphore, #tpu.memory_space<semaphore_mem>> -> memref<1x!tpu.dma_semaphore, #tpu.memory_space<semaphore_mem>>
    %10 = tpu.memref_squeeze %9 : memref<1x!tpu.dma_semaphore, #tpu.memory_space<semaphore_mem>> -> memref<!tpu.dma_semaphore, #tpu.memory_space<semaphore_mem>>
    tpu.wait_dma2 semaphore(%10 : memref<!tpu.dma_semaphore, #tpu.memory_space<semaphore_mem>>) src(%6 : memref<14x24x128xbf16, #tpu.memory_space<any>>) dst(%8 : memref<14x24x128xbf16, #tpu.memory_space<vmem>>)
    %c1_i32 = arith.constant 1 : i32
    %11 = arith.addi %arg1, %c1_i32 : i32
    %c2_i32_6 = arith.constant 2 : i32
    %12 = arith.cmpi slt, %11, %c2_i32_6 : i32
    %13 = arith.extui %12 : i1 to i32
    %c0_i32_7 = arith.constant 0 : i32
    %14 = arith.cmpi ne, %13, %c0_i32_7 : i32
    scf.if %14 {
      %c1_i32_54 = arith.constant 1 : i32
      %440 = arith.addi %arg1, %c1_i32_54 : i32
      %c1_i32_55 = arith.constant 1 : i32
      %441 = arith.subi %c1_i32_55, %0 : i32
      %c8_i32_56 = arith.constant 8 : i32
      %442 = arith.muli %440, %c8_i32_56 : i32
      %c0_i32_57 = arith.constant 0 : i32
      %c0_i32_58 = arith.constant 0 : i32
      %443 = tpu.memref_slice %arg2[%arg0, %442, %c0_i32_57, %c0_i32_58] : memref<2x22x24x128xbf16, #tpu.memory_space<any>> -> memref<1x14x24x128xbf16, #tpu.memory_space<any>>
      %444 = tpu.memref_squeeze %443 : memref<1x14x24x128xbf16, #tpu.memory_space<any>> -> memref<14x24x128xbf16, #tpu.memory_space<any>>
      %c0_i32_59 = arith.constant 0 : i32
      %c0_i32_60 = arith.constant 0 : i32
      %c0_i32_61 = arith.constant 0 : i32
      %445 = tpu.memref_slice %arg12[%441, %c0_i32_59, %c0_i32_60, %c0_i32_61] : memref<2x14x24x128xbf16, #tpu.memory_space<vmem>> -> memref<1x14x24x128xbf16, #tpu.memory_space<vmem>>
      %446 = tpu.memref_squeeze %445 : memref<1x14x24x128xbf16, #tpu.memory_space<vmem>> -> memref<14x24x128xbf16, #tpu.memory_space<vmem>>
      %447 = tpu.memref_slice %arg14[%441] : memref<2x!tpu.dma_semaphore, #tpu.memory_space<semaphore_mem>> -> memref<1x!tpu.dma_semaphore, #tpu.memory_space<semaphore_mem>>
      %448 = tpu.memref_squeeze %447 : memref<1x!tpu.dma_semaphore, #tpu.memory_space<semaphore_mem>> -> memref<!tpu.dma_semaphore, #tpu.memory_space<semaphore_mem>>
      tpu.enqueue_dma source(%444 : memref<14x24x128xbf16, #tpu.memory_space<any>>) target(%446 : memref<14x24x128xbf16, #tpu.memory_space<vmem>>) target_semaphore(%448 : memref<!tpu.dma_semaphore, #tpu.memory_space<semaphore_mem>>)
    } else {
    }
    %c0 = arith.constant 0 : index
    %c0_8 = arith.constant 0 : index
    %c0_9 = arith.constant 0 : index
    %15 = vector.load %arg3[%c0, %c0_8, %c0_9] : memref<7x7x128xf32, #tpu.memory_space<vmem>>, vector<7x7x128xf32>
    %c0_10 = arith.constant 0 : index
    %c0_11 = arith.constant 0 : index
    %16 = vector.load %arg4[%c0_10, %c0_11] : memref<1x128xf32, #tpu.memory_space<vmem>>, vector<1x128xf32>
    %c0_12 = arith.constant 0 : index
    %c0_13 = arith.constant 0 : index
    %17 = vector.load %arg5[%c0_12, %c0_13] : memref<1x128xf32, #tpu.memory_space<vmem>>, vector<1x128xf32>
    %c0_14 = arith.constant 0 : index
    %c0_15 = arith.constant 0 : index
    %18 = vector.load %arg6[%c0_14, %c0_15] : memref<1x128xf32, #tpu.memory_space<vmem>>, vector<1x128xf32>
    %19 = arith.index_cast %0 : i32 to index
    %c0_16 = arith.constant 0 : index
    %c0_17 = arith.constant 0 : index
    %c0_18 = arith.constant 0 : index
    %20 = vector.load %arg12[%19, %c0_16, %c0_17, %c0_18] : memref<2x14x24x128xbf16, #tpu.memory_space<vmem>>, vector<1x14x24x128xbf16>
    %21 = vector.shape_cast %20 : vector<1x14x24x128xbf16> to vector<14x24x128xbf16>
    %22 = arith.extf %21 : vector<14x24x128xbf16> to vector<14x24x128xf32>
    %23 = vector.extract_strided_slice %22 {offsets = [0, 0, 0], sizes = [14, 16, 128], strides = [1, 1, 1]} : vector<14x24x128xf32> to vector<14x16x128xf32>
    %24 = vector.extract_strided_slice %23 {offsets = [0, 0, 0], sizes = [8, 16, 128], strides = [1, 1, 1]} : vector<14x16x128xf32> to vector<8x16x128xf32>
    %25 = vector.extract_strided_slice %15 {offsets = [0, 0, 0], sizes = [1, 1, 128], strides = [1, 1, 1]} : vector<7x7x128xf32> to vector<1x1x128xf32>
    %26 = vector.shape_cast %25 : vector<1x1x128xf32> to vector<128xf32>
    %27 = vector.shape_cast %26 : vector<128xf32> to vector<1x1x128xf32>
    %28 = vector.broadcast %27 : vector<1x1x128xf32> to vector<8x16x128xf32>
    %29 = arith.mulf %24, %28 : vector<8x16x128xf32>
    %30 = vector.extract_strided_slice %23 {offsets = [1, 0, 0], sizes = [8, 16, 128], strides = [1, 1, 1]} : vector<14x16x128xf32> to vector<8x16x128xf32>
    %31 = vector.extract_strided_slice %15 {offsets = [1, 0, 0], sizes = [1, 1, 128], strides = [1, 1, 1]} : vector<7x7x128xf32> to vector<1x1x128xf32>
    %32 = vector.shape_cast %31 : vector<1x1x128xf32> to vector<128xf32>
    %33 = vector.shape_cast %32 : vector<128xf32> to vector<1x1x128xf32>
    %34 = vector.broadcast %33 : vector<1x1x128xf32> to vector<8x16x128xf32>
    %35 = arith.mulf %30, %34 : vector<8x16x128xf32>
    %36 = arith.addf %29, %35 : vector<8x16x128xf32>
    %37 = vector.extract_strided_slice %23 {offsets = [2, 0, 0], sizes = [8, 16, 128], strides = [1, 1, 1]} : vector<14x16x128xf32> to vector<8x16x128xf32>
    %38 = vector.extract_strided_slice %15 {offsets = [2, 0, 0], sizes = [1, 1, 128], strides = [1, 1, 1]} : vector<7x7x128xf32> to vector<1x1x128xf32>
    %39 = vector.shape_cast %38 : vector<1x1x128xf32> to vector<128xf32>
    %40 = vector.shape_cast %39 : vector<128xf32> to vector<1x1x128xf32>
    %41 = vector.broadcast %40 : vector<1x1x128xf32> to vector<8x16x128xf32>
    %42 = arith.mulf %37, %41 : vector<8x16x128xf32>
    %43 = arith.addf %36, %42 : vector<8x16x128xf32>
    %44 = vector.extract_strided_slice %23 {offsets = [3, 0, 0], sizes = [8, 16, 128], strides = [1, 1, 1]} : vector<14x16x128xf32> to vector<8x16x128xf32>
    %45 = vector.extract_strided_slice %15 {offsets = [3, 0, 0], sizes = [1, 1, 128], strides = [1, 1, 1]} : vector<7x7x128xf32> to vector<1x1x128xf32>
    %46 = vector.shape_cast %45 : vector<1x1x128xf32> to vector<128xf32>
    %47 = vector.shape_cast %46 : vector<128xf32> to vector<1x1x128xf32>
    %48 = vector.broadcast %47 : vector<1x1x128xf32> to vector<8x16x128xf32>
    %49 = arith.mulf %44, %48 : vector<8x16x128xf32>
    %50 = arith.addf %43, %49 : vector<8x16x128xf32>
    %51 = vector.extract_strided_slice %23 {offsets = [4, 0, 0], sizes = [8, 16, 128], strides = [1, 1, 1]} : vector<14x16x128xf32> to vector<8x16x128xf32>
    %52 = vector.extract_strided_slice %15 {offsets = [4, 0, 0], sizes = [1, 1, 128], strides = [1, 1, 1]} : vector<7x7x128xf32> to vector<1x1x128xf32>
    %53 = vector.shape_cast %52 : vector<1x1x128xf32> to vector<128xf32>
    %54 = vector.shape_cast %53 : vector<128xf32> to vector<1x1x128xf32>
    %55 = vector.broadcast %54 : vector<1x1x128xf32> to vector<8x16x128xf32>
    %56 = arith.mulf %51, %55 : vector<8x16x128xf32>
    %57 = arith.addf %50, %56 : vector<8x16x128xf32>
    %58 = vector.extract_strided_slice %23 {offsets = [5, 0, 0], sizes = [8, 16, 128], strides = [1, 1, 1]} : vector<14x16x128xf32> to vector<8x16x128xf32>
    %59 = vector.extract_strided_slice %15 {offsets = [5, 0, 0], sizes = [1, 1, 128], strides = [1, 1, 1]} : vector<7x7x128xf32> to vector<1x1x128xf32>
    %60 = vector.shape_cast %59 : vector<1x1x128xf32> to vector<128xf32>
    %61 = vector.shape_cast %60 : vector<128xf32> to vector<1x1x128xf32>
    %62 = vector.broadcast %61 : vector<1x1x128xf32> to vector<8x16x128xf32>
    %63 = arith.mulf %58, %62 : vector<8x16x128xf32>
    %64 = arith.addf %57, %63 : vector<8x16x128xf32>
    %65 = vector.extract_strided_slice %23 {offsets = [6, 0, 0], sizes = [8, 16, 128], strides = [1, 1, 1]} : vector<14x16x128xf32> to vector<8x16x128xf32>
    %66 = vector.extract_strided_slice %15 {offsets = [6, 0, 0], sizes = [1, 1, 128], strides = [1, 1, 1]} : vector<7x7x128xf32> to vector<1x1x128xf32>
    %67 = vector.shape_cast %66 : vector<1x1x128xf32> to vector<128xf32>
    %68 = vector.shape_cast %67 : vector<128xf32> to vector<1x1x128xf32>
    %69 = vector.broadcast %68 : vector<1x1x128xf32> to vector<8x16x128xf32>
    %70 = arith.mulf %65, %69 : vector<8x16x128xf32>
    %71 = arith.addf %64, %70 : vector<8x16x128xf32>
    %72 = vector.extract_strided_slice %22 {offsets = [0, 1, 0], sizes = [14, 16, 128], strides = [1, 1, 1]} : vector<14x24x128xf32> to vector<14x16x128xf32>
    %73 = vector.extract_strided_slice %72 {offsets = [0, 0, 0], sizes = [8, 16, 128], strides = [1, 1, 1]} : vector<14x16x128xf32> to vector<8x16x128xf32>
    %74 = vector.extract_strided_slice %15 {offsets = [0, 1, 0], sizes = [1, 1, 128], strides = [1, 1, 1]} : vector<7x7x128xf32> to vector<1x1x128xf32>
    %75 = vector.shape_cast %74 : vector<1x1x128xf32> to vector<128xf32>
    %76 = vector.shape_cast %75 : vector<128xf32> to vector<1x1x128xf32>
    %77 = vector.broadcast %76 : vector<1x1x128xf32> to vector<8x16x128xf32>
    %78 = arith.mulf %73, %77 : vector<8x16x128xf32>
    %79 = vector.extract_strided_slice %72 {offsets = [1, 0, 0], sizes = [8, 16, 128], strides = [1, 1, 1]} : vector<14x16x128xf32> to vector<8x16x128xf32>
    %80 = vector.extract_strided_slice %15 {offsets = [1, 1, 0], sizes = [1, 1, 128], strides = [1, 1, 1]} : vector<7x7x128xf32> to vector<1x1x128xf32>
    %81 = vector.shape_cast %80 : vector<1x1x128xf32> to vector<128xf32>
    %82 = vector.shape_cast %81 : vector<128xf32> to vector<1x1x128xf32>
    %83 = vector.broadcast %82 : vector<1x1x128xf32> to vector<8x16x128xf32>
    %84 = arith.mulf %79, %83 : vector<8x16x128xf32>
    %85 = arith.addf %78, %84 : vector<8x16x128xf32>
    %86 = vector.extract_strided_slice %72 {offsets = [2, 0, 0], sizes = [8, 16, 128], strides = [1, 1, 1]} : vector<14x16x128xf32> to vector<8x16x128xf32>
    %87 = vector.extract_strided_slice %15 {offsets = [2, 1, 0], sizes = [1, 1, 128], strides = [1, 1, 1]} : vector<7x7x128xf32> to vector<1x1x128xf32>
    %88 = vector.shape_cast %87 : vector<1x1x128xf32> to vector<128xf32>
    %89 = vector.shape_cast %88 : vector<128xf32> to vector<1x1x128xf32>
    %90 = vector.broadcast %89 : vector<1x1x128xf32> to vector<8x16x128xf32>
    %91 = arith.mulf %86, %90 : vector<8x16x128xf32>
    %92 = arith.addf %85, %91 : vector<8x16x128xf32>
    %93 = vector.extract_strided_slice %72 {offsets = [3, 0, 0], sizes = [8, 16, 128], strides = [1, 1, 1]} : vector<14x16x128xf32> to vector<8x16x128xf32>
    %94 = vector.extract_strided_slice %15 {offsets = [3, 1, 0], sizes = [1, 1, 128], strides = [1, 1, 1]} : vector<7x7x128xf32> to vector<1x1x128xf32>
    %95 = vector.shape_cast %94 : vector<1x1x128xf32> to vector<128xf32>
    %96 = vector.shape_cast %95 : vector<128xf32> to vector<1x1x128xf32>
    %97 = vector.broadcast %96 : vector<1x1x128xf32> to vector<8x16x128xf32>
    %98 = arith.mulf %93, %97 : vector<8x16x128xf32>
    %99 = arith.addf %92, %98 : vector<8x16x128xf32>
    %100 = vector.extract_strided_slice %72 {offsets = [4, 0, 0], sizes = [8, 16, 128], strides = [1, 1, 1]} : vector<14x16x128xf32> to vector<8x16x128xf32>
    %101 = vector.extract_strided_slice %15 {offsets = [4, 1, 0], sizes = [1, 1, 128], strides = [1, 1, 1]} : vector<7x7x128xf32> to vector<1x1x128xf32>
    %102 = vector.shape_cast %101 : vector<1x1x128xf32> to vector<128xf32>
    %103 = vector.shape_cast %102 : vector<128xf32> to vector<1x1x128xf32>
    %104 = vector.broadcast %103 : vector<1x1x128xf32> to vector<8x16x128xf32>
    %105 = arith.mulf %100, %104 : vector<8x16x128xf32>
    %106 = arith.addf %99, %105 : vector<8x16x128xf32>
    %107 = vector.extract_strided_slice %72 {offsets = [5, 0, 0], sizes = [8, 16, 128], strides = [1, 1, 1]} : vector<14x16x128xf32> to vector<8x16x128xf32>
    %108 = vector.extract_strided_slice %15 {offsets = [5, 1, 0], sizes = [1, 1, 128], strides = [1, 1, 1]} : vector<7x7x128xf32> to vector<1x1x128xf32>
    %109 = vector.shape_cast %108 : vector<1x1x128xf32> to vector<128xf32>
    %110 = vector.shape_cast %109 : vector<128xf32> to vector<1x1x128xf32>
    %111 = vector.broadcast %110 : vector<1x1x128xf32> to vector<8x16x128xf32>
    %112 = arith.mulf %107, %111 : vector<8x16x128xf32>
    %113 = arith.addf %106, %112 : vector<8x16x128xf32>
    %114 = vector.extract_strided_slice %72 {offsets = [6, 0, 0], sizes = [8, 16, 128], strides = [1, 1, 1]} : vector<14x16x128xf32> to vector<8x16x128xf32>
    %115 = vector.extract_strided_slice %15 {offsets = [6, 1, 0], sizes = [1, 1, 128], strides = [1, 1, 1]} : vector<7x7x128xf32> to vector<1x1x128xf32>
    %116 = vector.shape_cast %115 : vector<1x1x128xf32> to vector<128xf32>
    %117 = vector.shape_cast %116 : vector<128xf32> to vector<1x1x128xf32>
    %118 = vector.broadcast %117 : vector<1x1x128xf32> to vector<8x16x128xf32>
    %119 = arith.mulf %114, %118 : vector<8x16x128xf32>
    %120 = arith.addf %113, %119 : vector<8x16x128xf32>
    %121 = arith.addf %71, %120 : vector<8x16x128xf32>
    %122 = vector.extract_strided_slice %22 {offsets = [0, 2, 0], sizes = [14, 16, 128], strides = [1, 1, 1]} : vector<14x24x128xf32> to vector<14x16x128xf32>
    %123 = vector.extract_strided_slice %122 {offsets = [0, 0, 0], sizes = [8, 16, 128], strides = [1, 1, 1]} : vector<14x16x128xf32> to vector<8x16x128xf32>
    %124 = vector.extract_strided_slice %15 {offsets = [0, 2, 0], sizes = [1, 1, 128], strides = [1, 1, 1]} : vector<7x7x128xf32> to vector<1x1x128xf32>
    %125 = vector.shape_cast %124 : vector<1x1x128xf32> to vector<128xf32>
    %126 = vector.shape_cast %125 : vector<128xf32> to vector<1x1x128xf32>
    %127 = vector.broadcast %126 : vector<1x1x128xf32> to vector<8x16x128xf32>
    %128 = arith.mulf %123, %127 : vector<8x16x128xf32>
    %129 = vector.extract_strided_slice %122 {offsets = [1, 0, 0], sizes = [8, 16, 128], strides = [1, 1, 1]} : vector<14x16x128xf32> to vector<8x16x128xf32>
    %130 = vector.extract_strided_slice %15 {offsets = [1, 2, 0], sizes = [1, 1, 128], strides = [1, 1, 1]} : vector<7x7x128xf32> to vector<1x1x128xf32>
    %131 = vector.shape_cast %130 : vector<1x1x128xf32> to vector<128xf32>
    %132 = vector.shape_cast %131 : vector<128xf32> to vector<1x1x128xf32>
    %133 = vector.broadcast %132 : vector<1x1x128xf32> to vector<8x16x128xf32>
    %134 = arith.mulf %129, %133 : vector<8x16x128xf32>
    %135 = arith.addf %128, %134 : vector<8x16x128xf32>
    %136 = vector.extract_strided_slice %122 {offsets = [2, 0, 0], sizes = [8, 16, 128], strides = [1, 1, 1]} : vector<14x16x128xf32> to vector<8x16x128xf32>
    %137 = vector.extract_strided_slice %15 {offsets = [2, 2, 0], sizes = [1, 1, 128], strides = [1, 1, 1]} : vector<7x7x128xf32> to vector<1x1x128xf32>
    %138 = vector.shape_cast %137 : vector<1x1x128xf32> to vector<128xf32>
    %139 = vector.shape_cast %138 : vector<128xf32> to vector<1x1x128xf32>
    %140 = vector.broadcast %139 : vector<1x1x128xf32> to vector<8x16x128xf32>
    %141 = arith.mulf %136, %140 : vector<8x16x128xf32>
    %142 = arith.addf %135, %141 : vector<8x16x128xf32>
    %143 = vector.extract_strided_slice %122 {offsets = [3, 0, 0], sizes = [8, 16, 128], strides = [1, 1, 1]} : vector<14x16x128xf32> to vector<8x16x128xf32>
    %144 = vector.extract_strided_slice %15 {offsets = [3, 2, 0], sizes = [1, 1, 128], strides = [1, 1, 1]} : vector<7x7x128xf32> to vector<1x1x128xf32>
    %145 = vector.shape_cast %144 : vector<1x1x128xf32> to vector<128xf32>
    %146 = vector.shape_cast %145 : vector<128xf32> to vector<1x1x128xf32>
    %147 = vector.broadcast %146 : vector<1x1x128xf32> to vector<8x16x128xf32>
    %148 = arith.mulf %143, %147 : vector<8x16x128xf32>
    %149 = arith.addf %142, %148 : vector<8x16x128xf32>
    %150 = vector.extract_strided_slice %122 {offsets = [4, 0, 0], sizes = [8, 16, 128], strides = [1, 1, 1]} : vector<14x16x128xf32> to vector<8x16x128xf32>
    %151 = vector.extract_strided_slice %15 {offsets = [4, 2, 0], sizes = [1, 1, 128], strides = [1, 1, 1]} : vector<7x7x128xf32> to vector<1x1x128xf32>
    %152 = vector.shape_cast %151 : vector<1x1x128xf32> to vector<128xf32>
    %153 = vector.shape_cast %152 : vector<128xf32> to vector<1x1x128xf32>
    %154 = vector.broadcast %153 : vector<1x1x128xf32> to vector<8x16x128xf32>
    %155 = arith.mulf %150, %154 : vector<8x16x128xf32>
    %156 = arith.addf %149, %155 : vector<8x16x128xf32>
    %157 = vector.extract_strided_slice %122 {offsets = [5, 0, 0], sizes = [8, 16, 128], strides = [1, 1, 1]} : vector<14x16x128xf32> to vector<8x16x128xf32>
    %158 = vector.extract_strided_slice %15 {offsets = [5, 2, 0], sizes = [1, 1, 128], strides = [1, 1, 1]} : vector<7x7x128xf32> to vector<1x1x128xf32>
    %159 = vector.shape_cast %158 : vector<1x1x128xf32> to vector<128xf32>
    %160 = vector.shape_cast %159 : vector<128xf32> to vector<1x1x128xf32>
    %161 = vector.broadcast %160 : vector<1x1x128xf32> to vector<8x16x128xf32>
    %162 = arith.mulf %157, %161 : vector<8x16x128xf32>
    %163 = arith.addf %156, %162 : vector<8x16x128xf32>
    %164 = vector.extract_strided_slice %122 {offsets = [6, 0, 0], sizes = [8, 16, 128], strides = [1, 1, 1]} : vector<14x16x128xf32> to vector<8x16x128xf32>
    %165 = vector.extract_strided_slice %15 {offsets = [6, 2, 0], sizes = [1, 1, 128], strides = [1, 1, 1]} : vector<7x7x128xf32> to vector<1x1x128xf32>
    %166 = vector.shape_cast %165 : vector<1x1x128xf32> to vector<128xf32>
    %167 = vector.shape_cast %166 : vector<128xf32> to vector<1x1x128xf32>
    %168 = vector.broadcast %167 : vector<1x1x128xf32> to vector<8x16x128xf32>
    %169 = arith.mulf %164, %168 : vector<8x16x128xf32>
    %170 = arith.addf %163, %169 : vector<8x16x128xf32>
    %171 = arith.addf %121, %170 : vector<8x16x128xf32>
    %172 = vector.extract_strided_slice %22 {offsets = [0, 3, 0], sizes = [14, 16, 128], strides = [1, 1, 1]} : vector<14x24x128xf32> to vector<14x16x128xf32>
    %173 = vector.extract_strided_slice %172 {offsets = [3, 0, 0], sizes = [8, 16, 128], strides = [1, 1, 1]} : vector<14x16x128xf32> to vector<8x16x128xf32>
    %174 = vector.extract_strided_slice %172 {offsets = [0, 0, 0], sizes = [8, 16, 128], strides = [1, 1, 1]} : vector<14x16x128xf32> to vector<8x16x128xf32>
    %175 = vector.extract_strided_slice %15 {offsets = [0, 3, 0], sizes = [1, 1, 128], strides = [1, 1, 1]} : vector<7x7x128xf32> to vector<1x1x128xf32>
    %176 = vector.shape_cast %175 : vector<1x1x128xf32> to vector<128xf32>
    %177 = vector.shape_cast %176 : vector<128xf32> to vector<1x1x128xf32>
    %178 = vector.broadcast %177 : vector<1x1x128xf32> to vector<8x16x128xf32>
    %179 = arith.mulf %174, %178 : vector<8x16x128xf32>
    %180 = vector.extract_strided_slice %172 {offsets = [1, 0, 0], sizes = [8, 16, 128], strides = [1, 1, 1]} : vector<14x16x128xf32> to vector<8x16x128xf32>
    %181 = vector.extract_strided_slice %15 {offsets = [1, 3, 0], sizes = [1, 1, 128], strides = [1, 1, 1]} : vector<7x7x128xf32> to vector<1x1x128xf32>
    %182 = vector.shape_cast %181 : vector<1x1x128xf32> to vector<128xf32>
    %183 = vector.shape_cast %182 : vector<128xf32> to vector<1x1x128xf32>
    %184 = vector.broadcast %183 : vector<1x1x128xf32> to vector<8x16x128xf32>
    %185 = arith.mulf %180, %184 : vector<8x16x128xf32>
    %186 = arith.addf %179, %185 : vector<8x16x128xf32>
    %187 = vector.extract_strided_slice %172 {offsets = [2, 0, 0], sizes = [8, 16, 128], strides = [1, 1, 1]} : vector<14x16x128xf32> to vector<8x16x128xf32>
    %188 = vector.extract_strided_slice %15 {offsets = [2, 3, 0], sizes = [1, 1, 128], strides = [1, 1, 1]} : vector<7x7x128xf32> to vector<1x1x128xf32>
    %189 = vector.shape_cast %188 : vector<1x1x128xf32> to vector<128xf32>
    %190 = vector.shape_cast %189 : vector<128xf32> to vector<1x1x128xf32>
    %191 = vector.broadcast %190 : vector<1x1x128xf32> to vector<8x16x128xf32>
    %192 = arith.mulf %187, %191 : vector<8x16x128xf32>
    %193 = arith.addf %186, %192 : vector<8x16x128xf32>
    %194 = vector.extract_strided_slice %172 {offsets = [3, 0, 0], sizes = [8, 16, 128], strides = [1, 1, 1]} : vector<14x16x128xf32> to vector<8x16x128xf32>
    %195 = vector.extract_strided_slice %15 {offsets = [3, 3, 0], sizes = [1, 1, 128], strides = [1, 1, 1]} : vector<7x7x128xf32> to vector<1x1x128xf32>
    %196 = vector.shape_cast %195 : vector<1x1x128xf32> to vector<128xf32>
    %197 = vector.shape_cast %196 : vector<128xf32> to vector<1x1x128xf32>
    %198 = vector.broadcast %197 : vector<1x1x128xf32> to vector<8x16x128xf32>
    %199 = arith.mulf %194, %198 : vector<8x16x128xf32>
    %200 = arith.addf %193, %199 : vector<8x16x128xf32>
    %201 = vector.extract_strided_slice %172 {offsets = [4, 0, 0], sizes = [8, 16, 128], strides = [1, 1, 1]} : vector<14x16x128xf32> to vector<8x16x128xf32>
    %202 = vector.extract_strided_slice %15 {offsets = [4, 3, 0], sizes = [1, 1, 128], strides = [1, 1, 1]} : vector<7x7x128xf32> to vector<1x1x128xf32>
    %203 = vector.shape_cast %202 : vector<1x1x128xf32> to vector<128xf32>
    %204 = vector.shape_cast %203 : vector<128xf32> to vector<1x1x128xf32>
    %205 = vector.broadcast %204 : vector<1x1x128xf32> to vector<8x16x128xf32>
    %206 = arith.mulf %201, %205 : vector<8x16x128xf32>
    %207 = arith.addf %200, %206 : vector<8x16x128xf32>
    %208 = vector.extract_strided_slice %172 {offsets = [5, 0, 0], sizes = [8, 16, 128], strides = [1, 1, 1]} : vector<14x16x128xf32> to vector<8x16x128xf32>
    %209 = vector.extract_strided_slice %15 {offsets = [5, 3, 0], sizes = [1, 1, 128], strides = [1, 1, 1]} : vector<7x7x128xf32> to vector<1x1x128xf32>
    %210 = vector.shape_cast %209 : vector<1x1x128xf32> to vector<128xf32>
    %211 = vector.shape_cast %210 : vector<128xf32> to vector<1x1x128xf32>
    %212 = vector.broadcast %211 : vector<1x1x128xf32> to vector<8x16x128xf32>
    %213 = arith.mulf %208, %212 : vector<8x16x128xf32>
    %214 = arith.addf %207, %213 : vector<8x16x128xf32>
    %215 = vector.extract_strided_slice %172 {offsets = [6, 0, 0], sizes = [8, 16, 128], strides = [1, 1, 1]} : vector<14x16x128xf32> to vector<8x16x128xf32>
    %216 = vector.extract_strided_slice %15 {offsets = [6, 3, 0], sizes = [1, 1, 128], strides = [1, 1, 1]} : vector<7x7x128xf32> to vector<1x1x128xf32>
    %217 = vector.shape_cast %216 : vector<1x1x128xf32> to vector<128xf32>
    %218 = vector.shape_cast %217 : vector<128xf32> to vector<1x1x128xf32>
    %219 = vector.broadcast %218 : vector<1x1x128xf32> to vector<8x16x128xf32>
    %220 = arith.mulf %215, %219 : vector<8x16x128xf32>
    %221 = arith.addf %214, %220 : vector<8x16x128xf32>
    %222 = arith.addf %171, %221 : vector<8x16x128xf32>
    %223 = vector.extract_strided_slice %22 {offsets = [0, 4, 0], sizes = [14, 16, 128], strides = [1, 1, 1]} : vector<14x24x128xf32> to vector<14x16x128xf32>
    %224 = vector.extract_strided_slice %223 {offsets = [0, 0, 0], sizes = [8, 16, 128], strides = [1, 1, 1]} : vector<14x16x128xf32> to vector<8x16x128xf32>
    %225 = vector.extract_strided_slice %15 {offsets = [0, 4, 0], sizes = [1, 1, 128], strides = [1, 1, 1]} : vector<7x7x128xf32> to vector<1x1x128xf32>
    %226 = vector.shape_cast %225 : vector<1x1x128xf32> to vector<128xf32>
    %227 = vector.shape_cast %226 : vector<128xf32> to vector<1x1x128xf32>
    %228 = vector.broadcast %227 : vector<1x1x128xf32> to vector<8x16x128xf32>
    %229 = arith.mulf %224, %228 : vector<8x16x128xf32>
    %230 = vector.extract_strided_slice %223 {offsets = [1, 0, 0], sizes = [8, 16, 128], strides = [1, 1, 1]} : vector<14x16x128xf32> to vector<8x16x128xf32>
    %231 = vector.extract_strided_slice %15 {offsets = [1, 4, 0], sizes = [1, 1, 128], strides = [1, 1, 1]} : vector<7x7x128xf32> to vector<1x1x128xf32>
    %232 = vector.shape_cast %231 : vector<1x1x128xf32> to vector<128xf32>
    %233 = vector.shape_cast %232 : vector<128xf32> to vector<1x1x128xf32>
    %234 = vector.broadcast %233 : vector<1x1x128xf32> to vector<8x16x128xf32>
    %235 = arith.mulf %230, %234 : vector<8x16x128xf32>
    %236 = arith.addf %229, %235 : vector<8x16x128xf32>
    %237 = vector.extract_strided_slice %223 {offsets = [2, 0, 0], sizes = [8, 16, 128], strides = [1, 1, 1]} : vector<14x16x128xf32> to vector<8x16x128xf32>
    %238 = vector.extract_strided_slice %15 {offsets = [2, 4, 0], sizes = [1, 1, 128], strides = [1, 1, 1]} : vector<7x7x128xf32> to vector<1x1x128xf32>
    %239 = vector.shape_cast %238 : vector<1x1x128xf32> to vector<128xf32>
    %240 = vector.shape_cast %239 : vector<128xf32> to vector<1x1x128xf32>
    %241 = vector.broadcast %240 : vector<1x1x128xf32> to vector<8x16x128xf32>
    %242 = arith.mulf %237, %241 : vector<8x16x128xf32>
    %243 = arith.addf %236, %242 : vector<8x16x128xf32>
    %244 = vector.extract_strided_slice %223 {offsets = [3, 0, 0], sizes = [8, 16, 128], strides = [1, 1, 1]} : vector<14x16x128xf32> to vector<8x16x128xf32>
    %245 = vector.extract_strided_slice %15 {offsets = [3, 4, 0], sizes = [1, 1, 128], strides = [1, 1, 1]} : vector<7x7x128xf32> to vector<1x1x128xf32>
    %246 = vector.shape_cast %245 : vector<1x1x128xf32> to vector<128xf32>
    %247 = vector.shape_cast %246 : vector<128xf32> to vector<1x1x128xf32>
    %248 = vector.broadcast %247 : vector<1x1x128xf32> to vector<8x16x128xf32>
    %249 = arith.mulf %244, %248 : vector<8x16x128xf32>
    %250 = arith.addf %243, %249 : vector<8x16x128xf32>
    %251 = vector.extract_strided_slice %223 {offsets = [4, 0, 0], sizes = [8, 16, 128], strides = [1, 1, 1]} : vector<14x16x128xf32> to vector<8x16x128xf32>
    %252 = vector.extract_strided_slice %15 {offsets = [4, 4, 0], sizes = [1, 1, 128], strides = [1, 1, 1]} : vector<7x7x128xf32> to vector<1x1x128xf32>
    %253 = vector.shape_cast %252 : vector<1x1x128xf32> to vector<128xf32>
    %254 = vector.shape_cast %253 : vector<128xf32> to vector<1x1x128xf32>
    %255 = vector.broadcast %254 : vector<1x1x128xf32> to vector<8x16x128xf32>
    %256 = arith.mulf %251, %255 : vector<8x16x128xf32>
    %257 = arith.addf %250, %256 : vector<8x16x128xf32>
    %258 = vector.extract_strided_slice %223 {offsets = [5, 0, 0], sizes = [8, 16, 128], strides = [1, 1, 1]} : vector<14x16x128xf32> to vector<8x16x128xf32>
    %259 = vector.extract_strided_slice %15 {offsets = [5, 4, 0], sizes = [1, 1, 128], strides = [1, 1, 1]} : vector<7x7x128xf32> to vector<1x1x128xf32>
    %260 = vector.shape_cast %259 : vector<1x1x128xf32> to vector<128xf32>
    %261 = vector.shape_cast %260 : vector<128xf32> to vector<1x1x128xf32>
    %262 = vector.broadcast %261 : vector<1x1x128xf32> to vector<8x16x128xf32>
    %263 = arith.mulf %258, %262 : vector<8x16x128xf32>
    %264 = arith.addf %257, %263 : vector<8x16x128xf32>
    %265 = vector.extract_strided_slice %223 {offsets = [6, 0, 0], sizes = [8, 16, 128], strides = [1, 1, 1]} : vector<14x16x128xf32> to vector<8x16x128xf32>
    %266 = vector.extract_strided_slice %15 {offsets = [6, 4, 0], sizes = [1, 1, 128], strides = [1, 1, 1]} : vector<7x7x128xf32> to vector<1x1x128xf32>
    %267 = vector.shape_cast %266 : vector<1x1x128xf32> to vector<128xf32>
    %268 = vector.shape_cast %267 : vector<128xf32> to vector<1x1x128xf32>
    %269 = vector.broadcast %268 : vector<1x1x128xf32> to vector<8x16x128xf32>
    %270 = arith.mulf %265, %269 : vector<8x16x128xf32>
    %271 = arith.addf %264, %270 : vector<8x16x128xf32>
    %272 = arith.addf %222, %271 : vector<8x16x128xf32>
    %273 = vector.extract_strided_slice %22 {offsets = [0, 5, 0], sizes = [14, 16, 128], strides = [1, 1, 1]} : vector<14x24x128xf32> to vector<14x16x128xf32>
    %274 = vector.extract_strided_slice %273 {offsets = [0, 0, 0], sizes = [8, 16, 128], strides = [1, 1, 1]} : vector<14x16x128xf32> to vector<8x16x128xf32>
    %275 = vector.extract_strided_slice %15 {offsets = [0, 5, 0], sizes = [1, 1, 128], strides = [1, 1, 1]} : vector<7x7x128xf32> to vector<1x1x128xf32>
    %276 = vector.shape_cast %275 : vector<1x1x128xf32> to vector<128xf32>
    %277 = vector.shape_cast %276 : vector<128xf32> to vector<1x1x128xf32>
    %278 = vector.broadcast %277 : vector<1x1x128xf32> to vector<8x16x128xf32>
    %279 = arith.mulf %274, %278 : vector<8x16x128xf32>
    %280 = vector.extract_strided_slice %273 {offsets = [1, 0, 0], sizes = [8, 16, 128], strides = [1, 1, 1]} : vector<14x16x128xf32> to vector<8x16x128xf32>
    %281 = vector.extract_strided_slice %15 {offsets = [1, 5, 0], sizes = [1, 1, 128], strides = [1, 1, 1]} : vector<7x7x128xf32> to vector<1x1x128xf32>
    %282 = vector.shape_cast %281 : vector<1x1x128xf32> to vector<128xf32>
    %283 = vector.shape_cast %282 : vector<128xf32> to vector<1x1x128xf32>
    %284 = vector.broadcast %283 : vector<1x1x128xf32> to vector<8x16x128xf32>
    %285 = arith.mulf %280, %284 : vector<8x16x128xf32>
    %286 = arith.addf %279, %285 : vector<8x16x128xf32>
    %287 = vector.extract_strided_slice %273 {offsets = [2, 0, 0], sizes = [8, 16, 128], strides = [1, 1, 1]} : vector<14x16x128xf32> to vector<8x16x128xf32>
    %288 = vector.extract_strided_slice %15 {offsets = [2, 5, 0], sizes = [1, 1, 128], strides = [1, 1, 1]} : vector<7x7x128xf32> to vector<1x1x128xf32>
    %289 = vector.shape_cast %288 : vector<1x1x128xf32> to vector<128xf32>
    %290 = vector.shape_cast %289 : vector<128xf32> to vector<1x1x128xf32>
    %291 = vector.broadcast %290 : vector<1x1x128xf32> to vector<8x16x128xf32>
    %292 = arith.mulf %287, %291 : vector<8x16x128xf32>
    %293 = arith.addf %286, %292 : vector<8x16x128xf32>
    %294 = vector.extract_strided_slice %273 {offsets = [3, 0, 0], sizes = [8, 16, 128], strides = [1, 1, 1]} : vector<14x16x128xf32> to vector<8x16x128xf32>
    %295 = vector.extract_strided_slice %15 {offsets = [3, 5, 0], sizes = [1, 1, 128], strides = [1, 1, 1]} : vector<7x7x128xf32> to vector<1x1x128xf32>
    %296 = vector.shape_cast %295 : vector<1x1x128xf32> to vector<128xf32>
    %297 = vector.shape_cast %296 : vector<128xf32> to vector<1x1x128xf32>
    %298 = vector.broadcast %297 : vector<1x1x128xf32> to vector<8x16x128xf32>
    %299 = arith.mulf %294, %298 : vector<8x16x128xf32>
    %300 = arith.addf %293, %299 : vector<8x16x128xf32>
    %301 = vector.extract_strided_slice %273 {offsets = [4, 0, 0], sizes = [8, 16, 128], strides = [1, 1, 1]} : vector<14x16x128xf32> to vector<8x16x128xf32>
    %302 = vector.extract_strided_slice %15 {offsets = [4, 5, 0], sizes = [1, 1, 128], strides = [1, 1, 1]} : vector<7x7x128xf32> to vector<1x1x128xf32>
    %303 = vector.shape_cast %302 : vector<1x1x128xf32> to vector<128xf32>
    %304 = vector.shape_cast %303 : vector<128xf32> to vector<1x1x128xf32>
    %305 = vector.broadcast %304 : vector<1x1x128xf32> to vector<8x16x128xf32>
    %306 = arith.mulf %301, %305 : vector<8x16x128xf32>
    %307 = arith.addf %300, %306 : vector<8x16x128xf32>
    %308 = vector.extract_strided_slice %273 {offsets = [5, 0, 0], sizes = [8, 16, 128], strides = [1, 1, 1]} : vector<14x16x128xf32> to vector<8x16x128xf32>
    %309 = vector.extract_strided_slice %15 {offsets = [5, 5, 0], sizes = [1, 1, 128], strides = [1, 1, 1]} : vector<7x7x128xf32> to vector<1x1x128xf32>
    %310 = vector.shape_cast %309 : vector<1x1x128xf32> to vector<128xf32>
    %311 = vector.shape_cast %310 : vector<128xf32> to vector<1x1x128xf32>
    %312 = vector.broadcast %311 : vector<1x1x128xf32> to vector<8x16x128xf32>
    %313 = arith.mulf %308, %312 : vector<8x16x128xf32>
    %314 = arith.addf %307, %313 : vector<8x16x128xf32>
    %315 = vector.extract_strided_slice %273 {offsets = [6, 0, 0], sizes = [8, 16, 128], strides = [1, 1, 1]} : vector<14x16x128xf32> to vector<8x16x128xf32>
    %316 = vector.extract_strided_slice %15 {offsets = [6, 5, 0], sizes = [1, 1, 128], strides = [1, 1, 1]} : vector<7x7x128xf32> to vector<1x1x128xf32>
    %317 = vector.shape_cast %316 : vector<1x1x128xf32> to vector<128xf32>
    %318 = vector.shape_cast %317 : vector<128xf32> to vector<1x1x128xf32>
    %319 = vector.broadcast %318 : vector<1x1x128xf32> to vector<8x16x128xf32>
    %320 = arith.mulf %315, %319 : vector<8x16x128xf32>
    %321 = arith.addf %314, %320 : vector<8x16x128xf32>
    %322 = arith.addf %272, %321 : vector<8x16x128xf32>
    %323 = vector.extract_strided_slice %22 {offsets = [0, 6, 0], sizes = [14, 16, 128], strides = [1, 1, 1]} : vector<14x24x128xf32> to vector<14x16x128xf32>
    %324 = vector.extract_strided_slice %323 {offsets = [0, 0, 0], sizes = [8, 16, 128], strides = [1, 1, 1]} : vector<14x16x128xf32> to vector<8x16x128xf32>
    %325 = vector.extract_strided_slice %15 {offsets = [0, 6, 0], sizes = [1, 1, 128], strides = [1, 1, 1]} : vector<7x7x128xf32> to vector<1x1x128xf32>
    %326 = vector.shape_cast %325 : vector<1x1x128xf32> to vector<128xf32>
    %327 = vector.shape_cast %326 : vector<128xf32> to vector<1x1x128xf32>
    %328 = vector.broadcast %327 : vector<1x1x128xf32> to vector<8x16x128xf32>
    %329 = arith.mulf %324, %328 : vector<8x16x128xf32>
    %330 = vector.extract_strided_slice %323 {offsets = [1, 0, 0], sizes = [8, 16, 128], strides = [1, 1, 1]} : vector<14x16x128xf32> to vector<8x16x128xf32>
    %331 = vector.extract_strided_slice %15 {offsets = [1, 6, 0], sizes = [1, 1, 128], strides = [1, 1, 1]} : vector<7x7x128xf32> to vector<1x1x128xf32>
    %332 = vector.shape_cast %331 : vector<1x1x128xf32> to vector<128xf32>
    %333 = vector.shape_cast %332 : vector<128xf32> to vector<1x1x128xf32>
    %334 = vector.broadcast %333 : vector<1x1x128xf32> to vector<8x16x128xf32>
    %335 = arith.mulf %330, %334 : vector<8x16x128xf32>
    %336 = arith.addf %329, %335 : vector<8x16x128xf32>
    %337 = vector.extract_strided_slice %323 {offsets = [2, 0, 0], sizes = [8, 16, 128], strides = [1, 1, 1]} : vector<14x16x128xf32> to vector<8x16x128xf32>
    %338 = vector.extract_strided_slice %15 {offsets = [2, 6, 0], sizes = [1, 1, 128], strides = [1, 1, 1]} : vector<7x7x128xf32> to vector<1x1x128xf32>
    %339 = vector.shape_cast %338 : vector<1x1x128xf32> to vector<128xf32>
    %340 = vector.shape_cast %339 : vector<128xf32> to vector<1x1x128xf32>
    %341 = vector.broadcast %340 : vector<1x1x128xf32> to vector<8x16x128xf32>
    %342 = arith.mulf %337, %341 : vector<8x16x128xf32>
    %343 = arith.addf %336, %342 : vector<8x16x128xf32>
    %344 = vector.extract_strided_slice %323 {offsets = [3, 0, 0], sizes = [8, 16, 128], strides = [1, 1, 1]} : vector<14x16x128xf32> to vector<8x16x128xf32>
    %345 = vector.extract_strided_slice %15 {offsets = [3, 6, 0], sizes = [1, 1, 128], strides = [1, 1, 1]} : vector<7x7x128xf32> to vector<1x1x128xf32>
    %346 = vector.shape_cast %345 : vector<1x1x128xf32> to vector<128xf32>
    %347 = vector.shape_cast %346 : vector<128xf32> to vector<1x1x128xf32>
    %348 = vector.broadcast %347 : vector<1x1x128xf32> to vector<8x16x128xf32>
    %349 = arith.mulf %344, %348 : vector<8x16x128xf32>
    %350 = arith.addf %343, %349 : vector<8x16x128xf32>
    %351 = vector.extract_strided_slice %323 {offsets = [4, 0, 0], sizes = [8, 16, 128], strides = [1, 1, 1]} : vector<14x16x128xf32> to vector<8x16x128xf32>
    %352 = vector.extract_strided_slice %15 {offsets = [4, 6, 0], sizes = [1, 1, 128], strides = [1, 1, 1]} : vector<7x7x128xf32> to vector<1x1x128xf32>
    %353 = vector.shape_cast %352 : vector<1x1x128xf32> to vector<128xf32>
    %354 = vector.shape_cast %353 : vector<128xf32> to vector<1x1x128xf32>
    %355 = vector.broadcast %354 : vector<1x1x128xf32> to vector<8x16x128xf32>
    %356 = arith.mulf %351, %355 : vector<8x16x128xf32>
    %357 = arith.addf %350, %356 : vector<8x16x128xf32>
    %358 = vector.extract_strided_slice %323 {offsets = [5, 0, 0], sizes = [8, 16, 128], strides = [1, 1, 1]} : vector<14x16x128xf32> to vector<8x16x128xf32>
    %359 = vector.extract_strided_slice %15 {offsets = [5, 6, 0], sizes = [1, 1, 128], strides = [1, 1, 1]} : vector<7x7x128xf32> to vector<1x1x128xf32>
    %360 = vector.shape_cast %359 : vector<1x1x128xf32> to vector<128xf32>
    %361 = vector.shape_cast %360 : vector<128xf32> to vector<1x1x128xf32>
    %362 = vector.broadcast %361 : vector<1x1x128xf32> to vector<8x16x128xf32>
    %363 = arith.mulf %358, %362 : vector<8x16x128xf32>
    %364 = arith.addf %357, %363 : vector<8x16x128xf32>
    %365 = vector.extract_strided_slice %323 {offsets = [6, 0, 0], sizes = [8, 16, 128], strides = [1, 1, 1]} : vector<14x16x128xf32> to vector<8x16x128xf32>
    %366 = vector.extract_strided_slice %15 {offsets = [6, 6, 0], sizes = [1, 1, 128], strides = [1, 1, 1]} : vector<7x7x128xf32> to vector<1x1x128xf32>
    %367 = vector.shape_cast %366 : vector<1x1x128xf32> to vector<128xf32>
    %368 = vector.shape_cast %367 : vector<128xf32> to vector<1x1x128xf32>
    %369 = vector.broadcast %368 : vector<1x1x128xf32> to vector<8x16x128xf32>
    %370 = arith.mulf %365, %369 : vector<8x16x128xf32>
    %371 = arith.addf %364, %370 : vector<8x16x128xf32>
    %372 = arith.addf %322, %371 : vector<8x16x128xf32>
    %373 = vector.shape_cast %16 : vector<1x128xf32> to vector<1x1x128xf32>
    %374 = vector.broadcast %373 : vector<1x1x128xf32> to vector<8x16x128xf32>
    %375 = arith.addf %372, %374 : vector<8x16x128xf32>
    %cst = arith.constant dense<0.000000e+00> : vector<8x16xf32>
    %376 = vector.multi_reduction <add>, %375, %cst [2] : vector<8x16x128xf32> to vector<8x16xf32>
    %377 = vector.shape_cast %376 : vector<8x16xf32> to vector<8x16x1xf32>
    %cst_19 = arith.constant 2.500000e-01 : f32
    %378 = vector.broadcast %cst_19 : f32 to vector<8x16x1xf32>
    %379 = arith.mulf %377, %378 : vector<8x16x1xf32>
    %380 = arith.mulf %375, %375 : vector<8x16x128xf32>
    %cst_20 = arith.constant dense<0.000000e+00> : vector<8x16xf32>
    %381 = vector.multi_reduction <add>, %380, %cst_20 [2] : vector<8x16x128xf32> to vector<8x16xf32>
    %382 = vector.shape_cast %381 : vector<8x16xf32> to vector<8x16x1xf32>
    %cst_21 = arith.constant 2.500000e-01 : f32
    %383 = vector.broadcast %cst_21 : f32 to vector<8x16x1xf32>
    %384 = arith.mulf %382, %383 : vector<8x16x1xf32>
    %385 = arith.mulf %379, %379 : vector<8x16x1xf32>
    %386 = arith.subf %384, %385 : vector<8x16x1xf32>
    %cst_22 = arith.constant 0.000000e+00 : f32
    %387 = vector.broadcast %cst_22 : f32 to vector<8x16x1xf32>
    %388 = arith.maximumf %386, %387 : vector<8x16x1xf32>
    %389 = vector.broadcast %379 : vector<8x16x1xf32> to vector<8x16x128xf32>
    %390 = arith.subf %375, %389 : vector<8x16x128xf32>
    %cst_23 = arith.constant 9.99999974E-6 : f32
    %391 = vector.broadcast %cst_23 : f32 to vector<8x16x1xf32>
    %392 = arith.addf %388, %391 : vector<8x16x1xf32>
    %393 = math.rsqrt %392 : vector<8x16x1xf32>
    %394 = vector.broadcast %393 : vector<8x16x1xf32> to vector<8x16x128xf32>
    %395 = arith.mulf %390, %394 : vector<8x16x128xf32>
    %396 = vector.shape_cast %17 : vector<1x128xf32> to vector<1x1x128xf32>
    %397 = vector.broadcast %396 : vector<1x1x128xf32> to vector<8x16x128xf32>
    %398 = arith.mulf %395, %397 : vector<8x16x128xf32>
    %399 = vector.shape_cast %18 : vector<1x128xf32> to vector<1x1x128xf32>
    %400 = vector.broadcast %399 : vector<1x1x128xf32> to vector<8x16x128xf32>
    %401 = arith.addf %398, %400 : vector<8x16x128xf32>
    %402 = vector.shape_cast %401 : vector<8x16x128xf32> to vector<128x128xf32>
    %403 = arith.truncf %402 : vector<128x128xf32> to vector<128x128xbf16>
    %c0_24 = arith.constant 0 : index
    %c0_25 = arith.constant 0 : index
    %404 = vector.load %arg13[%c0_24, %c0_25] : memref<128x128xbf16, #tpu.memory_space<vmem>>, vector<128x128xbf16>
    tpu.vector_store %arg13[%c0_24, %c0_25], %403 {strides = array<i32>} : memref<128x128xbf16, #tpu.memory_space<vmem>>, vector<128x128xbf16>,
    %c0_26 = arith.constant 0 : index
    %c0_27 = arith.constant 0 : index
    %c0_28 = arith.constant 0 : index
    %c0_29 = arith.constant 0 : index
    %405 = vector.load %arg11[%c0_26, %c0_27, %c0_28, %c0_29] : memref<1x8x16x128xf32, #tpu.memory_space<vmem>>, vector<1x8x16x128xf32>
    %406 = vector.shape_cast %405 : vector<1x8x16x128xf32> to vector<8x16x128xf32>
    %407 = vector.shape_cast %173 : vector<8x16x128xf32> to vector<1x8x16x128xf32>
    tpu.vector_store %arg11[%c0_26, %c0_27, %c0_28, %c0_29], %407 {strides = array<i32>} : memref<1x8x16x128xf32, #tpu.memory_space<vmem>>, vector<1x8x16x128xf32>,
    %c0_30 = arith.constant 0 : index
    %c0_31 = arith.constant 0 : index
    %408 = vector.load %arg13[%c0_30, %c0_31] : memref<128x128xbf16, #tpu.memory_space<vmem>>, vector<128x128xbf16>
    %c0_32 = arith.constant 0 : index
    %c0_33 = arith.constant 0 : index
    %409 = vector.load %arg7[%c0_32, %c0_33] : memref<128x128xbf16, #tpu.memory_space<vmem>>, vector<128x128xbf16>
    %cst_34 = arith.constant dense<0.000000e+00> : vector<128x128xf32>
    %410 = tpu.matmul %408, %409, %cst_34 {dimension_numbers = #tpu.dot_dimension_numbers<[1], [0], [0], [1], [0, 0, 1, 1], [], []>} : vector<128x128xbf16>, vector<128x128xbf16>, vector<128x128xf32> -> vector<128x128xf32>
    %c0_35 = arith.constant 0 : index
    %c0_36 = arith.constant 0 : index
    %411 = vector.load %arg8[%c0_35, %c0_36] : memref<1x128xf32, #tpu.memory_space<vmem>>, vector<1x128xf32>
    %412 = vector.broadcast %411 : vector<1x128xf32> to vector<128x128xf32>
    %413 = arith.addf %410, %412 : vector<128x128xf32>
    %414 = arith.truncf %413 : vector<128x128xf32> to vector<128x128xbf16>
    %cst_37 = arith.constant 5.000000e-01 : bf16
    %415 = vector.broadcast %cst_37 : bf16 to vector<128x128xbf16>
    %416 = arith.mulf %415, %414 : vector<128x128xbf16>
    %417 = arith.mulf %414, %414 : vector<128x128xbf16>
    %418 = arith.mulf %417, %414 : vector<128x128xbf16>
    %cst_38 = arith.constant 4.467770e-02 : bf16
    %419 = vector.broadcast %cst_38 : bf16 to vector<128x128xbf16>
    %420 = arith.mulf %419, %418 : vector<128x128xbf16>
    %421 = arith.addf %414, %420 : vector<128x128xbf16>
    %cst_39 = arith.constant 7.968750e-01 : bf16
    %422 = vector.broadcast %cst_39 : bf16 to vector<128x128xbf16>
    %423 = arith.mulf %422, %421 : vector<128x128xbf16>
    %424 = math.tanh %423 : vector<128x128xbf16>
    %cst_40 = arith.constant 1.000000e+00 : bf16
    %425 = vector.broadcast %cst_40 : bf16 to vector<128x128xbf16>
    %426 = arith.addf %425, %424 : vector<128x128xbf16>
    %427 = arith.mulf %416, %426 : vector<128x128xbf16>
    %c0_41 = arith.constant 0 : index
    %c0_42 = arith.constant 0 : index
    %428 = vector.load %arg9[%c0_41, %c0_42] : memref<128x128xbf16, #tpu.memory_space<vmem>>, vector<128x128xbf16>
    %cst_43 = arith.constant dense<0.000000e+00> : vector<128x128xf32>
    %429 = tpu.matmul %427, %428, %cst_43 {dimension_numbers = #tpu.dot_dimension_numbers<[1], [0], [0], [1], [0, 0, 1, 1], [], []>} : vector<128x128xbf16>, vector<128x128xbf16>, vector<128x128xf32> -> vector<128x128xf32>
    %c0_44 = arith.constant 0 : index
    %c0_45 = arith.constant 0 : index
    %430 = vector.load %arg10[%c0_44, %c0_45] : memref<1x128xf32, #tpu.memory_space<vmem>>, vector<1x128xf32>
    %431 = vector.broadcast %430 : vector<1x128xf32> to vector<128x128xf32>
    %432 = arith.addf %429, %431 : vector<128x128xf32>
    %c0_46 = arith.constant 0 : index
    %c0_47 = arith.constant 0 : index
    %c0_48 = arith.constant 0 : index
    %c0_49 = arith.constant 0 : index
    %433 = vector.load %arg11[%c0_46, %c0_47, %c0_48, %c0_49] : memref<1x8x16x128xf32, #tpu.memory_space<vmem>>, vector<1x8x16x128xf32>
    %434 = vector.shape_cast %433 : vector<1x8x16x128xf32> to vector<8x16x128xf32>
    %435 = vector.shape_cast %432 : vector<128x128xf32> to vector<8x16x128xf32>
    %436 = arith.addf %434, %435 : vector<8x16x128xf32>
    %c0_50 = arith.constant 0 : index
    %c0_51 = arith.constant 0 : index
    %c0_52 = arith.constant 0 : index
    %c0_53 = arith.constant 0 : index
    %437 = vector.load %arg11[%c0_50, %c0_51, %c0_52, %c0_53] : memref<1x8x16x128xf32, #tpu.memory_space<vmem>>, vector<1x8x16x128xf32>
    %438 = vector.shape_cast %437 : vector<1x8x16x128xf32> to vector<8x16x128xf32>
    %439 = vector.shape_cast %436 : vector<8x16x128xf32> to vector<1x8x16x128xf32>
    tpu.vector_store %arg11[%c0_50, %c0_51, %c0_52, %c0_53], %439 {strides = array<i32>} : memref<1x8x16x128xf32, #tpu.memory_space<vmem>>, vector<1x8x16x128xf32>,
    return
  }
  func.func @transform_1(%arg0: i32, %arg1: i32) -> (i32, i32, i32) {
    %c0_i32 = arith.constant 0 : i32
    %c0_i32_0 = arith.constant 0 : i32
    %c0_i32_1 = arith.constant 0 : i32
    %c0_i32_2 = arith.constant 0 : i32
    return %c0_i32, %c0_i32_0, %c0_i32_1 : i32, i32, i32
  }
  func.func @transform_2(%arg0: i32, %arg1: i32) -> (i32, i32) {
    %c0_i32 = arith.constant 0 : i32
    %c0_i32_0 = arith.constant 0 : i32
    %c0_i32_1 = arith.constant 0 : i32
    return %c0_i32, %c0_i32_0 : i32, i32
  }
  func.func @transform_3(%arg0: i32, %arg1: i32) -> (i32, i32) {
    %c0_i32 = arith.constant 0 : i32
    %c0_i32_0 = arith.constant 0 : i32
    %c0_i32_1 = arith.constant 0 : i32
    return %c0_i32, %c0_i32_0 : i32, i32
  }
  func.func @transform_4(%arg0: i32, %arg1: i32) -> (i32, i32) {
    %c0_i32 = arith.constant 0 : i32
    %c0_i32_0 = arith.constant 0 : i32
    %c0_i32_1 = arith.constant 0 : i32
    return %c0_i32, %c0_i32_0 : i32, i32
  }
  func.func @transform_5(%arg0: i32, %arg1: i32) -> (i32, i32) {
    %c0_i32 = arith.constant 0 : i32
    %c0_i32_0 = arith.constant 0 : i32
    %c0_i32_1 = arith.constant 0 : i32
    return %c0_i32, %c0_i32_0 : i32, i32
  }
  func.func @transform_6(%arg0: i32, %arg1: i32) -> (i32, i32) {
    %c0_i32 = arith.constant 0 : i32
    %c0_i32_0 = arith.constant 0 : i32
    %c0_i32_1 = arith.constant 0 : i32
    return %c0_i32, %c0_i32_0 : i32, i32
  }
  func.func @transform_7(%arg0: i32, %arg1: i32) -> (i32, i32) {
    %c0_i32 = arith.constant 0 : i32
    %c0_i32_0 = arith.constant 0 : i32
    %c0_i32_1 = arith.constant 0 : i32
    return %c0_i32, %c0_i32_0 : i32, i32
  }
  func.func @transform_8(%arg0: i32, %arg1: i32) -> (i32, i32) {
    %c0_i32 = arith.constant 0 : i32
    %c0_i32_0 = arith.constant 0 : i32
    %c0_i32_1 = arith.constant 0 : i32
    return %c0_i32, %c0_i32_0 : i32, i32
  }
  func.func @transform_9(%arg0: i32, %arg1: i32) -> (i32, i32, i32, i32) {
    %c0_i32 = arith.constant 0 : i32
    %c0_i32_0 = arith.constant 0 : i32
    %c0_i32_1 = arith.constant 0 : i32
    return %arg0, %arg1, %c0_i32, %c0_i32_0 : i32, i32, i32, i32
  }
}

</mosaic_0001>

<llo_original>
// kernel: tpu_custom_call.1
$region0: #{tpu_custom_call.1}
  #allocation0 [shape = 'u32[]', space=smem, size = 0x4, offset = 0x4, fixed_abs, tag = 'smem constant byte address 0x4 - core index']
  #allocation1 [shape = 'u32[144,128]{1,0:T(1,128)}', space=vmem, size = 0x12000, scoped, tag = 'internal scratch']
  #allocation2 [shape = 'bf16[2,14,24,128]{3,2,1,0:T(8,128)(2,1)}', space=vmem, size = 0x2a000, scoped, tag = 'scratch operand']
  #allocation3 [shape = 'bf16[128,128]{1,0:T(16,128)(2,1)}', space=vmem, size = 0x8000, scoped, tag = 'scratch operand']
  #allocation4 [shape = 's32[2]{0}', space=sflag, size = 0x8, scoped, tag = 'scratch operand']
  #allocation12 [shape = 's32[]', space=sflag, size = 0x4, offset = 0, fixed_abs, tag = 'sflag constant byte address 0x0 - dummy sync flag']
  #allocation13 [shape = 's32[]', space=sflag, size = 0x4, offset = 0, fixed_abs, tag = 'sflag constant byte address 0x0 - dummy sync flag']
  #allocation14 [shape = 'u32[]', space=smem, size = 0x4, offset = 0x44, fixed_abs, tag = 'smem constant byte address 0x44 - assertion arg 0']
  #allocation15 [shape = 'u32[]', space=smem, size = 0x4, offset = 0x48, fixed_abs, tag = 'smem constant byte address 0x48 - assertion arg 1']
  #allocation16 [shape = 's32[]', space=sflag, size = 0x4, offset = 0, fixed_abs, tag = 'sflag constant byte address 0x0 - dummy sync flag']
  #allocation17 [shape = 's32[]', space=sflag, size = 0x4, offset = 0, fixed_abs, tag = 'sflag constant byte address 0x0 - dummy sync flag']
  %s0 = inlined_call_operand.hbm [shape: bf16[2,22,24,128], index: 0, kind: input, shape index: {}]
  %s1 = inlined_call_operand.hbm [shape: f32[7,7,128], index: 1, kind: input, shape index: {}]
  %s2 = inlined_call_operand.vmem [shape: f32[1,128], index: 2, kind: input, shape index: {}]
  %s3 = inlined_call_operand.vmem [shape: f32[1,128], index: 3, kind: input, shape index: {}]
  %s4 = inlined_call_operand.vmem [shape: f32[1,128], index: 4, kind: input, shape index: {}]
  %s5 = inlined_call_operand.hbm [shape: bf16[128,128], index: 5, kind: input, shape index: {}]
  %s6 = inlined_call_operand.vmem [shape: f32[1,128], index: 6, kind: input, shape index: {}]
  %s7 = inlined_call_operand.hbm [shape: bf16[128,128], index: 7, kind: input, shape index: {}]
  %s8 = inlined_call_operand.vmem [shape: f32[1,128], index: 8, kind: input, shape index: {}]
  %s9 = inlined_call_operand.hbm [shape: f32[2,16,16,128], index: 9, kind: output, shape index: {}]
  %s10 = sld [smem:[#allocation0]]
  $region93: #{tpu_custom_call.1} parent=0
    _
  %s12 = ssub.s32 1, %s10
  %s13 = scalar_select 0, %s12, %s10
  $region1: #{tpu_custom_call.1} parent=0
    #allocation5 [shape = 'u8[28672]{0}', space=vmem, size = 0x7000, scoped, tag = 'input window, operand 1, single buffered']
    #allocation6 [shape = 's32[2]{0}', space=sflag, size = 0x8, scoped, tag = 'scoped memory for tpu_custom_call.1']
    #allocation7 [shape = 's32[2]{0}', space=sflag, size = 0x8, scoped, tag = 'scoped memory for tpu_custom_call.1']
    #allocation8 [shape = 'u8[32768]{0}', space=vmem, size = 0x8000, scoped, tag = 'input window, operand 5, single buffered']
    #allocation9 [shape = 's32[1]{0}', space=sflag, size = 0x4, scoped, tag = 'scoped memory for tpu_custom_call.1']
    #allocation10 [shape = 'u8[32768]{0}', space=vmem, size = 0x8000, scoped, tag = 'input window, operand 7, single buffered']
    #allocation11 [shape = 'u8[131072]{0}', space=vmem, size = 0x20000, scoped, tag = 'output window, operand 0']
    %14 = vsyncpa [#allocation6], 0
    %15 = vsyncpa [#allocation9], 0
    %16 = vsyncpa [#allocation7], 0
    %s17 = scalar_lea.sflag [#allocation7], 1
    %18 = vsyncpa %s17, 0
    loop: start=0, step=1, limit=6
    $region2: #{tpu_custom_call.1} parent=1 // loop_pre_header
      _
    $region3: #{tpu_custom_call.1} parent=1 // loop_header
      %s20 = sphi 0, %s24
      %p21 = scmp.ge.s32.totalorder %s20, 6
      %s27 = sphi 0, %s39
      %s28 = sphi 0, %s35
      %s29 = sphi 0, %s27
      %s30 = sphi 0, %s28
      %s31 = sphi 0, %s29
      %s32 = sphi 0, %s30
      %s40 = sphi 0, %s40
      %s42 = sphi 0, %s40
      %s43 = sphi 0, %s42
      %s57 = sphi 0, %s43
      %s61 = sphi 0, %s61
      %s63 = sphi 0, %s61
      %s64 = sphi 0, %s63
      %s78 = sphi 0, %s64
      %s82 = sphi 0, %s82
      %s84 = sphi 0, %s82
      %s85 = sphi 0, %s84
      %s99 = sphi 0, %s85
      %s103 = sphi 0, %s103
      %s105 = sphi 0, %s103
      %s106 = sphi 0, %s105
      %s120 = sphi 0, %s106
      %s124 = sphi 0, %s124
      %s126 = sphi 0, %s124
      %s127 = sphi 0, %s126
      %s141 = sphi 0, %s127
      %s145 = sphi 0, %s145
      %s147 = sphi 0, %s145
      %s148 = sphi 0, %s147
      %s162 = sphi 0, %s148
      %s166 = sphi 0, %s166
      %s168 = sphi 0, %s166
      %s169 = sphi 0, %s168
      %s183 = sphi 0, %s169
      %s187 = sphi 0, %s187
      %s189 = sphi 0, %s187
      %s190 = sphi 0, %s189
      %s204 = sphi 0, %s190
      %s212 = sphi 0, %s214
      %s215 = sphi 0, %s212
      %s216 = sphi 0, %s215
      %s232 = sphi 0, %s216
    $region4: #{tpu_custom_call.1} parent=1 // loop_header_branch
      %23 = sbr.rel (%p21) target = $region8
    $region5: #{tpu_custom_call.1} parent=1 // loop_body
      %s25 = ssub.s32 %s20, 1
      %s26 = ssub.s32 %s20, 2
      %s33 = sadd.s32 1, %s28
      %p34 = scmp.ge.s32.totalorder %s33, 2
      %s35 = scalar_select %p34, 0, %s33
      %s36 = sadd.s32 1, %s27
      %s37 = scalar_select %p34, %s36, %s27
      %p38 = scmp.ge.s32.totalorder %s37, 2
      %s39 = scalar_select %p38, 0, %s37
      %s41 = sadd.s32 %s40, 1
      %p44 = scmp.eq.s32.totalorder %s20, 3
      %p45 = scmp.ne.s32.totalorder %s40, %s42
      %p46 = scmp.eq.s32.totalorder %s20, 0
      %p47 = por %p45, %p46
      %p48 = scmp.ne.s32.totalorder %s40, %s42
      %p49 = scmp.eq.s32.totalorder %s25, 3
      %p50 = por %p48, %p49
      %p51 = scmp.ne.s32.totalorder %s42, %s43
      %p52 = scmp.eq.s32.totalorder %s25, 0
      %p53 = por %p51, %p52
      %p54 = scmp.ne.s32.totalorder %s42, %s43
      %p55 = scmp.eq.s32.totalorder %s26, 3
      %p56 = por %p54, %p55
      %p58 = scmp.ne.s32.totalorder %s43, %s57
      %p59 = scmp.eq.s32.totalorder %s26, 0
      %p60 = por %p58, %p59
      %s62 = sadd.s32 %s61, 1
      %p65 = scmp.eq.s32.totalorder %s20, 3
      %p66 = scmp.ne.s32.totalorder %s61, %s63
      %p67 = scmp.eq.s32.totalorder %s20, 0
      %p68 = por %p66, %p67
      %p69 = scmp.ne.s32.totalorder %s61, %s63
      %p70 = scmp.eq.s32.totalorder %s25, 3
      %p71 = por %p69, %p70
      %p72 = scmp.ne.s32.totalorder %s63, %s64
      %p73 = scmp.eq.s32.totalorder %s25, 0
      %p74 = por %p72, %p73
      %p75 = scmp.ne.s32.totalorder %s63, %s64
      %p76 = scmp.eq.s32.totalorder %s26, 3
      %p77 = por %p75, %p76
      %p79 = scmp.ne.s32.totalorder %s64, %s78
      %p80 = scmp.eq.s32.totalorder %s26, 0
      %p81 = por %p79, %p80
      %s83 = sadd.s32 %s82, 1
      %p86 = scmp.eq.s32.totalorder %s20, 3
      %p87 = scmp.ne.s32.totalorder %s82, %s84
      %p88 = scmp.eq.s32.totalorder %s20, 0
      %p89 = por %p87, %p88
      %p90 = scmp.ne.s32.totalorder %s82, %s84
      %p91 = scmp.eq.s32.totalorder %s25, 3
      %p92 = por %p90, %p91
      %p93 = scmp.ne.s32.totalorder %s84, %s85
      %p94 = scmp.eq.s32.totalorder %s25, 0
      %p95 = por %p93, %p94
      %p96 = scmp.ne.s32.totalorder %s84, %s85
      %p97 = scmp.eq.s32.totalorder %s26, 3
      %p98 = por %p96, %p97
      %p100 = scmp.ne.s32.totalorder %s85, %s99
      %p101 = scmp.eq.s32.totalorder %s26, 0
      %p102 = por %p100, %p101
      %s104 = sadd.s32 %s103, 1
      %p107 = scmp.eq.s32.totalorder %s20, 3
      %p108 = scmp.ne.s32.totalorder %s103, %s105
      %p109 = scmp.eq.s32.totalorder %s20, 0
      %p110 = por %p108, %p109
      %p111 = scmp.ne.s32.totalorder %s103, %s105
      %p112 = scmp.eq.s32.totalorder %s25, 3
      %p113 = por %p111, %p112
      %p114 = scmp.ne.s32.totalorder %s105, %s106
      %p115 = scmp.eq.s32.totalorder %s25, 0
      %p116 = por %p114, %p115
      %p117 = scmp.ne.s32.totalorder %s105, %s106
      %p118 = scmp.eq.s32.totalorder %s26, 3
      %p119 = por %p117, %p118
      %p121 = scmp.ne.s32.totalorder %s106, %s120
      %p122 = scmp.eq.s32.totalorder %s26, 0
      %p123 = por %p121, %p122
      %s125 = sadd.s32 %s124, 1
      %p128 = scmp.eq.s32.totalorder %s20, 3
      %p129 = scmp.ne.s32.totalorder %s124, %s126
      %p130 = scmp.eq.s32.totalorder %s20, 0
      %p131 = por %p129, %p130
      %p132 = scmp.ne.s32.totalorder %s124, %s126
      %p133 = scmp.eq.s32.totalorder %s25, 3
      %p134 = por %p132, %p133
      %p135 = scmp.ne.s32.totalorder %s126, %s127
      %p136 = scmp.eq.s32.totalorder %s25, 0
      %p137 = por %p135, %p136
      %p138 = scmp.ne.s32.totalorder %s126, %s127
      %p139 = scmp.eq.s32.totalorder %s26, 3
      %p140 = por %p138, %p139
      %p142 = scmp.ne.s32.totalorder %s127, %s141
      %p143 = scmp.eq.s32.totalorder %s26, 0
      %p144 = por %p142, %p143
      %s146 = sadd.s32 %s145, 1
      %p149 = scmp.eq.s32.totalorder %s20, 3
      %p150 = scmp.ne.s32.totalorder %s145, %s147
      %p151 = scmp.eq.s32.totalorder %s20, 0
      %p152 = por %p150, %p151
      %p153 = scmp.ne.s32.totalorder %s145, %s147
      %p154 = scmp.eq.s32.totalorder %s25, 3
      %p155 = por %p153, %p154
      %p156 = scmp.ne.s32.totalorder %s147, %s148
      %p157 = scmp.eq.s32.totalorder %s25, 0
      %p158 = por %p156, %p157
      %p159 = scmp.ne.s32.totalorder %s147, %s148
      %p160 = scmp.eq.s32.totalorder %s26, 3
      %p161 = por %p159, %p160
      %p163 = scmp.ne.s32.totalorder %s148, %s162
      %p164 = scmp.eq.s32.totalorder %s26, 0
      %p165 = por %p163, %p164
      %s167 = sadd.s32 %s166, 1
      %p170 = scmp.eq.s32.totalorder %s20, 3
      %p171 = scmp.ne.s32.totalorder %s166, %s168
      %p172 = scmp.eq.s32.totalorder %s20, 0
      %p173 = por %p171, %p172
      %p174 = scmp.ne.s32.totalorder %s166, %s168
      %p175 = scmp.eq.s32.totalorder %s25, 3
      %p176 = por %p174, %p175
      %p177 = scmp.ne.s32.totalorder %s168, %s169
      %p178 = scmp.eq.s32.totalorder %s25, 0
      %p179 = por %p177, %p178
      %p180 = scmp.ne.s32.totalorder %s168, %s169
      %p181 = scmp.eq.s32.totalorder %s26, 3
      %p182 = por %p180, %p181
      %p184 = scmp.ne.s32.totalorder %s169, %s183
      %p185 = scmp.eq.s32.totalorder %s26, 0
      %p186 = por %p184, %p185
      %s188 = sadd.s32 %s187, 1
      %p191 = scmp.eq.s32.totalorder %s20, 3
      %p192 = scmp.ne.s32.totalorder %s187, %s189
      %p193 = scmp.eq.s32.totalorder %s20, 0
      %p194 = por %p192, %p193
      %p195 = scmp.ne.s32.totalorder %s187, %s189
      %p196 = scmp.eq.s32.totalorder %s25, 3
      %p197 = por %p195, %p196
      %p198 = scmp.ne.s32.totalorder %s189, %s190
      %p199 = scmp.eq.s32.totalorder %s25, 0
      %p200 = por %p198, %p199
      %p201 = scmp.ne.s32.totalorder %s189, %s190
      %p202 = scmp.eq.s32.totalorder %s26, 3
      %p203 = por %p201, %p202
      %p205 = scmp.ne.s32.totalorder %s190, %s204
      %p206 = scmp.eq.s32.totalorder %s26, 0
      %p207 = por %p205, %p206
      %s208 = ssub.s32 %s27, %s39
      %s209 = ssub.s32 %s28, %s35
      %s210 = sor.u32 %s208, %s209
      %p211 = scmp.eq.s32.totalorder %s210, 0
      %s213 = sadd.s32 %s212, 1
      %s214 = scalar_select %p211, %s212, %s213
      %p217 = pneg %p211
      %p218 = scmp.eq.s32.totalorder %s20, 3
      %p219 = por %p217, %p218
      %p220 = scmp.ne.s32.totalorder %s212, %s215
      %p221 = scmp.eq.s32.totalorder %s20, 0
      %p222 = por %p220, %p221
      %p223 = scmp.ne.s32.totalorder %s212, %s215
      %p224 = scmp.eq.s32.totalorder %s25, 3
      %p225 = por %p223, %p224
      %p226 = scmp.ne.s32.totalorder %s215, %s216
      %p227 = scmp.eq.s32.totalorder %s25, 0
      %p228 = por %p226, %p227
      %p229 = scmp.ne.s32.totalorder %s215, %s216
      %p230 = scmp.eq.s32.totalorder %s26, 3
      %p231 = por %p229, %p230
      %p233 = scmp.ne.s32.totalorder %s216, %s232
      %p234 = scmp.eq.s32.totalorder %s26, 0
      %p235 = por %p233, %p234
      %p236 = scmp.le.s32.totalorder 1, %s20
      %p237 = scmp.lt.s32.totalorder %s20, 5
      %p238 = pnand %p236, %p237
      %p239 = pneg %p238
      // Predicated region
      $region9: #{tpu_custom_call.1} parent=5 // pred_check
        _
      $region10: #{tpu_custom_call.1} parent=5 // pred_check_branch
        %241 = sbr.rel (%p238) target = $region12
      $region11: #{tpu_custom_call.1} parent=5 // pred_region
        %s242 = ssub.s32 %s20, 1
        // Predicated region
        $region13: #{tpu_custom_call.1} parent=11 // pred_check
          %p243 = pneg %p53
        $region14: #{tpu_custom_call.1} parent=11 // pred_check_branch
          %245 = sbr.rel (%p243) target = $region16
        $region15: #{tpu_custom_call.1} parent=11 // pred_region
          %s247 = ssub.s32 896, 896
          %248 = vsyncadd [#allocation6], %s247
          %s249 = sshll.u32 [#allocation5], 4
          %s250 = int_to_ptr.vmem [resolvable:$true] %s249
          %255 = dma.hbm_to_vmem [thread:$0]  %s1, 896, %s250, [#allocation6], 128, 128, 8
        $region16: #{tpu_custom_call.1} parent=11 // pred_fallthru
          _
        // Predicated region
        $region17: #{tpu_custom_call.1} parent=11 // pred_check
          %p256 = pneg %p74
        $region18: #{tpu_custom_call.1} parent=11 // pred_check_branch
          %258 = sbr.rel (%p256) target = $region20
        $region19: #{tpu_custom_call.1} parent=11 // pred_region
          _
        $region20: #{tpu_custom_call.1} parent=11 // pred_fallthru
          _
        // Predicated region
        $region21: #{tpu_custom_call.1} parent=11 // pred_check
          %p259 = pneg %p95
        $region22: #{tpu_custom_call.1} parent=11 // pred_check_branch
          %261 = sbr.rel (%p259) target = $region24
        $region23: #{tpu_custom_call.1} parent=11 // pred_region
          _
        $region24: #{tpu_custom_call.1} parent=11 // pred_fallthru
          _
        // Predicated region
        $region25: #{tpu_custom_call.1} parent=11 // pred_check
          %p262 = pneg %p116
        $region26: #{tpu_custom_call.1} parent=11 // pred_check_branch
          %264 = sbr.rel (%p262) target = $region28
        $region27: #{tpu_custom_call.1} parent=11 // pred_region
          _
        $region28: #{tpu_custom_call.1} parent=11 // pred_fallthru
          _
        // Predicated region
        $region29: #{tpu_custom_call.1} parent=11 // pred_check
          %p265 = pneg %p137
        $region30: #{tpu_custom_call.1} parent=11 // pred_check_branch
          %267 = sbr.rel (%p265) target = $region32
        $region31: #{tpu_custom_call.1} parent=11 // pred_region
          %s269 = ssub.s32 1024, 1024
          %270 = vsyncadd [#allocation9], %s269
          %s271 = sshll.u32 [#allocation8], 4
          %s272 = int_to_ptr.vmem [resolvable:$true] %s271
          %277 = dma.hbm_to_vmem [thread:$0]  %s5, 1024, %s272, [#allocation9], 64, 64, 4
        $region32: #{tpu_custom_call.1} parent=11 // pred_fallthru
          _
        // Predicated region
        $region33: #{tpu_custom_call.1} parent=11 // pred_check
          %p278 = pneg %p158
        $region34: #{tpu_custom_call.1} parent=11 // pred_check_branch
          %280 = sbr.rel (%p278) target = $region36
        $region35: #{tpu_custom_call.1} parent=11 // pred_region
          _
        $region36: #{tpu_custom_call.1} parent=11 // pred_fallthru
          _
        // Predicated region
        $region37: #{tpu_custom_call.1} parent=11 // pred_check
          %p281 = pneg %p179
        $region38: #{tpu_custom_call.1} parent=11 // pred_check_branch
          %283 = sbr.rel (%p281) target = $region40
        $region39: #{tpu_custom_call.1} parent=11 // pred_region
          %s285 = ssub.s32 1024, 1024
          %286 = vsyncadd [#allocation9], %s285
          %s287 = sshll.u32 [#allocation10], 4
          %s288 = int_to_ptr.vmem [resolvable:$true] %s287
          %293 = dma.hbm_to_vmem [thread:$0]  %s7, 1024, %s288, [#allocation9], 64, 64, 4
        $region40: #{tpu_custom_call.1} parent=11 // pred_fallthru
          _
        // Predicated region
        $region41: #{tpu_custom_call.1} parent=11 // pred_check
          %p294 = pneg %p200
        $region42: #{tpu_custom_call.1} parent=11 // pred_check_branch
          %296 = sbr.rel (%p294) target = $region44
        $region43: #{tpu_custom_call.1} parent=11 // pred_region
          _
        $region44: #{tpu_custom_call.1} parent=11 // pred_fallthru
          _
      $region12: #{tpu_custom_call.1} parent=5 // pred_fallthru
        _
      %p297 = scmp.lt.s32.totalorder %s20, 4
      // Predicated region
      $region45: #{tpu_custom_call.1} parent=5 // pred_check
        %p298 = pneg %p297
      $region46: #{tpu_custom_call.1} parent=5 // pred_check_branch
        %300 = sbr.rel (%p298) target = $region48
      $region47: #{tpu_custom_call.1} parent=5 // pred_region
        _
      $region48: #{tpu_custom_call.1} parent=5 // pred_fallthru
        _
      %p301 = scmp.le.s32.totalorder 1, %s20
      %p302 = scmp.lt.s32.totalorder %s20, 5
      %p303 = pnand %p301, %p302
      %p304 = pneg %p303
      // Predicated region
      $region49: #{tpu_custom_call.1} parent=5 // pred_check
        _
      $region50: #{tpu_custom_call.1} parent=5 // pred_check_branch
        %306 = sbr.rel (%p303) target = $region52
      $region51: #{tpu_custom_call.1} parent=5 // pred_region
        %s307 = ssub.s32 %s20, 1
        // Predicated region
        $region53: #{tpu_custom_call.1} parent=51 // pred_check
          %p308 = pneg %p53
        $region54: #{tpu_custom_call.1} parent=51 // pred_check_branch
          %310 = sbr.rel (%p308) target = $region56
        $region55: #{tpu_custom_call.1} parent=51 // pred_region
          %311 = dma.done [#allocation6], 896
        $region56: #{tpu_custom_call.1} parent=51 // pred_fallthru
          _
        // Predicated region
        $region57: #{tpu_custom_call.1} parent=51 // pred_check
          %p312 = pneg %p137
        $region58: #{tpu_custom_call.1} parent=51 // pred_check_branch
          %314 = sbr.rel (%p312) target = $region60
        $region59: #{tpu_custom_call.1} parent=51 // pred_region
          %315 = dma.done [#allocation9], 1024
        $region60: #{tpu_custom_call.1} parent=51 // pred_fallthru
          _
        // Predicated region
        $region61: #{tpu_custom_call.1} parent=51 // pred_check
          %p316 = pneg %p179
        $region62: #{tpu_custom_call.1} parent=51 // pred_check_branch
          %318 = sbr.rel (%p316) target = $region64
        $region63: #{tpu_custom_call.1} parent=51 // pred_region
          %319 = dma.done [#allocation9], 1024
        $region64: #{tpu_custom_call.1} parent=51 // pred_fallthru
          _
        %p320 = pneg %p53
        %p321 = pneg %p50
        %p322 = pneg %p74
        %p323 = pneg %p71
        %p324 = pneg %p95
        %p325 = pneg %p92
        %p326 = pneg %p116
        %p327 = pneg %p113
        %p328 = pneg %p137
        %p329 = pneg %p134
        %p330 = pneg %p158
        %p331 = pneg %p155
        %p332 = pneg %p179
        %p333 = pneg %p176
        %p334 = pneg %p200
        %p335 = pneg %p197
        %p336 = pneg %p228
        %p337 = pneg %p225
        %s338 = sand.u32 %s215, 1
        %s339 = scalar_lea.sflag [#allocation7], %s338
        %s340 = sand.u32 %s215, 1
        %s341 = smul.addr %s340, 128
        %s342 = scalar_lea.vmem [#allocation11], %s341
        %s343 = smul.u32 8, %s30
        %p349 = scmp.lt.s32.totalorder %s30, 0
        %s350 = ssub.s32 0, %s30
        %s351 = scalar_select %p349, %s350, %s30
        %s352 = sand.u32 %s351, 1
        %s353 = ssub.s32 0, %s352
        %s354 = scalar_select %p349, %s353, %s352
        %p355 = scmp.eq.s32.totalorder %s30, 0
        // Predicated region
        $region65: #{tpu_custom_call.1} parent=51 // pred_check
          %p356 = pneg %p355
        $region66: #{tpu_custom_call.1} parent=51 // pred_check_branch
          %358 = sbr.rel (%p356) target = $region68
        $region67: #{tpu_custom_call.1} parent=51 // pred_region
          %s359 = smul.u32 %s30, 8
          %s360 = smul.u32 %s359, 3
          %s361 = smul.u32 %s29, 66
          %s362 = sadd.s32 %s360, %s361
          %s363 = smul.addr %s362, 64
          %s364 = scalar_lea.hbm %s0, %s363
          %s365 = smul.u32 %s354, 42
          %s366 = smul.addr %s365, 4
          %s367 = scalar_lea.vmem [#allocation2], %s366
          %s368 = scalar_lea.sflag [#allocation4], %s354
          // Predicated region
          $region69: #{tpu_custom_call.1} parent=67 // pred_check
            _
          $region70: #{tpu_custom_call.1} parent=67 // pred_check_branch
            %370 = sbr.rel target = $region72
          $region71: #{tpu_custom_call.1} parent=67 // pred_region
            %371 = sst [smem:[#allocation14]] [#allocation13]
            %372 = sst [smem:[#allocation15]] [#allocation12]
          $region72: #{tpu_custom_call.1} parent=67 // pred_fallthru
            _
          %374 = shalt.err (0)
          %s376 = sshll.u32 %s367, 4
          %s377 = int_to_ptr.vmem [resolvable:$true] %s376
          %379 = dma.hbm_to_vmem [thread:$0]  %s364, 2688, %s377, %s368
        $region68: #{tpu_custom_call.1} parent=51 // pred_fallthru
          _
        %s380 = smul.u32 %s354, 42
        %s381 = smul.addr %s380, 4
        %s382 = scalar_lea.vmem [#allocation2], %s381
        %s383 = scalar_lea.sflag [#allocation4], %s354
        %s384 = smul.u32 4, 14
        %s385 = smul.u32 %s384, 3
        %s386 = smul.u32 %s385, 1
        %s387 = sshll.u32 %s386, 4
        %388 = dma.done %s383, %s387
        %s389 = sadd.s32 %s30, 1
        %p390 = scmp.lt.s32.totalorder %s389, 2
        // Predicated region
        $region73: #{tpu_custom_call.1} parent=51 // pred_check
          %p391 = pneg %p390
        $region74: #{tpu_custom_call.1} parent=51 // pred_check_branch
          %393 = sbr.rel (%p391) target = $region76
        $region75: #{tpu_custom_call.1} parent=51 // pred_region
          %s394 = ssub.s32 1, %s354
          %s395 = smul.u32 %s389, 8
          %s396 = smul.u32 %s395, 3
          %s397 = smul.u32 %s29, 66
          %s398 = sadd.s32 %s396, %s397
          %s399 = smul.addr %s398, 64
          %s400 = scalar_lea.hbm %s0, %s399
          %s401 = smul.u32 %s394, 42
          %s402 = smul.addr %s401, 4
          %s403 = scalar_lea.vmem [#allocation2], %s402
          %s404 = scalar_lea.sflag [#allocation4], %s394
          // Predicated region
          $region77: #{tpu_custom_call.1} parent=75 // pred_check
            _
          $region78: #{tpu_custom_call.1} parent=75 // pred_check_branch
            %406 = sbr.rel target = $region80
          $region79: #{tpu_custom_call.1} parent=75 // pred_region
            %407 = sst [smem:[#allocation14]] [#allocation17]
            %408 = sst [smem:[#allocation15]] [#allocation16]
          $region80: #{tpu_custom_call.1} parent=75 // pred_fallthru
            _
          %410 = shalt.err (0)
          %s412 = sshll.u32 %s403, 4
          %s413 = int_to_ptr.vmem [resolvable:$true] %s412
          %415 = dma.hbm_to_vmem [thread:$0]  %s400, 2688, %s413, %s404
        $region76: #{tpu_custom_call.1} parent=51 // pred_fallthru
          _
        %v416 = vld [vmem:[#allocation5] sm:$0x7f]
        %v417 = vld [vmem:[#allocation5 + $0x8] sm:$0x7f]
        %v418 = vld [vmem:[#allocation5 + $0x10] sm:$0x7f]
        %v419 = vld [vmem:[#allocation5 + $0x18] sm:$0x7f]
        %v420 = vld [vmem:[#allocation5 + $0x20] sm:$0x7f]
        %v421 = vld [vmem:[#allocation5 + $0x28] sm:$0x7f]
        %v422 = vld [vmem:[#allocation5 + $0x30] sm:$0x7f]
        %v423 = vld [vmem:[%s2] sm:$0x1]
        %v424 = vld [vmem:[%s3] sm:$0x1]
        %v425 = vld [vmem:[%s4] sm:$0x1]
        %v426 = vld [vmem:[%s382] sm:$0xf]
        %v427 = vld [vmem:[%s382 + $0x4] sm:$0xf]
        %v428 = vld [vmem:[%s382 + $0x8] sm:$0xf]
        %v429 = vld [vmem:[%s382 + $0xc] sm:$0xf]
        %v430 = vld [vmem:[%s382 + $0x10] sm:$0xf]
        %v431 = vld [vmem:[%s382 + $0x14] sm:$0xf]
        %v432 = vld [vmem:[%s382 + $0x18] sm:$0xf]
        %v433 = vld [vmem:[%s382 + $0x1c] sm:$0xf]
        %v434 = vld [vmem:[%s382 + $0x20] sm:$0xf]
        %v435 = vld [vmem:[%s382 + $0x24] sm:$0xf]
        %v436 = vld [vmem:[%s382 + $0x28] sm:$0xf]
        %v437 = vld [vmem:[%s382 + $0x2c] sm:$0xf]
        %v438 = vld [vmem:[%s382 + $0x30] sm:$0xf]
        %v439 = vld [vmem:[%s382 + $0x34] sm:$0xf]
        %v440 = vld [vmem:[%s382 + $0x38] sm:$0xf]
        %v441 = vld [vmem:[%s382 + $0x3c] sm:$0xf]
        %v442 = vld [vmem:[%s382 + $0x40] sm:$0xf]
        %v443 = vld [vmem:[%s382 + $0x44] sm:$0xf]
        %v444 = vld [vmem:[%s382 + $0x48] sm:$0xf]
        %v445 = vld [vmem:[%s382 + $0x4c] sm:$0xf]
        %v446 = vld [vmem:[%s382 + $0x50] sm:$0xf]
        %v447 = vld [vmem:[%s382 + $0x54] sm:$0xf]
        %v448 = vld [vmem:[%s382 + $0x58] sm:$0xf]
        %v449 = vld [vmem:[%s382 + $0x5c] sm:$0xf]
        %v450 = vld [vmem:[%s382 + $0x60] sm:$0xf]
        %v451 = vld [vmem:[%s382 + $0x64] sm:$0xf]
        %v452 = vld [vmem:[%s382 + $0x68] sm:$0xf]
        %v453 = vld [vmem:[%s382 + $0x6c] sm:$0xf]
        %v454 = vld [vmem:[%s382 + $0x70] sm:$0xf]
        %v455 = vld [vmem:[%s382 + $0x74] sm:$0xf]
        %v456 = vld [vmem:[%s382 + $0x78] sm:$0xf]
        %v457 = vld [vmem:[%s382 + $0x7c] sm:$0xf]
        %v458 = vld [vmem:[%s382 + $0x80] sm:$0xf]
        %v459 = vld [vmem:[%s382 + $0x84] sm:$0xf]
        %v460 = vld [vmem:[%s382 + $0x88] sm:$0xf]
        %v461 = vld [vmem:[%s382 + $0x8c] sm:$0xf]
        %v462 = vld [vmem:[%s382 + $0x90] sm:$0xf]
        %v463 = vld [vmem:[%s382 + $0x94] sm:$0xf]
        %v464 = vld [vmem:[%s382 + $0x98] sm:$0xf]
        %v465 = vld [vmem:[%s382 + $0x9c] sm:$0xf]
        %v466 = vld [vmem:[%s382 + $0xa0] sm:$0xf]
        %v467 = vld [vmem:[%s382 + $0xa4] sm:$0xf]
        %v468 = vunpack.c.l.bf16 %v426
        %v469 = vunpack.c.l.bf16 %v427
        %v470 = vunpack.c.l.bf16 %v428
        %v471 = vunpack.c.l.bf16 %v429
        %v472 = vunpack.c.l.bf16 %v430
        %v473 = vunpack.c.l.bf16 %v431
        %v474 = vunpack.c.l.bf16 %v432
        %v475 = vunpack.c.l.bf16 %v433
        %v476 = vunpack.c.l.bf16 %v434
        %v477 = vunpack.c.l.bf16 %v435
        %v478 = vunpack.c.l.bf16 %v436
        %v479 = vunpack.c.l.bf16 %v437
        %v480 = vunpack.c.l.bf16 %v438
        %v481 = vunpack.c.l.bf16 %v439
        %v482 = vunpack.c.l.bf16 %v440
        %v483 = vunpack.c.l.bf16 %v441
        %v484 = vunpack.c.l.bf16 %v442
        %v485 = vunpack.c.l.bf16 %v443
        %v486 = vunpack.c.l.bf16 %v444
        %v487 = vunpack.c.l.bf16 %v445
        %v488 = vunpack.c.l.bf16 %v446
        %v489 = vunpack.c.l.bf16 %v447
        %v490 = vunpack.c.l.bf16 %v448
        %v491 = vunpack.c.l.bf16 %v449
        %v492 = vunpack.c.l.bf16 %v450
        %v493 = vunpack.c.l.bf16 %v451
        %v494 = vunpack.c.l.bf16 %v452
        %v495 = vunpack.c.l.bf16 %v453
        %v496 = vunpack.c.l.bf16 %v454
        %v497 = vunpack.c.l.bf16 %v455
        %v498 = vunpack.c.l.bf16 %v456
        %v499 = vunpack.c.l.bf16 %v457
        %v500 = vunpack.c.l.bf16 %v458
        %v501 = vunpack.c.l.bf16 %v459
        %v502 = vunpack.c.l.bf16 %v460
        %v503 = vunpack.c.l.bf16 %v461
        %v504 = vunpack.c.l.bf16 %v462
        %v505 = vunpack.c.l.bf16 %v463
        %v506 = vunpack.c.l.bf16 %v464
        %v507 = vunpack.c.l.bf16 %v465
        %v508 = vunpack.c.l.bf16 %v466
        %v509 = vunpack.c.l.bf16 %v467
        %v510 = vlaneseq
        %v511 = vshrl.u32 %v510, 7
        %v512 = vsub.s32 0, %v511
        %v513 = vrot.slane %v416, %v512
        %v514 = vmul.f32 %v468, %v513
        %v515 = vmul.f32 %v469, %v513
        %v516 = vmul.f32 %v471, %v513
        %v517 = vmul.f32 %v472, %v513
        %v518 = vmul.f32 %v474, %v513
        %v519 = vmul.f32 %v475, %v513
        %v520 = vmul.f32 %v477, %v513
        %v521 = vmul.f32 %v478, %v513
        %v522 = vmul.f32 %v480, %v513
        %v523 = vmul.f32 %v481, %v513
        %v524 = vmul.f32 %v483, %v513
        %v525 = vmul.f32 %v484, %v513
        %v526 = vmul.f32 %v486, %v513
        %v527 = vmul.f32 %v487, %v513
        %v528 = vmul.f32 %v489, %v513
        %v529 = vmul.f32 %v490, %v513
        %v530 = vlaneseq
        %v531 = vshrl.u32 %v530, 7
        %v532 = vsub.s32 0, %v531
        %v533 = vrot.slane %v417, %v532
        %v534 = vmul.f32 %v471, %v533
        %v535 = vmul.f32 %v472, %v533
        %v536 = vmul.f32 %v474, %v533
        %v537 = vmul.f32 %v475, %v533
        %v538 = vmul.f32 %v477, %v533
        %v539 = vmul.f32 %v478, %v533
        %v540 = vmul.f32 %v480, %v533
        %v541 = vmul.f32 %v481, %v533
        %v542 = vmul.f32 %v483, %v533
        %v543 = vmul.f32 %v484, %v533
        %v544 = vmul.f32 %v486, %v533
        %v545 = vmul.f32 %v487, %v533
        %v546 = vmul.f32 %v489, %v533
        %v547 = vmul.f32 %v490, %v533
        %v548 = vmul.f32 %v492, %v533
        %v549 = vmul.f32 %v493, %v533
        %v550 = vadd.f32 %v514, %v534
        %v551 = vadd.f32 %v515, %v535
        %v552 = vadd.f32 %v516, %v536
        %v553 = vadd.f32 %v517, %v537
        %v554 = vadd.f32 %v518, %v538
        %v555 = vadd.f32 %v519, %v539
        %v556 = vadd.f32 %v520, %v540
        %v557 = vadd.f32 %v521, %v541
        %v558 = vadd.f32 %v522, %v542
        %v559 = vadd.f32 %v523, %v543
        %v560 = vadd.f32 %v524, %v544
        %v561 = vadd.f32 %v525, %v545
        %v562 = vadd.f32 %v526, %v546
        %v563 = vadd.f32 %v527, %v547
        %v564 = vadd.f32 %v528, %v548
        %v565 = vadd.f32 %v529, %v549
        %v566 = vlaneseq
        %v567 = vshrl.u32 %v566, 7
        %v568 = vsub.s32 0, %v567
        %v569 = vrot.slane %v418, %v568
        %v570 = vmul.f32 %v474, %v569
        %v571 = vmul.f32 %v475, %v569
        %v572 = vmul.f32 %v477, %v569
        %v573 = vmul.f32 %v478, %v569
        %v574 = vmul.f32 %v480, %v569
        %v575 = vmul.f32 %v481, %v569
        %v576 = vmul.f32 %v483, %v569
        %v577 = vmul.f32 %v484, %v569
        %v578 = vmul.f32 %v486, %v569
        %v579 = vmul.f32 %v487, %v569
        %v580 = vmul.f32 %v489, %v569
        %v581 = vmul.f32 %v490, %v569
        %v582 = vmul.f32 %v492, %v569
        %v583 = vmul.f32 %v493, %v569
        %v584 = vmul.f32 %v495, %v569
        %v585 = vmul.f32 %v496, %v569
        %v586 = vadd.f32 %v550, %v570
        %v587 = vadd.f32 %v551, %v571
        %v588 = vadd.f32 %v552, %v572
        %v589 = vadd.f32 %v553, %v573
        %v590 = vadd.f32 %v554, %v574
        %v591 = vadd.f32 %v555, %v575
        %v592 = vadd.f32 %v556, %v576
        %v593 = vadd.f32 %v557, %v577
        %v594 = vadd.f32 %v558, %v578
        %v595 = vadd.f32 %v559, %v579
        %v596 = vadd.f32 %v560, %v580
        %v597 = vadd.f32 %v561, %v581
        %v598 = vadd.f32 %v562, %v582
        %v599 = vadd.f32 %v563, %v583
        %v600 = vadd.f32 %v564, %v584
        %v601 = vadd.f32 %v565, %v585
        %v602 = vlaneseq
        %v603 = vshrl.u32 %v602, 7
        %v604 = vsub.s32 0, %v603
        %v605 = vrot.slane %v419, %v604
        %v606 = vmul.f32 %v477, %v605
        %v607 = vmul.f32 %v478, %v605
        %v608 = vmul.f32 %v480, %v605
        %v609 = vmul.f32 %v481, %v605
        %v610 = vmul.f32 %v483, %v605
        %v611 = vmul.f32 %v484, %v605
        %v612 = vmul.f32 %v486, %v605
        %v613 = vmul.f32 %v487, %v605
        %v614 = vmul.f32 %v489, %v605
        %v615 = vmul.f32 %v490, %v605
        %v616 = vmul.f32 %v492, %v605
        %v617 = vmul.f32 %v493, %v605
        %v618 = vmul.f32 %v495, %v605
        %v619 = vmul.f32 %v496, %v605
        %v620 = vmul.f32 %v498, %v605
        %v621 = vmul.f32 %v499, %v605
        %v622 = vadd.f32 %v586, %v606
        %v623 = vadd.f32 %v587, %v607
        %v624 = vadd.f32 %v588, %v608
        %v625 = vadd.f32 %v589, %v609
        %v626 = vadd.f32 %v590, %v610
        %v627 = vadd.f32 %v591, %v611
        %v628 = vadd.f32 %v592, %v612
        %v629 = vadd.f32 %v593, %v613
        %v630 = vadd.f32 %v594, %v614
        %v631 = vadd.f32 %v595, %v615
        %v632 = vadd.f32 %v596, %v616
        %v633 = vadd.f32 %v597, %v617
        %v634 = vadd.f32 %v598, %v618
        %v635 = vadd.f32 %v599, %v619
        %v636 = vadd.f32 %v600, %v620
        %v637 = vadd.f32 %v601, %v621
        %v638 = vlaneseq
        %v639 = vshrl.u32 %v638, 7
        %v640 = vsub.s32 0, %v639
        %v641 = vrot.slane %v420, %v640
        %v642 = vmul.f32 %v480, %v641
        %v643 = vmul.f32 %v481, %v641
        %v644 = vmul.f32 %v483, %v641
        %v645 = vmul.f32 %v484, %v641
        %v646 = vmul.f32 %v486, %v641
        %v647 = vmul.f32 %v487, %v641
        %v648 = vmul.f32 %v489, %v641
        %v649 = vmul.f32 %v490, %v641
        %v650 = vmul.f32 %v492, %v641
        %v651 = vmul.f32 %v493, %v641
        %v652 = vmul.f32 %v495, %v641
        %v653 = vmul.f32 %v496, %v641
        %v654 = vmul.f32 %v498, %v641
        %v655 = vmul.f32 %v499, %v641
        %v656 = vmul.f32 %v501, %v641
        %v657 = vmul.f32 %v502, %v641
        %v658 = vadd.f32 %v622, %v642
        %v659 = vadd.f32 %v623, %v643
        %v660 = vadd.f32 %v624, %v644
        %v661 = vadd.f32 %v625, %v645
        %v662 = vadd.f32 %v626, %v646
        %v663 = vadd.f32 %v627, %v647
        %v664 = vadd.f32 %v628, %v648
        %v665 = vadd.f32 %v629, %v649
        %v666 = vadd.f32 %v630, %v650
        %v667 = vadd.f32 %v631, %v651
        %v668 = vadd.f32 %v632, %v652
        %v669 = vadd.f32 %v633, %v653
        %v670 = vadd.f32 %v634, %v654
        %v671 = vadd.f32 %v635, %v655
        %v672 = vadd.f32 %v636, %v656
        %v673 = vadd.f32 %v637, %v657
        %v674 = vlaneseq
        %v675 = vshrl.u32 %v674, 7
        %v676 = vsub.s32 0, %v675
        %v677 = vrot.slane %v421, %v676
        %v678 = vmul.f32 %v483, %v677
        %v679 = vmul.f32 %v484, %v677
        %v680 = vmul.f32 %v486, %v677
        %v681 = vmul.f32 %v487, %v677
        %v682 = vmul.f32 %v489, %v677
        %v683 = vmul.f32 %v490, %v677
        %v684 = vmul.f32 %v492, %v677
        %v685 = vmul.f32 %v493, %v677
        %v686 = vmul.f32 %v495, %v677
        %v687 = vmul.f32 %v496, %v677
        %v688 = vmul.f32 %v498, %v677
        %v689 = vmul.f32 %v499, %v677
        %v690 = vmul.f32 %v501, %v677
        %v691 = vmul.f32 %v502, %v677
        %v692 = vmul.f32 %v504, %v677
        %v693 = vmul.f32 %v505, %v677
        %v694 = vadd.f32 %v658, %v678
        %v695 = vadd.f32 %v659, %v679
        %v696 = vadd.f32 %v660, %v680
        %v697 = vadd.f32 %v661, %v681
        %v698 = vadd.f32 %v662, %v682
        %v699 = vadd.f32 %v663, %v683
        %v700 = vadd.f32 %v664, %v684
        %v701 = vadd.f32 %v665, %v685
        %v702 = vadd.f32 %v666, %v686
        %v703 = vadd.f32 %v667, %v687
        %v704 = vadd.f32 %v668, %v688
        %v705 = vadd.f32 %v669, %v689
        %v706 = vadd.f32 %v670, %v690
        %v707 = vadd.f32 %v671, %v691
        %v708 = vadd.f32 %v672, %v692
        %v709 = vadd.f32 %v673, %v693
        %v710 = vlaneseq
        %v711 = vshrl.u32 %v710, 7
        %v712 = vsub.s32 0, %v711
        %v713 = vrot.slane %v422, %v712
        %v714 = vmul.f32 %v486, %v713
        %v715 = vmul.f32 %v487, %v713
        %v716 = vmul.f32 %v489, %v713
        %v717 = vmul.f32 %v490, %v713
        %v718 = vmul.f32 %v492, %v713
        %v719 = vmul.f32 %v493, %v713
        %v720 = vmul.f32 %v495, %v713
        %v721 = vmul.f32 %v496, %v713
        %v722 = vmul.f32 %v498, %v713
        %v723 = vmul.f32 %v499, %v713
        %v724 = vmul.f32 %v501, %v713
        %v725 = vmul.f32 %v502, %v713
        %v726 = vmul.f32 %v504, %v713
        %v727 = vmul.f32 %v505, %v713
        %v728 = vmul.f32 %v507, %v713
        %v729 = vmul.f32 %v508, %v713
        %v730 = vadd.f32 %v694, %v714
        %v731 = vadd.f32 %v695, %v715
        %v732 = vadd.f32 %v696, %v716
        %v733 = vadd.f32 %v697, %v717
        %v734 = vadd.f32 %v698, %v718
        %v735 = vadd.f32 %v699, %v719
        %v736 = vadd.f32 %v700, %v720
        %v737 = vadd.f32 %v701, %v721
        %v738 = vadd.f32 %v702, %v722
        %v739 = vadd.f32 %v703, %v723
        %v740 = vadd.f32 %v704, %v724
        %v741 = vadd.f32 %v705, %v725
        %v742 = vadd.f32 %v706, %v726
        %v743 = vadd.f32 %v707, %v727
        %v744 = vadd.f32 %v708, %v728
        %v745 = vadd.f32 %v709, %v729
        %v746 = vlaneseq
        %v747 = vshrl.u32 %v746, 7
        %v748 = vsub.s32 1, %v747
        %v749 = vrot.slane %v416, %v748
        %v750 = vmul.f32 %v468, %v749
        %v751 = vmul.f32 %v469, %v749
        %v752 = vmul.f32 %v470, %v749
        %v753 = vmul.f32 %v471, %v749
        %v754 = vmul.f32 %v472, %v749
        %v755 = vmul.f32 %v473, %v749
        %v756 = vmul.f32 %v474, %v749
        %v757 = vmul.f32 %v475, %v749
        %v758 = vmul.f32 %v476, %v749
        %v759 = vmul.f32 %v477, %v749
        %v760 = vmul.f32 %v478, %v749
        %v761 = vmul.f32 %v479, %v749
        %v762 = vmul.f32 %v480, %v749
        %v763 = vmul.f32 %v481, %v749
        %v764 = vmul.f32 %v482, %v749
        %v765 = vmul.f32 %v483, %v749
        %v766 = vmul.f32 %v484, %v749
        %v767 = vmul.f32 %v485, %v749
        %v768 = vmul.f32 %v486, %v749
        %v769 = vmul.f32 %v487, %v749
        %v770 = vmul.f32 %v488, %v749
        %v771 = vmul.f32 %v489, %v749
        %v772 = vmul.f32 %v490, %v749
        %v773 = vmul.f32 %v491, %v749
        %v774 = vlaneseq
        %v775 = vshrl.u32 %v774, 7
        %v776 = vsub.s32 1, %v775
        %v777 = vrot.slane %v417, %v776
        %v778 = vmul.f32 %v471, %v777
        %v779 = vmul.f32 %v472, %v777
        %v780 = vmul.f32 %v473, %v777
        %v781 = vmul.f32 %v474, %v777
        %v782 = vmul.f32 %v475, %v777
        %v783 = vmul.f32 %v476, %v777
        %v784 = vmul.f32 %v477, %v777
        %v785 = vmul.f32 %v478, %v777
        %v786 = vmul.f32 %v479, %v777
        %v787 = vmul.f32 %v480, %v777
        %v788 = vmul.f32 %v481, %v777
        %v789 = vmul.f32 %v482, %v777
        %v790 = vmul.f32 %v483, %v777
        %v791 = vmul.f32 %v484, %v777
        %v792 = vmul.f32 %v485, %v777
        %v793 = vmul.f32 %v486, %v777
        %v794 = vmul.f32 %v487, %v777
        %v795 = vmul.f32 %v488, %v777
        %v796 = vmul.f32 %v489, %v777
        %v797 = vmul.f32 %v490, %v777
        %v798 = vmul.f32 %v491, %v777
        %v799 = vmul.f32 %v492, %v777
        %v800 = vmul.f32 %v493, %v777
        %v801 = vmul.f32 %v494, %v777
        %v802 = vadd.f32 %v750, %v778
        %v803 = vadd.f32 %v751, %v779
        %v804 = vadd.f32 %v752, %v780
        %v805 = vadd.f32 %v753, %v781
        %v806 = vadd.f32 %v754, %v782
        %v807 = vadd.f32 %v755, %v783
        %v808 = vadd.f32 %v756, %v784
        %v809 = vadd.f32 %v757, %v785
        %v810 = vadd.f32 %v758, %v786
        %v811 = vadd.f32 %v759, %v787
        %v812 = vadd.f32 %v760, %v788
        %v813 = vadd.f32 %v761, %v789
        %v814 = vadd.f32 %v762, %v790
        %v815 = vadd.f32 %v763, %v791
        %v816 = vadd.f32 %v764, %v792
        %v817 = vadd.f32 %v765, %v793
        %v818 = vadd.f32 %v766, %v794
        %v819 = vadd.f32 %v767, %v795
        %v820 = vadd.f32 %v768, %v796
        %v821 = vadd.f32 %v769, %v797
        %v822 = vadd.f32 %v770, %v798
        %v823 = vadd.f32 %v771, %v799
        %v824 = vadd.f32 %v772, %v800
        %v825 = vadd.f32 %v773, %v801
        %v826 = vlaneseq
        %v827 = vshrl.u32 %v826, 7
        %v828 = vsub.s32 1, %v827
        %v829 = vrot.slane %v418, %v828
        %v830 = vmul.f32 %v474, %v829
        %v831 = vmul.f32 %v475, %v829
        %v832 = vmul.f32 %v476, %v829
        %v833 = vmul.f32 %v477, %v829
        %v834 = vmul.f32 %v478, %v829
        %v835 = vmul.f32 %v479, %v829
        %v836 = vmul.f32 %v480, %v829
        %v837 = vmul.f32 %v481, %v829
        %v838 = vmul.f32 %v482, %v829
        %v839 = vmul.f32 %v483, %v829
        %v840 = vmul.f32 %v484, %v829
        %v841 = vmul.f32 %v485, %v829
        %v842 = vmul.f32 %v486, %v829
        %v843 = vmul.f32 %v487, %v829
        %v844 = vmul.f32 %v488, %v829
        %v845 = vmul.f32 %v489, %v829
        %v846 = vmul.f32 %v490, %v829
        %v847 = vmul.f32 %v491, %v829
        %v848 = vmul.f32 %v492, %v829
        %v849 = vmul.f32 %v493, %v829
        %v850 = vmul.f32 %v494, %v829
        %v851 = vmul.f32 %v495, %v829
        %v852 = vmul.f32 %v496, %v829
        %v853 = vmul.f32 %v497, %v829
        %v854 = vadd.f32 %v802, %v830
        %v855 = vadd.f32 %v803, %v831
        %v856 = vadd.f32 %v804, %v832
        %v857 = vadd.f32 %v805, %v833
        %v858 = vadd.f32 %v806, %v834
        %v859 = vadd.f32 %v807, %v835
        %v860 = vadd.f32 %v808, %v836
        %v861 = vadd.f32 %v809, %v837
        %v862 = vadd.f32 %v810, %v838
        %v863 = vadd.f32 %v811, %v839
        %v864 = vadd.f32 %v812, %v840
        %v865 = vadd.f32 %v813, %v841
        %v866 = vadd.f32 %v814, %v842
        %v867 = vadd.f32 %v815, %v843
        %v868 = vadd.f32 %v816, %v844
        %v869 = vadd.f32 %v817, %v845
        %v870 = vadd.f32 %v818, %v846
        %v871 = vadd.f32 %v819, %v847
        %v872 = vadd.f32 %v820, %v848
        %v873 = vadd.f32 %v821, %v849
        %v874 = vadd.f32 %v822, %v850
        %v875 = vadd.f32 %v823, %v851
        %v876 = vadd.f32 %v824, %v852
        %v877 = vadd.f32 %v825, %v853
        %v878 = vlaneseq
        %v879 = vshrl.u32 %v878, 7
        %v880 = vsub.s32 1, %v879
        %v881 = vrot.slane %v419, %v880
        %v882 = vmul.f32 %v477, %v881
        %v883 = vmul.f32 %v478, %v881
        %v884 = vmul.f32 %v479, %v881
        %v885 = vmul.f32 %v480, %v881
        %v886 = vmul.f32 %v481, %v881
        %v887 = vmul.f32 %v482, %v881
        %v888 = vmul.f32 %v483, %v881
        %v889 = vmul.f32 %v484, %v881
        %v890 = vmul.f32 %v485, %v881
        %v891 = vmul.f32 %v486, %v881
        %v892 = vmul.f32 %v487, %v881
        %v893 = vmul.f32 %v488, %v881
        %v894 = vmul.f32 %v489, %v881
        %v895 = vmul.f32 %v490, %v881
        %v896 = vmul.f32 %v491, %v881
        %v897 = vmul.f32 %v492, %v881
        %v898 = vmul.f32 %v493, %v881
        %v899 = vmul.f32 %v494, %v881
        %v900 = vmul.f32 %v495, %v881
        %v901 = vmul.f32 %v496, %v881
        %v902 = vmul.f32 %v497, %v881
        %v903 = vmul.f32 %v498, %v881
        %v904 = vmul.f32 %v499, %v881
        %v905 = vmul.f32 %v500, %v881
        %v906 = vadd.f32 %v854, %v882
        %v907 = vadd.f32 %v855, %v883
        %v908 = vadd.f32 %v856, %v884
        %v909 = vadd.f32 %v857, %v885
        %v910 = vadd.f32 %v858, %v886
        %v911 = vadd.f32 %v859, %v887
        %v912 = vadd.f32 %v860, %v888
        %v913 = vadd.f32 %v861, %v889
        %v914 = vadd.f32 %v862, %v890
        %v915 = vadd.f32 %v863, %v891
        %v916 = vadd.f32 %v864, %v892
        %v917 = vadd.f32 %v865, %v893
        %v918 = vadd.f32 %v866, %v894
        %v919 = vadd.f32 %v867, %v895
        %v920 = vadd.f32 %v868, %v896
        %v921 = vadd.f32 %v869, %v897
        %v922 = vadd.f32 %v870, %v898
        %v923 = vadd.f32 %v871, %v899
        %v924 = vadd.f32 %v872, %v900
        %v925 = vadd.f32 %v873, %v901
        %v926 = vadd.f32 %v874, %v902
        %v927 = vadd.f32 %v875, %v903
        %v928 = vadd.f32 %v876, %v904
        %v929 = vadd.f32 %v877, %v905
        %v930 = vlaneseq
        %v931 = vshrl.u32 %v930, 7
        %v932 = vsub.s32 1, %v931
        %v933 = vrot.slane %v420, %v932
        %v934 = vmul.f32 %v480, %v933
        %v935 = vmul.f32 %v481, %v933
        %v936 = vmul.f32 %v482, %v933
        %v937 = vmul.f32 %v483, %v933
        %v938 = vmul.f32 %v484, %v933
        %v939 = vmul.f32 %v485, %v933
        %v940 = vmul.f32 %v486, %v933
        %v941 = vmul.f32 %v487, %v933
        %v942 = vmul.f32 %v488, %v933
        %v943 = vmul.f32 %v489, %v933
        %v944 = vmul.f32 %v490, %v933
        %v945 = vmul.f32 %v491, %v933
        %v946 = vmul.f32 %v492, %v933
        %v947 = vmul.f32 %v493, %v933
        %v948 = vmul.f32 %v494, %v933
        %v949 = vmul.f32 %v495, %v933
        %v950 = vmul.f32 %v496, %v933
        %v951 = vmul.f32 %v497, %v933
        %v952 = vmul.f32 %v498, %v933
        %v953 = vmul.f32 %v499, %v933
        %v954 = vmul.f32 %v500, %v933
        %v955 = vmul.f32 %v501, %v933
        %v956 = vmul.f32 %v502, %v933
        %v957 = vmul.f32 %v503, %v933
        %v958 = vadd.f32 %v906, %v934
        %v959 = vadd.f32 %v907, %v935
        %v960 = vadd.f32 %v908, %v936
        %v961 = vadd.f32 %v909, %v937
        %v962 = vadd.f32 %v910, %v938
        %v963 = vadd.f32 %v911, %v939
        %v964 = vadd.f32 %v912, %v940
        %v965 = vadd.f32 %v913, %v941
        %v966 = vadd.f32 %v914, %v942
        %v967 = vadd.f32 %v915, %v943
        %v968 = vadd.f32 %v916, %v944
        %v969 = vadd.f32 %v917, %v945
        %v970 = vadd.f32 %v918, %v946
        %v971 = vadd.f32 %v919, %v947
        %v972 = vadd.f32 %v920, %v948
        %v973 = vadd.f32 %v921, %v949
        %v974 = vadd.f32 %v922, %v950
        %v975 = vadd.f32 %v923, %v951
        %v976 = vadd.f32 %v924, %v952
        %v977 = vadd.f32 %v925, %v953
        %v978 = vadd.f32 %v926, %v954
        %v979 = vadd.f32 %v927, %v955
        %v980 = vadd.f32 %v928, %v956
        %v981 = vadd.f32 %v929, %v957
        %v982 = vlaneseq
        %v983 = vshrl.u32 %v982, 7
        %v984 = vsub.s32 1, %v983
        %v985 = vrot.slane %v421, %v984
        %v986 = vmul.f32 %v483, %v985
        %v987 = vmul.f32 %v484, %v985
        %v988 = vmul.f32 %v485, %v985
        %v989 = vmul.f32 %v486, %v985
        %v990 = vmul.f32 %v487, %v985
        %v991 = vmul.f32 %v488, %v985
        %v992 = vmul.f32 %v489, %v985
        %v993 = vmul.f32 %v490, %v985
        %v994 = vmul.f32 %v491, %v985
        %v995 = vmul.f32 %v492, %v985
        %v996 = vmul.f32 %v493, %v985
        %v997 = vmul.f32 %v494, %v985
        %v998 = vmul.f32 %v495, %v985
        %v999 = vmul.f32 %v496, %v985
        %v1000 = vmul.f32 %v497, %v985
        %v1001 = vmul.f32 %v498, %v985
        %v1002 = vmul.f32 %v499, %v985
        %v1003 = vmul.f32 %v500, %v985
        %v1004 = vmul.f32 %v501, %v985
        %v1005 = vmul.f32 %v502, %v985
        %v1006 = vmul.f32 %v503, %v985
        %v1007 = vmul.f32 %v504, %v985
        %v1008 = vmul.f32 %v505, %v985
        %v1009 = vmul.f32 %v506, %v985
        %v1010 = vadd.f32 %v958, %v986
        %v1011 = vadd.f32 %v959, %v987
        %v1012 = vadd.f32 %v960, %v988
        %v1013 = vadd.f32 %v961, %v989
        %v1014 = vadd.f32 %v962, %v990
        %v1015 = vadd.f32 %v963, %v991
        %v1016 = vadd.f32 %v964, %v992
        %v1017 = vadd.f32 %v965, %v993
        %v1018 = vadd.f32 %v966, %v994
        %v1019 = vadd.f32 %v967, %v995
        %v1020 = vadd.f32 %v968, %v996
        %v1021 = vadd.f32 %v969, %v997
        %v1022 = vadd.f32 %v970, %v998
        %v1023 = vadd.f32 %v971, %v999
        %v1024 = vadd.f32 %v972, %v1000
        %v1025 = vadd.f32 %v973, %v1001
        %v1026 = vadd.f32 %v974, %v1002
        %v1027 = vadd.f32 %v975, %v1003
        %v1028 = vadd.f32 %v976, %v1004
        %v1029 = vadd.f32 %v977, %v1005
        %v1030 = vadd.f32 %v978, %v1006
        %v1031 = vadd.f32 %v979, %v1007
        %v1032 = vadd.f32 %v980, %v1008
        %v1033 = vadd.f32 %v981, %v1009
        %v1034 = vlaneseq
        %v1035 = vshrl.u32 %v1034, 7
        %v1036 = vsub.s32 1, %v1035
        %v1037 = vrot.slane %v422, %v1036
        %v1038 = vmul.f32 %v486, %v1037
        %v1039 = vmul.f32 %v487, %v1037
        %v1040 = vmul.f32 %v488, %v1037
        %v1041 = vmul.f32 %v489, %v1037
        %v1042 = vmul.f32 %v490, %v1037
        %v1043 = vmul.f32 %v491, %v1037
        %v1044 = vmul.f32 %v492, %v1037
        %v1045 = vmul.f32 %v493, %v1037
        %v1046 = vmul.f32 %v494, %v1037
        %v1047 = vmul.f32 %v495, %v1037
        %v1048 = vmul.f32 %v496, %v1037
        %v1049 = vmul.f32 %v497, %v1037
        %v1050 = vmul.f32 %v498, %v1037
        %v1051 = vmul.f32 %v499, %v1037
        %v1052 = vmul.f32 %v500, %v1037
        %v1053 = vmul.f32 %v501, %v1037
        %v1054 = vmul.f32 %v502, %v1037
        %v1055 = vmul.f32 %v503, %v1037
        %v1056 = vmul.f32 %v504, %v1037
        %v1057 = vmul.f32 %v505, %v1037
        %v1058 = vmul.f32 %v506, %v1037
        %v1059 = vmul.f32 %v507, %v1037
        %v1060 = vmul.f32 %v508, %v1037
        %v1061 = vmul.f32 %v509, %v1037
        %v1062 = vadd.f32 %v1010, %v1038
        %v1063 = vadd.f32 %v1011, %v1039
        %v1064 = vadd.f32 %v1012, %v1040
        %v1065 = vadd.f32 %v1013, %v1041
        %v1066 = vadd.f32 %v1014, %v1042
        %v1067 = vadd.f32 %v1015, %v1043
        %v1068 = vadd.f32 %v1016, %v1044
        %v1069 = vadd.f32 %v1017, %v1045
        %v1070 = vadd.f32 %v1018, %v1046
        %v1071 = vadd.f32 %v1019, %v1047
        %v1072 = vadd.f32 %v1020, %v1048
        %v1073 = vadd.f32 %v1021, %v1049
        %v1074 = vadd.f32 %v1022, %v1050
        %v1075 = vadd.f32 %v1023, %v1051
        %v1076 = vadd.f32 %v1024, %v1052
        %v1077 = vadd.f32 %v1025, %v1053
        %v1078 = vadd.f32 %v1026, %v1054
        %v1079 = vadd.f32 %v1027, %v1055
        %v1080 = vadd.f32 %v1028, %v1056
        %v1081 = vadd.f32 %v1029, %v1057
        %v1082 = vadd.f32 %v1030, %v1058
        %v1083 = vadd.f32 %v1031, %v1059
        %v1084 = vadd.f32 %v1032, %v1060
        %v1085 = vadd.f32 %v1033, %v1061
        %vm1110 = vcmask 1046528
        %v1111 = vrot.slane %v1062, 1
        %v1112 = vrot.slane %v1063, 1
        %v1113 = vsel %vm1110, %v1111, %v1112
        %v1114 = vrot.slane %v1064, 1
        %v1115 = vsel %vm1110, %v1112, %v1114
        %v1116 = vrot.slane %v1065, 1
        %v1117 = vrot.slane %v1066, 1
        %v1118 = vsel %vm1110, %v1116, %v1117
        %v1119 = vrot.slane %v1067, 1
        %v1120 = vsel %vm1110, %v1117, %v1119
        %v1121 = vrot.slane %v1068, 1
        %v1122 = vrot.slane %v1069, 1
        %v1123 = vsel %vm1110, %v1121, %v1122
        %v1124 = vrot.slane %v1070, 1
        %v1125 = vsel %vm1110, %v1122, %v1124
        %v1126 = vrot.slane %v1071, 1
        %v1127 = vrot.slane %v1072, 1
        %v1128 = vsel %vm1110, %v1126, %v1127
        %v1129 = vrot.slane %v1073, 1
        %v1130 = vsel %vm1110, %v1127, %v1129
        %v1131 = vrot.slane %v1074, 1
        %v1132 = vrot.slane %v1075, 1
        %v1133 = vsel %vm1110, %v1131, %v1132
        %v1134 = vrot.slane %v1076, 1
        %v1135 = vsel %vm1110, %v1132, %v1134
        %v1136 = vrot.slane %v1077, 1
        %v1137 = vrot.slane %v1078, 1
        %v1138 = vsel %vm1110, %v1136, %v1137
        %v1139 = vrot.slane %v1079, 1
        %v1140 = vsel %vm1110, %v1137, %v1139
        %v1141 = vrot.slane %v1080, 1
        %v1142 = vrot.slane %v1081, 1
        %v1143 = vsel %vm1110, %v1141, %v1142
        %v1144 = vrot.slane %v1082, 1
        %v1145 = vsel %vm1110, %v1142, %v1144
        %v1146 = vrot.slane %v1083, 1
        %v1147 = vrot.slane %v1084, 1
        %v1148 = vsel %vm1110, %v1146, %v1147
        %v1149 = vrot.slane %v1085, 1
        %v1150 = vsel %vm1110, %v1147, %v1149
        %v1167 = vadd.f32 %v730, %v1113
        %v1168 = vadd.f32 %v731, %v1115
        %v1169 = vadd.f32 %v732, %v1118
        %v1170 = vadd.f32 %v733, %v1120
        %v1171 = vadd.f32 %v734, %v1123
        %v1172 = vadd.f32 %v735, %v1125
        %v1173 = vadd.f32 %v736, %v1128
        %v1174 = vadd.f32 %v737, %v1130
        %v1175 = vadd.f32 %v738, %v1133
        %v1176 = vadd.f32 %v739, %v1135
        %v1177 = vadd.f32 %v740, %v1138
        %v1178 = vadd.f32 %v741, %v1140
        %v1179 = vadd.f32 %v742, %v1143
        %v1180 = vadd.f32 %v743, %v1145
        %v1181 = vadd.f32 %v744, %v1148
        %v1182 = vadd.f32 %v745, %v1150
        %v1183 = vlaneseq
        %v1184 = vshrl.u32 %v1183, 7
        %v1185 = vsub.s32 2, %v1184
        %v1186 = vrot.slane %v416, %v1185
        %v1187 = vmul.f32 %v468, %v1186
        %v1188 = vmul.f32 %v469, %v1186
        %v1189 = vmul.f32 %v470, %v1186
        %v1190 = vmul.f32 %v471, %v1186
        %v1191 = vmul.f32 %v472, %v1186
        %v1192 = vmul.f32 %v473, %v1186
        %v1193 = vmul.f32 %v474, %v1186
        %v1194 = vmul.f32 %v475, %v1186
        %v1195 = vmul.f32 %v476, %v1186
        %v1196 = vmul.f32 %v477, %v1186
        %v1197 = vmul.f32 %v478, %v1186
        %v1198 = vmul.f32 %v479, %v1186
        %v1199 = vmul.f32 %v480, %v1186
        %v1200 = vmul.f32 %v481, %v1186
        %v1201 = vmul.f32 %v482, %v1186
        %v1202 = vmul.f32 %v483, %v1186
        %v1203 = vmul.f32 %v484, %v1186
        %v1204 = vmul.f32 %v485, %v1186
        %v1205 = vmul.f32 %v486, %v1186
        %v1206 = vmul.f32 %v487, %v1186
        %v1207 = vmul.f32 %v488, %v1186
        %v1208 = vmul.f32 %v489, %v1186
        %v1209 = vmul.f32 %v490, %v1186
        %v1210 = vmul.f32 %v491, %v1186
        %v1211 = vlaneseq
        %v1212 = vshrl.u32 %v1211, 7
        %v1213 = vsub.s32 2, %v1212
        %v1214 = vrot.slane %v417, %v1213
        %v1215 = vmul.f32 %v471, %v1214
        %v1216 = vmul.f32 %v472, %v1214
        %v1217 = vmul.f32 %v473, %v1214
        %v1218 = vmul.f32 %v474, %v1214
        %v1219 = vmul.f32 %v475, %v1214
        %v1220 = vmul.f32 %v476, %v1214
        %v1221 = vmul.f32 %v477, %v1214
        %v1222 = vmul.f32 %v478, %v1214
        %v1223 = vmul.f32 %v479, %v1214
        %v1224 = vmul.f32 %v480, %v1214
        %v1225 = vmul.f32 %v481, %v1214
        %v1226 = vmul.f32 %v482, %v1214
        %v1227 = vmul.f32 %v483, %v1214
        %v1228 = vmul.f32 %v484, %v1214
        %v1229 = vmul.f32 %v485, %v1214
        %v1230 = vmul.f32 %v486, %v1214
        %v1231 = vmul.f32 %v487, %v1214
        %v1232 = vmul.f32 %v488, %v1214
        %v1233 = vmul.f32 %v489, %v1214
        %v1234 = vmul.f32 %v490, %v1214
        %v1235 = vmul.f32 %v491, %v1214
        %v1236 = vmul.f32 %v492, %v1214
        %v1237 = vmul.f32 %v493, %v1214
        %v1238 = vmul.f32 %v494, %v1214
        %v1239 = vadd.f32 %v1187, %v1215
        %v1240 = vadd.f32 %v1188, %v1216
        %v1241 = vadd.f32 %v1189, %v1217
        %v1242 = vadd.f32 %v1190, %v1218
        %v1243 = vadd.f32 %v1191, %v1219
        %v1244 = vadd.f32 %v1192, %v1220
        %v1245 = vadd.f32 %v1193, %v1221
        %v1246 = vadd.f32 %v1194, %v1222
        %v1247 = vadd.f32 %v1195, %v1223
        %v1248 = vadd.f32 %v1196, %v1224
        %v1249 = vadd.f32 %v1197, %v1225
        %v1250 = vadd.f32 %v1198, %v1226
        %v1251 = vadd.f32 %v1199, %v1227
        %v1252 = vadd.f32 %v1200, %v1228
        %v1253 = vadd.f32 %v1201, %v1229
        %v1254 = vadd.f32 %v1202, %v1230
        %v1255 = vadd.f32 %v1203, %v1231
        %v1256 = vadd.f32 %v1204, %v1232
        %v1257 = vadd.f32 %v1205, %v1233
        %v1258 = vadd.f32 %v1206, %v1234
        %v1259 = vadd.f32 %v1207, %v1235
        %v1260 = vadd.f32 %v1208, %v1236
        %v1261 = vadd.f32 %v1209, %v1237
        %v1262 = vadd.f32 %v1210, %v1238
        %v1263 = vlaneseq
        %v1264 = vshrl.u32 %v1263, 7
        %v1265 = vsub.s32 2, %v1264
        %v1266 = vrot.slane %v418, %v1265
        %v1267 = vmul.f32 %v474, %v1266
        %v1268 = vmul.f32 %v475, %v1266
        %v1269 = vmul.f32 %v476, %v1266
        %v1270 = vmul.f32 %v477, %v1266
        %v1271 = vmul.f32 %v478, %v1266
        %v1272 = vmul.f32 %v479, %v1266
        %v1273 = vmul.f32 %v480, %v1266
        %v1274 = vmul.f32 %v481, %v1266
        %v1275 = vmul.f32 %v482, %v1266
        %v1276 = vmul.f32 %v483, %v1266
        %v1277 = vmul.f32 %v484, %v1266
        %v1278 = vmul.f32 %v485, %v1266
        %v1279 = vmul.f32 %v486, %v1266
        %v1280 = vmul.f32 %v487, %v1266
        %v1281 = vmul.f32 %v488, %v1266
        %v1282 = vmul.f32 %v489, %v1266
        %v1283 = vmul.f32 %v490, %v1266
        %v1284 = vmul.f32 %v491, %v1266
        %v1285 = vmul.f32 %v492, %v1266
        %v1286 = vmul.f32 %v493, %v1266
        %v1287 = vmul.f32 %v494, %v1266
        %v1288 = vmul.f32 %v495, %v1266
        %v1289 = vmul.f32 %v496, %v1266
        %v1290 = vmul.f32 %v497, %v1266
        %v1291 = vadd.f32 %v1239, %v1267
        %v1292 = vadd.f32 %v1240, %v1268
        %v1293 = vadd.f32 %v1241, %v1269
        %v1294 = vadd.f32 %v1242, %v1270
        %v1295 = vadd.f32 %v1243, %v1271
        %v1296 = vadd.f32 %v1244, %v1272
        %v1297 = vadd.f32 %v1245, %v1273
        %v1298 = vadd.f32 %v1246, %v1274
        %v1299 = vadd.f32 %v1247, %v1275
        %v1300 = vadd.f32 %v1248, %v1276
        %v1301 = vadd.f32 %v1249, %v1277
        %v1302 = vadd.f32 %v1250, %v1278
        %v1303 = vadd.f32 %v1251, %v1279
        %v1304 = vadd.f32 %v1252, %v1280
        %v1305 = vadd.f32 %v1253, %v1281
        %v1306 = vadd.f32 %v1254, %v1282
        %v1307 = vadd.f32 %v1255, %v1283
        %v1308 = vadd.f32 %v1256, %v1284
        %v1309 = vadd.f32 %v1257, %v1285
        %v1310 = vadd.f32 %v1258, %v1286
        %v1311 = vadd.f32 %v1259, %v1287
        %v1312 = vadd.f32 %v1260, %v1288
        %v1313 = vadd.f32 %v1261, %v1289
        %v1314 = vadd.f32 %v1262, %v1290
        %v1315 = vlaneseq
        %v1316 = vshrl.u32 %v1315, 7
        %v1317 = vsub.s32 2, %v1316
        %v1318 = vrot.slane %v419, %v1317
        %v1319 = vmul.f32 %v477, %v1318
        %v1320 = vmul.f32 %v478, %v1318
        %v1321 = vmul.f32 %v479, %v1318
        %v1322 = vmul.f32 %v480, %v1318
        %v1323 = vmul.f32 %v481, %v1318
        %v1324 = vmul.f32 %v482, %v1318
        %v1325 = vmul.f32 %v483, %v1318
        %v1326 = vmul.f32 %v484, %v1318
        %v1327 = vmul.f32 %v485, %v1318
        %v1328 = vmul.f32 %v486, %v1318
        %v1329 = vmul.f32 %v487, %v1318
        %v1330 = vmul.f32 %v488, %v1318
        %v1331 = vmul.f32 %v489, %v1318
        %v1332 = vmul.f32 %v490, %v1318
        %v1333 = vmul.f32 %v491, %v1318
        %v1334 = vmul.f32 %v492, %v1318
        %v1335 = vmul.f32 %v493, %v1318
        %v1336 = vmul.f32 %v494, %v1318
        %v1337 = vmul.f32 %v495, %v1318
        %v1338 = vmul.f32 %v496, %v1318
        %v1339 = vmul.f32 %v497, %v1318
        %v1340 = vmul.f32 %v498, %v1318
        %v1341 = vmul.f32 %v499, %v1318
        %v1342 = vmul.f32 %v500, %v1318
        %v1343 = vadd.f32 %v1291, %v1319
        %v1344 = vadd.f32 %v1292, %v1320
        %v1345 = vadd.f32 %v1293, %v1321
        %v1346 = vadd.f32 %v1294, %v1322
        %v1347 = vadd.f32 %v1295, %v1323
        %v1348 = vadd.f32 %v1296, %v1324
        %v1349 = vadd.f32 %v1297, %v1325
        %v1350 = vadd.f32 %v1298, %v1326
        %v1351 = vadd.f32 %v1299, %v1327
        %v1352 = vadd.f32 %v1300, %v1328
        %v1353 = vadd.f32 %v1301, %v1329
        %v1354 = vadd.f32 %v1302, %v1330
        %v1355 = vadd.f32 %v1303, %v1331
        %v1356 = vadd.f32 %v1304, %v1332
        %v1357 = vadd.f32 %v1305, %v1333
        %v1358 = vadd.f32 %v1306, %v1334
        %v1359 = vadd.f32 %v1307, %v1335
        %v1360 = vadd.f32 %v1308, %v1336
        %v1361 = vadd.f32 %v1309, %v1337
        %v1362 = vadd.f32 %v1310, %v1338
        %v1363 = vadd.f32 %v1311, %v1339
        %v1364 = vadd.f32 %v1312, %v1340
        %v1365 = vadd.f32 %v1313, %v1341
        %v1366 = vadd.f32 %v1314, %v1342
        %v1367 = vlaneseq
        %v1368 = vshrl.u32 %v1367, 7
        %v1369 = vsub.s32 2, %v1368
        %v1370 = vrot.slane %v420, %v1369
        %v1371 = vmul.f32 %v480, %v1370
        %v1372 = vmul.f32 %v481, %v1370
        %v1373 = vmul.f32 %v482, %v1370
        %v1374 = vmul.f32 %v483, %v1370
        %v1375 = vmul.f32 %v484, %v1370
        %v1376 = vmul.f32 %v485, %v1370
        %v1377 = vmul.f32 %v486, %v1370
        %v1378 = vmul.f32 %v487, %v1370
        %v1379 = vmul.f32 %v488, %v1370
        %v1380 = vmul.f32 %v489, %v1370
        %v1381 = vmul.f32 %v490, %v1370
        %v1382 = vmul.f32 %v491, %v1370
        %v1383 = vmul.f32 %v492, %v1370
        %v1384 = vmul.f32 %v493, %v1370
        %v1385 = vmul.f32 %v494, %v1370
        %v1386 = vmul.f32 %v495, %v1370
        %v1387 = vmul.f32 %v496, %v1370
        %v1388 = vmul.f32 %v497, %v1370
        %v1389 = vmul.f32 %v498, %v1370
        %v1390 = vmul.f32 %v499, %v1370
        %v1391 = vmul.f32 %v500, %v1370
        %v1392 = vmul.f32 %v501, %v1370
        %v1393 = vmul.f32 %v502, %v1370
        %v1394 = vmul.f32 %v503, %v1370
        %v1395 = vadd.f32 %v1343, %v1371
        %v1396 = vadd.f32 %v1344, %v1372
        %v1397 = vadd.f32 %v1345, %v1373
        %v1398 = vadd.f32 %v1346, %v1374
        %v1399 = vadd.f32 %v1347, %v1375
        %v1400 = vadd.f32 %v1348, %v1376
        %v1401 = vadd.f32 %v1349, %v1377
        %v1402 = vadd.f32 %v1350, %v1378
        %v1403 = vadd.f32 %v1351, %v1379
        %v1404 = vadd.f32 %v1352, %v1380
        %v1405 = vadd.f32 %v1353, %v1381
        %v1406 = vadd.f32 %v1354, %v1382
        %v1407 = vadd.f32 %v1355, %v1383
        %v1408 = vadd.f32 %v1356, %v1384
        %v1409 = vadd.f32 %v1357, %v1385
        %v1410 = vadd.f32 %v1358, %v1386
        %v1411 = vadd.f32 %v1359, %v1387
        %v1412 = vadd.f32 %v1360, %v1388
        %v1413 = vadd.f32 %v1361, %v1389
        %v1414 = vadd.f32 %v1362, %v1390
        %v1415 = vadd.f32 %v1363, %v1391
        %v1416 = vadd.f32 %v1364, %v1392
        %v1417 = vadd.f32 %v1365, %v1393
        %v1418 = vadd.f32 %v1366, %v1394
        %v1419 = vlaneseq
        %v1420 = vshrl.u32 %v1419, 7
        %v1421 = vsub.s32 2, %v1420
        %v1422 = vrot.slane %v421, %v1421
        %v1423 = vmul.f32 %v483, %v1422
        %v1424 = vmul.f32 %v484, %v1422
        %v1425 = vmul.f32 %v485, %v1422
        %v1426 = vmul.f32 %v486, %v1422
        %v1427 = vmul.f32 %v487, %v1422
        %v1428 = vmul.f32 %v488, %v1422
        %v1429 = vmul.f32 %v489, %v1422
        %v1430 = vmul.f32 %v490, %v1422
        %v1431 = vmul.f32 %v491, %v1422
        %v1432 = vmul.f32 %v492, %v1422
        %v1433 = vmul.f32 %v493, %v1422
        %v1434 = vmul.f32 %v494, %v1422
        %v1435 = vmul.f32 %v495, %v1422
        %v1436 = vmul.f32 %v496, %v1422
        %v1437 = vmul.f32 %v497, %v1422
        %v1438 = vmul.f32 %v498, %v1422
        %v1439 = vmul.f32 %v499, %v1422
        %v1440 = vmul.f32 %v500, %v1422
        %v1441 = vmul.f32 %v501, %v1422
        %v1442 = vmul.f32 %v502, %v1422
        %v1443 = vmul.f32 %v503, %v1422
        %v1444 = vmul.f32 %v504, %v1422
        %v1445 = vmul.f32 %v505, %v1422
        %v1446 = vmul.f32 %v506, %v1422
        %v1447 = vadd.f32 %v1395, %v1423
        %v1448 = vadd.f32 %v1396, %v1424
        %v1449 = vadd.f32 %v1397, %v1425
        %v1450 = vadd.f32 %v1398, %v1426
        %v1451 = vadd.f32 %v1399, %v1427
        %v1452 = vadd.f32 %v1400, %v1428
        %v1453 = vadd.f32 %v1401, %v1429
        %v1454 = vadd.f32 %v1402, %v1430
        %v1455 = vadd.f32 %v1403, %v1431
        %v1456 = vadd.f32 %v1404, %v1432
        %v1457 = vadd.f32 %v1405, %v1433
        %v1458 = vadd.f32 %v1406, %v1434
        %v1459 = vadd.f32 %v1407, %v1435
        %v1460 = vadd.f32 %v1408, %v1436
        %v1461 = vadd.f32 %v1409, %v1437
        %v1462 = vadd.f32 %v1410, %v1438
        %v1463 = vadd.f32 %v1411, %v1439
        %v1464 = vadd.f32 %v1412, %v1440
        %v1465 = vadd.f32 %v1413, %v1441
        %v1466 = vadd.f32 %v1414, %v1442
        %v1467 = vadd.f32 %v1415, %v1443
        %v1468 = vadd.f32 %v1416, %v1444
        %v1469 = vadd.f32 %v1417, %v1445
        %v1470 = vadd.f32 %v1418, %v1446
        %v1471 = vlaneseq
        %v1472 = vshrl.u32 %v1471, 7
        %v1473 = vsub.s32 2, %v1472
        %v1474 = vrot.slane %v422, %v1473
        %v1475 = vmul.f32 %v486, %v1474
        %v1476 = vmul.f32 %v487, %v1474
        %v1477 = vmul.f32 %v488, %v1474
        %v1478 = vmul.f32 %v489, %v1474
        %v1479 = vmul.f32 %v490, %v1474
        %v1480 = vmul.f32 %v491, %v1474
        %v1481 = vmul.f32 %v492, %v1474
        %v1482 = vmul.f32 %v493, %v1474
        %v1483 = vmul.f32 %v494, %v1474
        %v1484 = vmul.f32 %v495, %v1474
        %v1485 = vmul.f32 %v496, %v1474
        %v1486 = vmul.f32 %v497, %v1474
        %v1487 = vmul.f32 %v498, %v1474
        %v1488 = vmul.f32 %v499, %v1474
        %v1489 = vmul.f32 %v500, %v1474
        %v1490 = vmul.f32 %v501, %v1474
        %v1491 = vmul.f32 %v502, %v1474
        %v1492 = vmul.f32 %v503, %v1474
        %v1493 = vmul.f32 %v504, %v1474
        %v1494 = vmul.f32 %v505, %v1474
        %v1495 = vmul.f32 %v506, %v1474
        %v1496 = vmul.f32 %v507, %v1474
        %v1497 = vmul.f32 %v508, %v1474
        %v1498 = vmul.f32 %v509, %v1474
        %v1499 = vadd.f32 %v1447, %v1475
        %v1500 = vadd.f32 %v1448, %v1476
        %v1501 = vadd.f32 %v1449, %v1477
        %v1502 = vadd.f32 %v1450, %v1478
        %v1503 = vadd.f32 %v1451, %v1479
        %v1504 = vadd.f32 %v1452, %v1480
        %v1505 = vadd.f32 %v1453, %v1481
        %v1506 = vadd.f32 %v1454, %v1482
        %v1507 = vadd.f32 %v1455, %v1483
        %v1508 = vadd.f32 %v1456, %v1484
        %v1509 = vadd.f32 %v1457, %v1485
        %v1510 = vadd.f32 %v1458, %v1486
        %v1511 = vadd.f32 %v1459, %v1487
        %v1512 = vadd.f32 %v1460, %v1488
        %v1513 = vadd.f32 %v1461, %v1489
        %v1514 = vadd.f32 %v1462, %v1490
        %v1515 = vadd.f32 %v1463, %v1491
        %v1516 = vadd.f32 %v1464, %v1492
        %v1517 = vadd.f32 %v1465, %v1493
        %v1518 = vadd.f32 %v1466, %v1494
        %v1519 = vadd.f32 %v1467, %v1495
        %v1520 = vadd.f32 %v1468, %v1496
        %v1521 = vadd.f32 %v1469, %v1497
        %v1522 = vadd.f32 %v1470, %v1498
        %vm1547 = vcmask 1045504
        %v1548 = vrot.slane %v1499, 2
        %v1549 = vrot.slane %v1500, 2
        %v1550 = vsel %vm1547, %v1548, %v1549
        %v1551 = vrot.slane %v1501, 2
        %v1552 = vsel %vm1547, %v1549, %v1551
        %v1553 = vrot.slane %v1502, 2
        %v1554 = vrot.slane %v1503, 2
        %v1555 = vsel %vm1547, %v1553, %v1554
        %v1556 = vrot.slane %v1504, 2
        %v1557 = vsel %vm1547, %v1554, %v1556
        %v1558 = vrot.slane %v1505, 2
        %v1559 = vrot.slane %v1506, 2
        %v1560 = vsel %vm1547, %v1558, %v1559
        %v1561 = vrot.slane %v1507, 2
        %v1562 = vsel %vm1547, %v1559, %v1561
        %v1563 = vrot.slane %v1508, 2
        %v1564 = vrot.slane %v1509, 2
        %v1565 = vsel %vm1547, %v1563, %v1564
        %v1566 = vrot.slane %v1510, 2
        %v1567 = vsel %vm1547, %v1564, %v1566
        %v1568 = vrot.slane %v1511, 2
        %v1569 = vrot.slane %v1512, 2
        %v1570 = vsel %vm1547, %v1568, %v1569
        %v1571 = vrot.slane %v1513, 2
        %v1572 = vsel %vm1547, %v1569, %v1571
        %v1573 = vrot.slane %v1514, 2
        %v1574 = vrot.slane %v1515, 2
        %v1575 = vsel %vm1547, %v1573, %v1574
        %v1576 = vrot.slane %v1516, 2
        %v1577 = vsel %vm1547, %v1574, %v1576
        %v1578 = vrot.slane %v1517, 2
        %v1579 = vrot.slane %v1518, 2
        %v1580 = vsel %vm1547, %v1578, %v1579
        %v1581 = vrot.slane %v1519, 2
        %v1582 = vsel %vm1547, %v1579, %v1581
        %v1583 = vrot.slane %v1520, 2
        %v1584 = vrot.slane %v1521, 2
        %v1585 = vsel %vm1547, %v1583, %v1584
        %v1586 = vrot.slane %v1522, 2
        %v1587 = vsel %vm1547, %v1584, %v1586
        %v1604 = vadd.f32 %v1167, %v1550
        %v1605 = vadd.f32 %v1168, %v1552
        %v1606 = vadd.f32 %v1169, %v1555
        %v1607 = vadd.f32 %v1170, %v1557
        %v1608 = vadd.f32 %v1171, %v1560
        %v1609 = vadd.f32 %v1172, %v1562
        %v1610 = vadd.f32 %v1173, %v1565
        %v1611 = vadd.f32 %v1174, %v1567
        %v1612 = vadd.f32 %v1175, %v1570
        %v1613 = vadd.f32 %v1176, %v1572
        %v1614 = vadd.f32 %v1177, %v1575
        %v1615 = vadd.f32 %v1178, %v1577
        %v1616 = vadd.f32 %v1179, %v1580
        %v1617 = vadd.f32 %v1180, %v1582
        %v1618 = vadd.f32 %v1181, %v1585
        %v1619 = vadd.f32 %v1182, %v1587
        %v1620 = vlaneseq
        %v1621 = vshrl.u32 %v1620, 7
        %v1622 = vsub.s32 3, %v1621
        %v1623 = vrot.slane %v416, %v1622
        %v1624 = vmul.f32 %v468, %v1623
        %v1625 = vmul.f32 %v469, %v1623
        %v1626 = vmul.f32 %v470, %v1623
        %v1627 = vmul.f32 %v471, %v1623
        %v1628 = vmul.f32 %v472, %v1623
        %v1629 = vmul.f32 %v473, %v1623
        %v1630 = vmul.f32 %v474, %v1623
        %v1631 = vmul.f32 %v475, %v1623
        %v1632 = vmul.f32 %v476, %v1623
        %v1633 = vmul.f32 %v477, %v1623
        %v1634 = vmul.f32 %v478, %v1623
        %v1635 = vmul.f32 %v479, %v1623
        %v1636 = vmul.f32 %v480, %v1623
        %v1637 = vmul.f32 %v481, %v1623
        %v1638 = vmul.f32 %v482, %v1623
        %v1639 = vmul.f32 %v483, %v1623
        %v1640 = vmul.f32 %v484, %v1623
        %v1641 = vmul.f32 %v485, %v1623
        %v1642 = vmul.f32 %v486, %v1623
        %v1643 = vmul.f32 %v487, %v1623
        %v1644 = vmul.f32 %v488, %v1623
        %v1645 = vmul.f32 %v489, %v1623
        %v1646 = vmul.f32 %v490, %v1623
        %v1647 = vmul.f32 %v491, %v1623
        %v1648 = vlaneseq
        %v1649 = vshrl.u32 %v1648, 7
        %v1650 = vsub.s32 3, %v1649
        %v1651 = vrot.slane %v417, %v1650
        %v1652 = vmul.f32 %v471, %v1651
        %v1653 = vmul.f32 %v472, %v1651
        %v1654 = vmul.f32 %v473, %v1651
        %v1655 = vmul.f32 %v474, %v1651
        %v1656 = vmul.f32 %v475, %v1651
        %v1657 = vmul.f32 %v476, %v1651
        %v1658 = vmul.f32 %v477, %v1651
        %v1659 = vmul.f32 %v478, %v1651
        %v1660 = vmul.f32 %v479, %v1651
        %v1661 = vmul.f32 %v480, %v1651
        %v1662 = vmul.f32 %v481, %v1651
        %v1663 = vmul.f32 %v482, %v1651
        %v1664 = vmul.f32 %v483, %v1651
        %v1665 = vmul.f32 %v484, %v1651
        %v1666 = vmul.f32 %v485, %v1651
        %v1667 = vmul.f32 %v486, %v1651
        %v1668 = vmul.f32 %v487, %v1651
        %v1669 = vmul.f32 %v488, %v1651
        %v1670 = vmul.f32 %v489, %v1651
        %v1671 = vmul.f32 %v490, %v1651
        %v1672 = vmul.f32 %v491, %v1651
        %v1673 = vmul.f32 %v492, %v1651
        %v1674 = vmul.f32 %v493, %v1651
        %v1675 = vmul.f32 %v494, %v1651
        %v1676 = vadd.f32 %v1624, %v1652
        %v1677 = vadd.f32 %v1625, %v1653
        %v1678 = vadd.f32 %v1626, %v1654
        %v1679 = vadd.f32 %v1627, %v1655
        %v1680 = vadd.f32 %v1628, %v1656
        %v1681 = vadd.f32 %v1629, %v1657
        %v1682 = vadd.f32 %v1630, %v1658
        %v1683 = vadd.f32 %v1631, %v1659
        %v1684 = vadd.f32 %v1632, %v1660
        %v1685 = vadd.f32 %v1633, %v1661
        %v1686 = vadd.f32 %v1634, %v1662
        %v1687 = vadd.f32 %v1635, %v1663
        %v1688 = vadd.f32 %v1636, %v1664
        %v1689 = vadd.f32 %v1637, %v1665
        %v1690 = vadd.f32 %v1638, %v1666
        %v1691 = vadd.f32 %v1639, %v1667
        %v1692 = vadd.f32 %v1640, %v1668
        %v1693 = vadd.f32 %v1641, %v1669
        %v1694 = vadd.f32 %v1642, %v1670
        %v1695 = vadd.f32 %v1643, %v1671
        %v1696 = vadd.f32 %v1644, %v1672
        %v1697 = vadd.f32 %v1645, %v1673
        %v1698 = vadd.f32 %v1646, %v1674
        %v1699 = vadd.f32 %v1647, %v1675
        %v1700 = vlaneseq
        %v1701 = vshrl.u32 %v1700, 7
        %v1702 = vsub.s32 3, %v1701
        %v1703 = vrot.slane %v418, %v1702
        %v1704 = vmul.f32 %v474, %v1703
        %v1705 = vmul.f32 %v475, %v1703
        %v1706 = vmul.f32 %v476, %v1703
        %v1707 = vmul.f32 %v477, %v1703
        %v1708 = vmul.f32 %v478, %v1703
        %v1709 = vmul.f32 %v479, %v1703
        %v1710 = vmul.f32 %v480, %v1703
        %v1711 = vmul.f32 %v481, %v1703
        %v1712 = vmul.f32 %v482, %v1703
        %v1713 = vmul.f32 %v483, %v1703
        %v1714 = vmul.f32 %v484, %v1703
        %v1715 = vmul.f32 %v485, %v1703
        %v1716 = vmul.f32 %v486, %v1703
        %v1717 = vmul.f32 %v487, %v1703
        %v1718 = vmul.f32 %v488, %v1703
        %v1719 = vmul.f32 %v489, %v1703
        %v1720 = vmul.f32 %v490, %v1703
        %v1721 = vmul.f32 %v491, %v1703
        %v1722 = vmul.f32 %v492, %v1703
        %v1723 = vmul.f32 %v493, %v1703
        %v1724 = vmul.f32 %v494, %v1703
        %v1725 = vmul.f32 %v495, %v1703
        %v1726 = vmul.f32 %v496, %v1703
        %v1727 = vmul.f32 %v497, %v1703
        %v1728 = vadd.f32 %v1676, %v1704
        %v1729 = vadd.f32 %v1677, %v1705
        %v1730 = vadd.f32 %v1678, %v1706
        %v1731 = vadd.f32 %v1679, %v1707
        %v1732 = vadd.f32 %v1680, %v1708
        %v1733 = vadd.f32 %v1681, %v1709
        %v1734 = vadd.f32 %v1682, %v1710
        %v1735 = vadd.f32 %v1683, %v1711
        %v1736 = vadd.f32 %v1684, %v1712
        %v1737 = vadd.f32 %v1685, %v1713
        %v1738 = vadd.f32 %v1686, %v1714
        %v1739 = vadd.f32 %v1687, %v1715
        %v1740 = vadd.f32 %v1688, %v1716
        %v1741 = vadd.f32 %v1689, %v1717
        %v1742 = vadd.f32 %v1690, %v1718
        %v1743 = vadd.f32 %v1691, %v1719
        %v1744 = vadd.f32 %v1692, %v1720
        %v1745 = vadd.f32 %v1693, %v1721
        %v1746 = vadd.f32 %v1694, %v1722
        %v1747 = vadd.f32 %v1695, %v1723
        %v1748 = vadd.f32 %v1696, %v1724
        %v1749 = vadd.f32 %v1697, %v1725
        %v1750 = vadd.f32 %v1698, %v1726
        %v1751 = vadd.f32 %v1699, %v1727
        %v1752 = vlaneseq
        %v1753 = vshrl.u32 %v1752, 7
        %v1754 = vsub.s32 3, %v1753
        %v1755 = vrot.slane %v419, %v1754
        %v1756 = vmul.f32 %v477, %v1755
        %v1757 = vmul.f32 %v478, %v1755
        %v1758 = vmul.f32 %v479, %v1755
        %v1759 = vmul.f32 %v480, %v1755
        %v1760 = vmul.f32 %v481, %v1755
        %v1761 = vmul.f32 %v482, %v1755
        %v1762 = vmul.f32 %v483, %v1755
        %v1763 = vmul.f32 %v484, %v1755
        %v1764 = vmul.f32 %v485, %v1755
        %v1765 = vmul.f32 %v486, %v1755
        %v1766 = vmul.f32 %v487, %v1755
        %v1767 = vmul.f32 %v488, %v1755
        %v1768 = vmul.f32 %v489, %v1755
        %v1769 = vmul.f32 %v490, %v1755
        %v1770 = vmul.f32 %v491, %v1755
        %v1771 = vmul.f32 %v492, %v1755
        %v1772 = vmul.f32 %v493, %v1755
        %v1773 = vmul.f32 %v494, %v1755
        %v1774 = vmul.f32 %v495, %v1755
        %v1775 = vmul.f32 %v496, %v1755
        %v1776 = vmul.f32 %v497, %v1755
        %v1777 = vmul.f32 %v498, %v1755
        %v1778 = vmul.f32 %v499, %v1755
        %v1779 = vmul.f32 %v500, %v1755
        %v1780 = vadd.f32 %v1728, %v1756
        %v1781 = vadd.f32 %v1729, %v1757
        %v1782 = vadd.f32 %v1730, %v1758
        %v1783 = vadd.f32 %v1731, %v1759
        %v1784 = vadd.f32 %v1732, %v1760
        %v1785 = vadd.f32 %v1733, %v1761
        %v1786 = vadd.f32 %v1734, %v1762
        %v1787 = vadd.f32 %v1735, %v1763
        %v1788 = vadd.f32 %v1736, %v1764
        %v1789 = vadd.f32 %v1737, %v1765
        %v1790 = vadd.f32 %v1738, %v1766
        %v1791 = vadd.f32 %v1739, %v1767
        %v1792 = vadd.f32 %v1740, %v1768
        %v1793 = vadd.f32 %v1741, %v1769
        %v1794 = vadd.f32 %v1742, %v1770
        %v1795 = vadd.f32 %v1743, %v1771
        %v1796 = vadd.f32 %v1744, %v1772
        %v1797 = vadd.f32 %v1745, %v1773
        %v1798 = vadd.f32 %v1746, %v1774
        %v1799 = vadd.f32 %v1747, %v1775
        %v1800 = vadd.f32 %v1748, %v1776
        %v1801 = vadd.f32 %v1749, %v1777
        %v1802 = vadd.f32 %v1750, %v1778
        %v1803 = vadd.f32 %v1751, %v1779
        %v1804 = vlaneseq
        %v1805 = vshrl.u32 %v1804, 7
        %v1806 = vsub.s32 3, %v1805
        %v1807 = vrot.slane %v420, %v1806
        %v1808 = vmul.f32 %v480, %v1807
        %v1809 = vmul.f32 %v481, %v1807
        %v1810 = vmul.f32 %v482, %v1807
        %v1811 = vmul.f32 %v483, %v1807
        %v1812 = vmul.f32 %v484, %v1807
        %v1813 = vmul.f32 %v485, %v1807
        %v1814 = vmul.f32 %v486, %v1807
        %v1815 = vmul.f32 %v487, %v1807
        %v1816 = vmul.f32 %v488, %v1807
        %v1817 = vmul.f32 %v489, %v1807
        %v1818 = vmul.f32 %v490, %v1807
        %v1819 = vmul.f32 %v491, %v1807
        %v1820 = vmul.f32 %v492, %v1807
        %v1821 = vmul.f32 %v493, %v1807
        %v1822 = vmul.f32 %v494, %v1807
        %v1823 = vmul.f32 %v495, %v1807
        %v1824 = vmul.f32 %v496, %v1807
        %v1825 = vmul.f32 %v497, %v1807
        %v1826 = vmul.f32 %v498, %v1807
        %v1827 = vmul.f32 %v499, %v1807
        %v1828 = vmul.f32 %v500, %v1807
        %v1829 = vmul.f32 %v501, %v1807
        %v1830 = vmul.f32 %v502, %v1807
        %v1831 = vmul.f32 %v503, %v1807
        %v1832 = vadd.f32 %v1780, %v1808
        %v1833 = vadd.f32 %v1781, %v1809
        %v1834 = vadd.f32 %v1782, %v1810
        %v1835 = vadd.f32 %v1783, %v1811
        %v1836 = vadd.f32 %v1784, %v1812
        %v1837 = vadd.f32 %v1785, %v1813
        %v1838 = vadd.f32 %v1786, %v1814
        %v1839 = vadd.f32 %v1787, %v1815
        %v1840 = vadd.f32 %v1788, %v1816
        %v1841 = vadd.f32 %v1789, %v1817
        %v1842 = vadd.f32 %v1790, %v1818
        %v1843 = vadd.f32 %v1791, %v1819
        %v1844 = vadd.f32 %v1792, %v1820
        %v1845 = vadd.f32 %v1793, %v1821
        %v1846 = vadd.f32 %v1794, %v1822
        %v1847 = vadd.f32 %v1795, %v1823
        %v1848 = vadd.f32 %v1796, %v1824
        %v1849 = vadd.f32 %v1797, %v1825
        %v1850 = vadd.f32 %v1798, %v1826
        %v1851 = vadd.f32 %v1799, %v1827
        %v1852 = vadd.f32 %v1800, %v1828
        %v1853 = vadd.f32 %v1801, %v1829
        %v1854 = vadd.f32 %v1802, %v1830
        %v1855 = vadd.f32 %v1803, %v1831
        %v1856 = vlaneseq
        %v1857 = vshrl.u32 %v1856, 7
        %v1858 = vsub.s32 3, %v1857
        %v1859 = vrot.slane %v421, %v1858
        %v1860 = vmul.f32 %v483, %v1859
        %v1861 = vmul.f32 %v484, %v1859
        %v1862 = vmul.f32 %v485, %v1859
        %v1863 = vmul.f32 %v486, %v1859
        %v1864 = vmul.f32 %v487, %v1859
        %v1865 = vmul.f32 %v488, %v1859
        %v1866 = vmul.f32 %v489, %v1859
        %v1867 = vmul.f32 %v490, %v1859
        %v1868 = vmul.f32 %v491, %v1859
        %v1869 = vmul.f32 %v492, %v1859
        %v1870 = vmul.f32 %v493, %v1859
        %v1871 = vmul.f32 %v494, %v1859
        %v1872 = vmul.f32 %v495, %v1859
        %v1873 = vmul.f32 %v496, %v1859
        %v1874 = vmul.f32 %v497, %v1859
        %v1875 = vmul.f32 %v498, %v1859
        %v1876 = vmul.f32 %v499, %v1859
        %v1877 = vmul.f32 %v500, %v1859
        %v1878 = vmul.f32 %v501, %v1859
        %v1879 = vmul.f32 %v502, %v1859
        %v1880 = vmul.f32 %v503, %v1859
        %v1881 = vmul.f32 %v504, %v1859
        %v1882 = vmul.f32 %v505, %v1859
        %v1883 = vmul.f32 %v506, %v1859
        %v1884 = vadd.f32 %v1832, %v1860
        %v1885 = vadd.f32 %v1833, %v1861
        %v1886 = vadd.f32 %v1834, %v1862
        %v1887 = vadd.f32 %v1835, %v1863
        %v1888 = vadd.f32 %v1836, %v1864
        %v1889 = vadd.f32 %v1837, %v1865
        %v1890 = vadd.f32 %v1838, %v1866
        %v1891 = vadd.f32 %v1839, %v1867
        %v1892 = vadd.f32 %v1840, %v1868
        %v1893 = vadd.f32 %v1841, %v1869
        %v1894 = vadd.f32 %v1842, %v1870
        %v1895 = vadd.f32 %v1843, %v1871
        %v1896 = vadd.f32 %v1844, %v1872
        %v1897 = vadd.f32 %v1845, %v1873
        %v1898 = vadd.f32 %v1846, %v1874
        %v1899 = vadd.f32 %v1847, %v1875
        %v1900 = vadd.f32 %v1848, %v1876
        %v1901 = vadd.f32 %v1849, %v1877
        %v1902 = vadd.f32 %v1850, %v1878
        %v1903 = vadd.f32 %v1851, %v1879
        %v1904 = vadd.f32 %v1852, %v1880
        %v1905 = vadd.f32 %v1853, %v1881
        %v1906 = vadd.f32 %v1854, %v1882
        %v1907 = vadd.f32 %v1855, %v1883
        %v1908 = vlaneseq
        %v1909 = vshrl.u32 %v1908, 7
        %v1910 = vsub.s32 3, %v1909
        %v1911 = vrot.slane %v422, %v1910
        %v1912 = vmul.f32 %v486, %v1911
        %v1913 = vmul.f32 %v487, %v1911
        %v1914 = vmul.f32 %v488, %v1911
        %v1915 = vmul.f32 %v489, %v1911
        %v1916 = vmul.f32 %v490, %v1911
        %v1917 = vmul.f32 %v491, %v1911
        %v1918 = vmul.f32 %v492, %v1911
        %v1919 = vmul.f32 %v493, %v1911
        %v1920 = vmul.f32 %v494, %v1911
        %v1921 = vmul.f32 %v495, %v1911
        %v1922 = vmul.f32 %v496, %v1911
        %v1923 = vmul.f32 %v497, %v1911
        %v1924 = vmul.f32 %v498, %v1911
        %v1925 = vmul.f32 %v499, %v1911
        %v1926 = vmul.f32 %v500, %v1911
        %v1927 = vmul.f32 %v501, %v1911
        %v1928 = vmul.f32 %v502, %v1911
        %v1929 = vmul.f32 %v503, %v1911
        %v1930 = vmul.f32 %v504, %v1911
        %v1931 = vmul.f32 %v505, %v1911
        %v1932 = vmul.f32 %v506, %v1911
        %v1933 = vmul.f32 %v507, %v1911
        %v1934 = vmul.f32 %v508, %v1911
        %v1935 = vmul.f32 %v509, %v1911
        %v1936 = vadd.f32 %v1884, %v1912
        %v1937 = vadd.f32 %v1885, %v1913
        %v1938 = vadd.f32 %v1886, %v1914
        %v1939 = vadd.f32 %v1887, %v1915
        %v1940 = vadd.f32 %v1888, %v1916
        %v1941 = vadd.f32 %v1889, %v1917
        %v1942 = vadd.f32 %v1890, %v1918
        %v1943 = vadd.f32 %v1891, %v1919
        %v1944 = vadd.f32 %v1892, %v1920
        %v1945 = vadd.f32 %v1893, %v1921
        %v1946 = vadd.f32 %v1894, %v1922
        %v1947 = vadd.f32 %v1895, %v1923
        %v1948 = vadd.f32 %v1896, %v1924
        %v1949 = vadd.f32 %v1897, %v1925
        %v1950 = vadd.f32 %v1898, %v1926
        %v1951 = vadd.f32 %v1899, %v1927
        %v1952 = vadd.f32 %v1900, %v1928
        %v1953 = vadd.f32 %v1901, %v1929
        %v1954 = vadd.f32 %v1902, %v1930
        %v1955 = vadd.f32 %v1903, %v1931
        %v1956 = vadd.f32 %v1904, %v1932
        %v1957 = vadd.f32 %v1905, %v1933
        %v1958 = vadd.f32 %v1906, %v1934
        %v1959 = vadd.f32 %v1907, %v1935
        %vm1984 = vcmask 1044480
        %v1985 = vrot.slane %v1936, 3
        %v1986 = vrot.slane %v1937, 3
        %v1987 = vsel %vm1984, %v1985, %v1986
        %v1988 = vrot.slane %v1938, 3
        %v1989 = vsel %vm1984, %v1986, %v1988
        %v1990 = vrot.slane %v1939, 3
        %v1991 = vrot.slane %v1940, 3
        %v1992 = vsel %vm1984, %v1990, %v1991
        %v1993 = vrot.slane %v1941, 3
        %v1994 = vsel %vm1984, %v1991, %v1993
        %v1995 = vrot.slane %v1942, 3
        %v1996 = vrot.slane %v1943, 3
        %v1997 = vsel %vm1984, %v1995, %v1996
        %v1998 = vrot.slane %v1944, 3
        %v1999 = vsel %vm1984, %v1996, %v1998
        %v2000 = vrot.slane %v1945, 3
        %v2001 = vrot.slane %v1946, 3
        %v2002 = vsel %vm1984, %v2000, %v2001
        %v2003 = vrot.slane %v1947, 3
        %v2004 = vsel %vm1984, %v2001, %v2003
        %v2005 = vrot.slane %v1948, 3
        %v2006 = vrot.slane %v1949, 3
        %v2007 = vsel %vm1984, %v2005, %v2006
        %v2008 = vrot.slane %v1950, 3
        %v2009 = vsel %vm1984, %v2006, %v2008
        %v2010 = vrot.slane %v1951, 3
        %v2011 = vrot.slane %v1952, 3
        %v2012 = vsel %vm1984, %v2010, %v2011
        %v2013 = vrot.slane %v1953, 3
        %v2014 = vsel %vm1984, %v2011, %v2013
        %v2015 = vrot.slane %v1954, 3
        %v2016 = vrot.slane %v1955, 3
        %v2017 = vsel %vm1984, %v2015, %v2016
        %v2018 = vrot.slane %v1956, 3
        %v2019 = vsel %vm1984, %v2016, %v2018
        %v2020 = vrot.slane %v1957, 3
        %v2021 = vrot.slane %v1958, 3
        %v2022 = vsel %vm1984, %v2020, %v2021
        %v2023 = vrot.slane %v1959, 3
        %v2024 = vsel %vm1984, %v2021, %v2023
        %v2041 = vadd.f32 %v1604, %v1987
        %v2042 = vadd.f32 %v1605, %v1989
        %v2043 = vadd.f32 %v1606, %v1992
        %v2044 = vadd.f32 %v1607, %v1994
        %v2045 = vadd.f32 %v1608, %v1997
        %v2046 = vadd.f32 %v1609, %v1999
        %v2047 = vadd.f32 %v1610, %v2002
        %v2048 = vadd.f32 %v1611, %v2004
        %v2049 = vadd.f32 %v1612, %v2007
        %v2050 = vadd.f32 %v1613, %v2009
        %v2051 = vadd.f32 %v1614, %v2012
        %v2052 = vadd.f32 %v1615, %v2014
        %v2053 = vadd.f32 %v1616, %v2017
        %v2054 = vadd.f32 %v1617, %v2019
        %v2055 = vadd.f32 %v1618, %v2022
        %v2056 = vadd.f32 %v1619, %v2024
        %v2057 = vlaneseq
        %v2058 = vshrl.u32 %v2057, 7
        %v2059 = vsub.s32 4, %v2058
        %v2060 = vrot.slane %v416, %v2059
        %v2061 = vmul.f32 %v468, %v2060
        %v2062 = vmul.f32 %v469, %v2060
        %v2063 = vmul.f32 %v470, %v2060
        %v2064 = vmul.f32 %v471, %v2060
        %v2065 = vmul.f32 %v472, %v2060
        %v2066 = vmul.f32 %v473, %v2060
        %v2067 = vmul.f32 %v474, %v2060
        %v2068 = vmul.f32 %v475, %v2060
        %v2069 = vmul.f32 %v476, %v2060
        %v2070 = vmul.f32 %v477, %v2060
        %v2071 = vmul.f32 %v478, %v2060
        %v2072 = vmul.f32 %v479, %v2060
        %v2073 = vmul.f32 %v480, %v2060
        %v2074 = vmul.f32 %v481, %v2060
        %v2075 = vmul.f32 %v482, %v2060
        %v2076 = vmul.f32 %v483, %v2060
        %v2077 = vmul.f32 %v484, %v2060
        %v2078 = vmul.f32 %v485, %v2060
        %v2079 = vmul.f32 %v486, %v2060
        %v2080 = vmul.f32 %v487, %v2060
        %v2081 = vmul.f32 %v488, %v2060
        %v2082 = vmul.f32 %v489, %v2060
        %v2083 = vmul.f32 %v490, %v2060
        %v2084 = vmul.f32 %v491, %v2060
        %v2085 = vlaneseq
        %v2086 = vshrl.u32 %v2085, 7
        %v2087 = vsub.s32 4, %v2086
        %v2088 = vrot.slane %v417, %v2087
        %v2089 = vmul.f32 %v471, %v2088
        %v2090 = vmul.f32 %v472, %v2088
        %v2091 = vmul.f32 %v473, %v2088
        %v2092 = vmul.f32 %v474, %v2088
        %v2093 = vmul.f32 %v475, %v2088
        %v2094 = vmul.f32 %v476, %v2088
        %v2095 = vmul.f32 %v477, %v2088
        %v2096 = vmul.f32 %v478, %v2088
        %v2097 = vmul.f32 %v479, %v2088
        %v2098 = vmul.f32 %v480, %v2088
        %v2099 = vmul.f32 %v481, %v2088
        %v2100 = vmul.f32 %v482, %v2088
        %v2101 = vmul.f32 %v483, %v2088
        %v2102 = vmul.f32 %v484, %v2088
        %v2103 = vmul.f32 %v485, %v2088
        %v2104 = vmul.f32 %v486, %v2088
        %v2105 = vmul.f32 %v487, %v2088
        %v2106 = vmul.f32 %v488, %v2088
        %v2107 = vmul.f32 %v489, %v2088
        %v2108 = vmul.f32 %v490, %v2088
        %v2109 = vmul.f32 %v491, %v2088
        %v2110 = vmul.f32 %v492, %v2088
        %v2111 = vmul.f32 %v493, %v2088
        %v2112 = vmul.f32 %v494, %v2088
        %v2113 = vadd.f32 %v2061, %v2089
        %v2114 = vadd.f32 %v2062, %v2090
        %v2115 = vadd.f32 %v2063, %v2091
        %v2116 = vadd.f32 %v2064, %v2092
        %v2117 = vadd.f32 %v2065, %v2093
        %v2118 = vadd.f32 %v2066, %v2094
        %v2119 = vadd.f32 %v2067, %v2095
        %v2120 = vadd.f32 %v2068, %v2096
        %v2121 = vadd.f32 %v2069, %v2097
        %v2122 = vadd.f32 %v2070, %v2098
        %v2123 = vadd.f32 %v2071, %v2099
        %v2124 = vadd.f32 %v2072, %v2100
        %v2125 = vadd.f32 %v2073, %v2101
        %v2126 = vadd.f32 %v2074, %v2102
        %v2127 = vadd.f32 %v2075, %v2103
        %v2128 = vadd.f32 %v2076, %v2104
        %v2129 = vadd.f32 %v2077, %v2105
        %v2130 = vadd.f32 %v2078, %v2106
        %v2131 = vadd.f32 %v2079, %v2107
        %v2132 = vadd.f32 %v2080, %v2108
        %v2133 = vadd.f32 %v2081, %v2109
        %v2134 = vadd.f32 %v2082, %v2110
        %v2135 = vadd.f32 %v2083, %v2111
        %v2136 = vadd.f32 %v2084, %v2112
        %v2137 = vlaneseq
        %v2138 = vshrl.u32 %v2137, 7
        %v2139 = vsub.s32 4, %v2138
        %v2140 = vrot.slane %v418, %v2139
        %v2141 = vmul.f32 %v474, %v2140
        %v2142 = vmul.f32 %v475, %v2140
        %v2143 = vmul.f32 %v476, %v2140
        %v2144 = vmul.f32 %v477, %v2140
        %v2145 = vmul.f32 %v478, %v2140
        %v2146 = vmul.f32 %v479, %v2140
        %v2147 = vmul.f32 %v480, %v2140
        %v2148 = vmul.f32 %v481, %v2140
        %v2149 = vmul.f32 %v482, %v2140
        %v2150 = vmul.f32 %v483, %v2140
        %v2151 = vmul.f32 %v484, %v2140
        %v2152 = vmul.f32 %v485, %v2140
        %v2153 = vmul.f32 %v486, %v2140
        %v2154 = vmul.f32 %v487, %v2140
        %v2155 = vmul.f32 %v488, %v2140
        %v2156 = vmul.f32 %v489, %v2140
        %v2157 = vmul.f32 %v490, %v2140
        %v2158 = vmul.f32 %v491, %v2140
        %v2159 = vmul.f32 %v492, %v2140
        %v2160 = vmul.f32 %v493, %v2140
        %v2161 = vmul.f32 %v494, %v2140
        %v2162 = vmul.f32 %v495, %v2140
        %v2163 = vmul.f32 %v496, %v2140
        %v2164 = vmul.f32 %v497, %v2140
        %v2165 = vadd.f32 %v2113, %v2141
        %v2166 = vadd.f32 %v2114, %v2142
        %v2167 = vadd.f32 %v2115, %v2143
        %v2168 = vadd.f32 %v2116, %v2144
        %v2169 = vadd.f32 %v2117, %v2145
        %v2170 = vadd.f32 %v2118, %v2146
        %v2171 = vadd.f32 %v2119, %v2147
        %v2172 = vadd.f32 %v2120, %v2148
        %v2173 = vadd.f32 %v2121, %v2149
        %v2174 = vadd.f32 %v2122, %v2150
        %v2175 = vadd.f32 %v2123, %v2151
        %v2176 = vadd.f32 %v2124, %v2152
        %v2177 = vadd.f32 %v2125, %v2153
        %v2178 = vadd.f32 %v2126, %v2154
        %v2179 = vadd.f32 %v2127, %v2155
        %v2180 = vadd.f32 %v2128, %v2156
        %v2181 = vadd.f32 %v2129, %v2157
        %v2182 = vadd.f32 %v2130, %v2158
        %v2183 = vadd.f32 %v2131, %v2159
        %v2184 = vadd.f32 %v2132, %v2160
        %v2185 = vadd.f32 %v2133, %v2161
        %v2186 = vadd.f32 %v2134, %v2162
        %v2187 = vadd.f32 %v2135, %v2163
        %v2188 = vadd.f32 %v2136, %v2164
        %v2189 = vlaneseq
        %v2190 = vshrl.u32 %v2189, 7
        %v2191 = vsub.s32 4, %v2190
        %v2192 = vrot.slane %v419, %v2191
        %v2193 = vmul.f32 %v477, %v2192
        %v2194 = vmul.f32 %v478, %v2192
        %v2195 = vmul.f32 %v479, %v2192
        %v2196 = vmul.f32 %v480, %v2192
        %v2197 = vmul.f32 %v481, %v2192
        %v2198 = vmul.f32 %v482, %v2192
        %v2199 = vmul.f32 %v483, %v2192
        %v2200 = vmul.f32 %v484, %v2192
        %v2201 = vmul.f32 %v485, %v2192
        %v2202 = vmul.f32 %v486, %v2192
        %v2203 = vmul.f32 %v487, %v2192
        %v2204 = vmul.f32 %v488, %v2192
        %v2205 = vmul.f32 %v489, %v2192
        %v2206 = vmul.f32 %v490, %v2192
        %v2207 = vmul.f32 %v491, %v2192
        %v2208 = vmul.f32 %v492, %v2192
        %v2209 = vmul.f32 %v493, %v2192
        %v2210 = vmul.f32 %v494, %v2192
        %v2211 = vmul.f32 %v495, %v2192
        %v2212 = vmul.f32 %v496, %v2192
        %v2213 = vmul.f32 %v497, %v2192
        %v2214 = vmul.f32 %v498, %v2192
        %v2215 = vmul.f32 %v499, %v2192
        %v2216 = vmul.f32 %v500, %v2192
        %v2217 = vadd.f32 %v2165, %v2193
        %v2218 = vadd.f32 %v2166, %v2194
        %v2219 = vadd.f32 %v2167, %v2195
        %v2220 = vadd.f32 %v2168, %v2196
        %v2221 = vadd.f32 %v2169, %v2197
        %v2222 = vadd.f32 %v2170, %v2198
        %v2223 = vadd.f32 %v2171, %v2199
        %v2224 = vadd.f32 %v2172, %v2200
        %v2225 = vadd.f32 %v2173, %v2201
        %v2226 = vadd.f32 %v2174, %v2202
        %v2227 = vadd.f32 %v2175, %v2203
        %v2228 = vadd.f32 %v2176, %v2204
        %v2229 = vadd.f32 %v2177, %v2205
        %v2230 = vadd.f32 %v2178, %v2206
        %v2231 = vadd.f32 %v2179, %v2207
        %v2232 = vadd.f32 %v2180, %v2208
        %v2233 = vadd.f32 %v2181, %v2209
        %v2234 = vadd.f32 %v2182, %v2210
        %v2235 = vadd.f32 %v2183, %v2211
        %v2236 = vadd.f32 %v2184, %v2212
        %v2237 = vadd.f32 %v2185, %v2213
        %v2238 = vadd.f32 %v2186, %v2214
        %v2239 = vadd.f32 %v2187, %v2215
        %v2240 = vadd.f32 %v2188, %v2216
        %v2241 = vlaneseq
        %v2242 = vshrl.u32 %v2241, 7
        %v2243 = vsub.s32 4, %v2242
        %v2244 = vrot.slane %v420, %v2243
        %v2245 = vmul.f32 %v480, %v2244
        %v2246 = vmul.f32 %v481, %v2244
        %v2247 = vmul.f32 %v482, %v2244
        %v2248 = vmul.f32 %v483, %v2244
        %v2249 = vmul.f32 %v484, %v2244
        %v2250 = vmul.f32 %v485, %v2244
        %v2251 = vmul.f32 %v486, %v2244
        %v2252 = vmul.f32 %v487, %v2244
        %v2253 = vmul.f32 %v488, %v2244
        %v2254 = vmul.f32 %v489, %v2244
        %v2255 = vmul.f32 %v490, %v2244
        %v2256 = vmul.f32 %v491, %v2244
        %v2257 = vmul.f32 %v492, %v2244
        %v2258 = vmul.f32 %v493, %v2244
        %v2259 = vmul.f32 %v494, %v2244
        %v2260 = vmul.f32 %v495, %v2244
        %v2261 = vmul.f32 %v496, %v2244
        %v2262 = vmul.f32 %v497, %v2244
        %v2263 = vmul.f32 %v498, %v2244
        %v2264 = vmul.f32 %v499, %v2244
        %v2265 = vmul.f32 %v500, %v2244
        %v2266 = vmul.f32 %v501, %v2244
        %v2267 = vmul.f32 %v502, %v2244
        %v2268 = vmul.f32 %v503, %v2244
        %v2269 = vadd.f32 %v2217, %v2245
        %v2270 = vadd.f32 %v2218, %v2246
        %v2271 = vadd.f32 %v2219, %v2247
        %v2272 = vadd.f32 %v2220, %v2248
        %v2273 = vadd.f32 %v2221, %v2249
        %v2274 = vadd.f32 %v2222, %v2250
        %v2275 = vadd.f32 %v2223, %v2251
        %v2276 = vadd.f32 %v2224, %v2252
        %v2277 = vadd.f32 %v2225, %v2253
        %v2278 = vadd.f32 %v2226, %v2254
        %v2279 = vadd.f32 %v2227, %v2255
        %v2280 = vadd.f32 %v2228, %v2256
        %v2281 = vadd.f32 %v2229, %v2257
        %v2282 = vadd.f32 %v2230, %v2258
        %v2283 = vadd.f32 %v2231, %v2259
        %v2284 = vadd.f32 %v2232, %v2260
        %v2285 = vadd.f32 %v2233, %v2261
        %v2286 = vadd.f32 %v2234, %v2262
        %v2287 = vadd.f32 %v2235, %v2263
        %v2288 = vadd.f32 %v2236, %v2264
        %v2289 = vadd.f32 %v2237, %v2265
        %v2290 = vadd.f32 %v2238, %v2266
        %v2291 = vadd.f32 %v2239, %v2267
        %v2292 = vadd.f32 %v2240, %v2268
        %v2293 = vlaneseq
        %v2294 = vshrl.u32 %v2293, 7
        %v2295 = vsub.s32 4, %v2294
        %v2296 = vrot.slane %v421, %v2295
        %v2297 = vmul.f32 %v483, %v2296
        %v2298 = vmul.f32 %v484, %v2296
        %v2299 = vmul.f32 %v485, %v2296
        %v2300 = vmul.f32 %v486, %v2296
        %v2301 = vmul.f32 %v487, %v2296
        %v2302 = vmul.f32 %v488, %v2296
        %v2303 = vmul.f32 %v489, %v2296
        %v2304 = vmul.f32 %v490, %v2296
        %v2305 = vmul.f32 %v491, %v2296
        %v2306 = vmul.f32 %v492, %v2296
        %v2307 = vmul.f32 %v493, %v2296
        %v2308 = vmul.f32 %v494, %v2296
        %v2309 = vmul.f32 %v495, %v2296
        %v2310 = vmul.f32 %v496, %v2296
        %v2311 = vmul.f32 %v497, %v2296
        %v2312 = vmul.f32 %v498, %v2296
        %v2313 = vmul.f32 %v499, %v2296
        %v2314 = vmul.f32 %v500, %v2296
        %v2315 = vmul.f32 %v501, %v2296
        %v2316 = vmul.f32 %v502, %v2296
        %v2317 = vmul.f32 %v503, %v2296
        %v2318 = vmul.f32 %v504, %v2296
        %v2319 = vmul.f32 %v505, %v2296
        %v2320 = vmul.f32 %v506, %v2296
        %v2321 = vadd.f32 %v2269, %v2297
        %v2322 = vadd.f32 %v2270, %v2298
        %v2323 = vadd.f32 %v2271, %v2299
        %v2324 = vadd.f32 %v2272, %v2300
        %v2325 = vadd.f32 %v2273, %v2301
        %v2326 = vadd.f32 %v2274, %v2302
        %v2327 = vadd.f32 %v2275, %v2303
        %v2328 = vadd.f32 %v2276, %v2304
        %v2329 = vadd.f32 %v2277, %v2305
        %v2330 = vadd.f32 %v2278, %v2306
        %v2331 = vadd.f32 %v2279, %v2307
        %v2332 = vadd.f32 %v2280, %v2308
        %v2333 = vadd.f32 %v2281, %v2309
        %v2334 = vadd.f32 %v2282, %v2310
        %v2335 = vadd.f32 %v2283, %v2311
        %v2336 = vadd.f32 %v2284, %v2312
        %v2337 = vadd.f32 %v2285, %v2313
        %v2338 = vadd.f32 %v2286, %v2314
        %v2339 = vadd.f32 %v2287, %v2315
        %v2340 = vadd.f32 %v2288, %v2316
        %v2341 = vadd.f32 %v2289, %v2317
        %v2342 = vadd.f32 %v2290, %v2318
        %v2343 = vadd.f32 %v2291, %v2319
        %v2344 = vadd.f32 %v2292, %v2320
        %v2345 = vlaneseq
        %v2346 = vshrl.u32 %v2345, 7
        %v2347 = vsub.s32 4, %v2346
        %v2348 = vrot.slane %v422, %v2347
        %v2349 = vmul.f32 %v486, %v2348
        %v2350 = vmul.f32 %v487, %v2348
        %v2351 = vmul.f32 %v488, %v2348
        %v2352 = vmul.f32 %v489, %v2348
        %v2353 = vmul.f32 %v490, %v2348
        %v2354 = vmul.f32 %v491, %v2348
        %v2355 = vmul.f32 %v492, %v2348
        %v2356 = vmul.f32 %v493, %v2348
        %v2357 = vmul.f32 %v494, %v2348
        %v2358 = vmul.f32 %v495, %v2348
        %v2359 = vmul.f32 %v496, %v2348
        %v2360 = vmul.f32 %v497, %v2348
        %v2361 = vmul.f32 %v498, %v2348
        %v2362 = vmul.f32 %v499, %v2348
        %v2363 = vmul.f32 %v500, %v2348
        %v2364 = vmul.f32 %v501, %v2348
        %v2365 = vmul.f32 %v502, %v2348
        %v2366 = vmul.f32 %v503, %v2348
        %v2367 = vmul.f32 %v504, %v2348
        %v2368 = vmul.f32 %v505, %v2348
        %v2369 = vmul.f32 %v506, %v2348
        %v2370 = vmul.f32 %v507, %v2348
        %v2371 = vmul.f32 %v508, %v2348
        %v2372 = vmul.f32 %v509, %v2348
        %v2373 = vadd.f32 %v2321, %v2349
        %v2374 = vadd.f32 %v2322, %v2350
        %v2375 = vadd.f32 %v2323, %v2351
        %v2376 = vadd.f32 %v2324, %v2352
        %v2377 = vadd.f32 %v2325, %v2353
        %v2378 = vadd.f32 %v2326, %v2354
        %v2379 = vadd.f32 %v2327, %v2355
        %v2380 = vadd.f32 %v2328, %v2356
        %v2381 = vadd.f32 %v2329, %v2357
        %v2382 = vadd.f32 %v2330, %v2358
        %v2383 = vadd.f32 %v2331, %v2359
        %v2384 = vadd.f32 %v2332, %v2360
        %v2385 = vadd.f32 %v2333, %v2361
        %v2386 = vadd.f32 %v2334, %v2362
        %v2387 = vadd.f32 %v2335, %v2363
        %v2388 = vadd.f32 %v2336, %v2364
        %v2389 = vadd.f32 %v2337, %v2365
        %v2390 = vadd.f32 %v2338, %v2366
        %v2391 = vadd.f32 %v2339, %v2367
        %v2392 = vadd.f32 %v2340, %v2368
        %v2393 = vadd.f32 %v2341, %v2369
        %v2394 = vadd.f32 %v2342, %v2370
        %v2395 = vadd.f32 %v2343, %v2371
        %v2396 = vadd.f32 %v2344, %v2372
        %vm2421 = vcmask 1043456
        %v2422 = vrot.slane %v2373, 4
        %v2423 = vrot.slane %v2374, 4
        %v2424 = vsel %vm2421, %v2422, %v2423
        %v2425 = vrot.slane %v2375, 4
        %v2426 = vsel %vm2421, %v2423, %v2425
        %v2427 = vrot.slane %v2376, 4
        %v2428 = vrot.slane %v2377, 4
        %v2429 = vsel %vm2421, %v2427, %v2428
        %v2430 = vrot.slane %v2378, 4
        %v2431 = vsel %vm2421, %v2428, %v2430
        %v2432 = vrot.slane %v2379, 4
        %v2433 = vrot.slane %v2380, 4
        %v2434 = vsel %vm2421, %v2432, %v2433
        %v2435 = vrot.slane %v2381, 4
        %v2436 = vsel %vm2421, %v2433, %v2435
        %v2437 = vrot.slane %v2382, 4
        %v2438 = vrot.slane %v2383, 4
        %v2439 = vsel %vm2421, %v2437, %v2438
        %v2440 = vrot.slane %v2384, 4
        %v2441 = vsel %vm2421, %v2438, %v2440
        %v2442 = vrot.slane %v2385, 4
        %v2443 = vrot.slane %v2386, 4
        %v2444 = vsel %vm2421, %v2442, %v2443
        %v2445 = vrot.slane %v2387, 4
        %v2446 = vsel %vm2421, %v2443, %v2445
        %v2447 = vrot.slane %v2388, 4
        %v2448 = vrot.slane %v2389, 4
        %v2449 = vsel %vm2421, %v2447, %v2448
        %v2450 = vrot.slane %v2390, 4
        %v2451 = vsel %vm2421, %v2448, %v2450
        %v2452 = vrot.slane %v2391, 4
        %v2453 = vrot.slane %v2392, 4
        %v2454 = vsel %vm2421, %v2452, %v2453
        %v2455 = vrot.slane %v2393, 4
        %v2456 = vsel %vm2421, %v2453, %v2455
        %v2457 = vrot.slane %v2394, 4
        %v2458 = vrot.slane %v2395, 4
        %v2459 = vsel %vm2421, %v2457, %v2458
        %v2460 = vrot.slane %v2396, 4
        %v2461 = vsel %vm2421, %v2458, %v2460
        %v2478 = vadd.f32 %v2041, %v2424
        %v2479 = vadd.f32 %v2042, %v2426
        %v2480 = vadd.f32 %v2043, %v2429
        %v2481 = vadd.f32 %v2044, %v2431
        %v2482 = vadd.f32 %v2045, %v2434
        %v2483 = vadd.f32 %v2046, %v2436
        %v2484 = vadd.f32 %v2047, %v2439
        %v2485 = vadd.f32 %v2048, %v2441
        %v2486 = vadd.f32 %v2049, %v2444
        %v2487 = vadd.f32 %v2050, %v2446
        %v2488 = vadd.f32 %v2051, %v2449
        %v2489 = vadd.f32 %v2052, %v2451
        %v2490 = vadd.f32 %v2053, %v2454
        %v2491 = vadd.f32 %v2054, %v2456
        %v2492 = vadd.f32 %v2055, %v2459
        %v2493 = vadd.f32 %v2056, %v2461
        %v2494 = vlaneseq
        %v2495 = vshrl.u32 %v2494, 7
        %v2496 = vsub.s32 5, %v2495
        %v2497 = vrot.slane %v416, %v2496
        %v2498 = vmul.f32 %v468, %v2497
        %v2499 = vmul.f32 %v469, %v2497
        %v2500 = vmul.f32 %v470, %v2497
        %v2501 = vmul.f32 %v471, %v2497
        %v2502 = vmul.f32 %v472, %v2497
        %v2503 = vmul.f32 %v473, %v2497
        %v2504 = vmul.f32 %v474, %v2497
        %v2505 = vmul.f32 %v475, %v2497
        %v2506 = vmul.f32 %v476, %v2497
        %v2507 = vmul.f32 %v477, %v2497
        %v2508 = vmul.f32 %v478, %v2497
        %v2509 = vmul.f32 %v479, %v2497
        %v2510 = vmul.f32 %v480, %v2497
        %v2511 = vmul.f32 %v481, %v2497
        %v2512 = vmul.f32 %v482, %v2497
        %v2513 = vmul.f32 %v483, %v2497
        %v2514 = vmul.f32 %v484, %v2497
        %v2515 = vmul.f32 %v485, %v2497
        %v2516 = vmul.f32 %v486, %v2497
        %v2517 = vmul.f32 %v487, %v2497
        %v2518 = vmul.f32 %v488, %v2497
        %v2519 = vmul.f32 %v489, %v2497
        %v2520 = vmul.f32 %v490, %v2497
        %v2521 = vmul.f32 %v491, %v2497
        %v2522 = vlaneseq
        %v2523 = vshrl.u32 %v2522, 7
        %v2524 = vsub.s32 5, %v2523
        %v2525 = vrot.slane %v417, %v2524
        %v2526 = vmul.f32 %v471, %v2525
        %v2527 = vmul.f32 %v472, %v2525
        %v2528 = vmul.f32 %v473, %v2525
        %v2529 = vmul.f32 %v474, %v2525
        %v2530 = vmul.f32 %v475, %v2525
        %v2531 = vmul.f32 %v476, %v2525
        %v2532 = vmul.f32 %v477, %v2525
        %v2533 = vmul.f32 %v478, %v2525
        %v2534 = vmul.f32 %v479, %v2525
        %v2535 = vmul.f32 %v480, %v2525
        %v2536 = vmul.f32 %v481, %v2525
        %v2537 = vmul.f32 %v482, %v2525
        %v2538 = vmul.f32 %v483, %v2525
        %v2539 = vmul.f32 %v484, %v2525
        %v2540 = vmul.f32 %v485, %v2525
        %v2541 = vmul.f32 %v486, %v2525
        %v2542 = vmul.f32 %v487, %v2525
        %v2543 = vmul.f32 %v488, %v2525
        %v2544 = vmul.f32 %v489, %v2525
        %v2545 = vmul.f32 %v490, %v2525
        %v2546 = vmul.f32 %v491, %v2525
        %v2547 = vmul.f32 %v492, %v2525
        %v2548 = vmul.f32 %v493, %v2525
        %v2549 = vmul.f32 %v494, %v2525
        %v2550 = vadd.f32 %v2498, %v2526
        %v2551 = vadd.f32 %v2499, %v2527
        %v2552 = vadd.f32 %v2500, %v2528
        %v2553 = vadd.f32 %v2501, %v2529
        %v2554 = vadd.f32 %v2502, %v2530
        %v2555 = vadd.f32 %v2503, %v2531
        %v2556 = vadd.f32 %v2504, %v2532
        %v2557 = vadd.f32 %v2505, %v2533
        %v2558 = vadd.f32 %v2506, %v2534
        %v2559 = vadd.f32 %v2507, %v2535
        %v2560 = vadd.f32 %v2508, %v2536
        %v2561 = vadd.f32 %v2509, %v2537
        %v2562 = vadd.f32 %v2510, %v2538
        %v2563 = vadd.f32 %v2511, %v2539
        %v2564 = vadd.f32 %v2512, %v2540
        %v2565 = vadd.f32 %v2513, %v2541
        %v2566 = vadd.f32 %v2514, %v2542
        %v2567 = vadd.f32 %v2515, %v2543
        %v2568 = vadd.f32 %v2516, %v2544
        %v2569 = vadd.f32 %v2517, %v2545
        %v2570 = vadd.f32 %v2518, %v2546
        %v2571 = vadd.f32 %v2519, %v2547
        %v2572 = vadd.f32 %v2520, %v2548
        %v2573 = vadd.f32 %v2521, %v2549
        %v2574 = vlaneseq
        %v2575 = vshrl.u32 %v2574, 7
        %v2576 = vsub.s32 5, %v2575
        %v2577 = vrot.slane %v418, %v2576
        %v2578 = vmul.f32 %v474, %v2577
        %v2579 = vmul.f32 %v475, %v2577
        %v2580 = vmul.f32 %v476, %v2577
        %v2581 = vmul.f32 %v477, %v2577
        %v2582 = vmul.f32 %v478, %v2577
        %v2583 = vmul.f32 %v479, %v2577
        %v2584 = vmul.f32 %v480, %v2577
        %v2585 = vmul.f32 %v481, %v2577
        %v2586 = vmul.f32 %v482, %v2577
        %v2587 = vmul.f32 %v483, %v2577
        %v2588 = vmul.f32 %v484, %v2577
        %v2589 = vmul.f32 %v485, %v2577
        %v2590 = vmul.f32 %v486, %v2577
        %v2591 = vmul.f32 %v487, %v2577
        %v2592 = vmul.f32 %v488, %v2577
        %v2593 = vmul.f32 %v489, %v2577
        %v2594 = vmul.f32 %v490, %v2577
        %v2595 = vmul.f32 %v491, %v2577
        %v2596 = vmul.f32 %v492, %v2577
        %v2597 = vmul.f32 %v493, %v2577
        %v2598 = vmul.f32 %v494, %v2577
        %v2599 = vmul.f32 %v495, %v2577
        %v2600 = vmul.f32 %v496, %v2577
        %v2601 = vmul.f32 %v497, %v2577
        %v2602 = vadd.f32 %v2550, %v2578
        %v2603 = vadd.f32 %v2551, %v2579
        %v2604 = vadd.f32 %v2552, %v2580
        %v2605 = vadd.f32 %v2553, %v2581
        %v2606 = vadd.f32 %v2554, %v2582
        %v2607 = vadd.f32 %v2555, %v2583
        %v2608 = vadd.f32 %v2556, %v2584
        %v2609 = vadd.f32 %v2557, %v2585
        %v2610 = vadd.f32 %v2558, %v2586
        %v2611 = vadd.f32 %v2559, %v2587
        %v2612 = vadd.f32 %v2560, %v2588
        %v2613 = vadd.f32 %v2561, %v2589
        %v2614 = vadd.f32 %v2562, %v2590
        %v2615 = vadd.f32 %v2563, %v2591
        %v2616 = vadd.f32 %v2564, %v2592
        %v2617 = vadd.f32 %v2565, %v2593
        %v2618 = vadd.f32 %v2566, %v2594
        %v2619 = vadd.f32 %v2567, %v2595
        %v2620 = vadd.f32 %v2568, %v2596
        %v2621 = vadd.f32 %v2569, %v2597
        %v2622 = vadd.f32 %v2570, %v2598
        %v2623 = vadd.f32 %v2571, %v2599
        %v2624 = vadd.f32 %v2572, %v2600
        %v2625 = vadd.f32 %v2573, %v2601
        %v2626 = vlaneseq
        %v2627 = vshrl.u32 %v2626, 7
        %v2628 = vsub.s32 5, %v2627
        %v2629 = vrot.slane %v419, %v2628
        %v2630 = vmul.f32 %v477, %v2629
        %v2631 = vmul.f32 %v478, %v2629
        %v2632 = vmul.f32 %v479, %v2629
        %v2633 = vmul.f32 %v480, %v2629
        %v2634 = vmul.f32 %v481, %v2629
        %v2635 = vmul.f32 %v482, %v2629
        %v2636 = vmul.f32 %v483, %v2629
        %v2637 = vmul.f32 %v484, %v2629
        %v2638 = vmul.f32 %v485, %v2629
        %v2639 = vmul.f32 %v486, %v2629
        %v2640 = vmul.f32 %v487, %v2629
        %v2641 = vmul.f32 %v488, %v2629
        %v2642 = vmul.f32 %v489, %v2629
        %v2643 = vmul.f32 %v490, %v2629
        %v2644 = vmul.f32 %v491, %v2629
        %v2645 = vmul.f32 %v492, %v2629
        %v2646 = vmul.f32 %v493, %v2629
        %v2647 = vmul.f32 %v494, %v2629
        %v2648 = vmul.f32 %v495, %v2629
        %v2649 = vmul.f32 %v496, %v2629
        %v2650 = vmul.f32 %v497, %v2629
        %v2651 = vmul.f32 %v498, %v2629
        %v2652 = vmul.f32 %v499, %v2629
        %v2653 = vmul.f32 %v500, %v2629
        %v2654 = vadd.f32 %v2602, %v2630
        %v2655 = vadd.f32 %v2603, %v2631
        %v2656 = vadd.f32 %v2604, %v2632
        %v2657 = vadd.f32 %v2605, %v2633
        %v2658 = vadd.f32 %v2606, %v2634
        %v2659 = vadd.f32 %v2607, %v2635
        %v2660 = vadd.f32 %v2608, %v2636
        %v2661 = vadd.f32 %v2609, %v2637
        %v2662 = vadd.f32 %v2610, %v2638
        %v2663 = vadd.f32 %v2611, %v2639
        %v2664 = vadd.f32 %v2612, %v2640
        %v2665 = vadd.f32 %v2613, %v2641
        %v2666 = vadd.f32 %v2614, %v2642
        %v2667 = vadd.f32 %v2615, %v2643
        %v2668 = vadd.f32 %v2616, %v2644
        %v2669 = vadd.f32 %v2617, %v2645
        %v2670 = vadd.f32 %v2618, %v2646
        %v2671 = vadd.f32 %v2619, %v2647
        %v2672 = vadd.f32 %v2620, %v2648
        %v2673 = vadd.f32 %v2621, %v2649
        %v2674 = vadd.f32 %v2622, %v2650
        %v2675 = vadd.f32 %v2623, %v2651
        %v2676 = vadd.f32 %v2624, %v2652
        %v2677 = vadd.f32 %v2625, %v2653
        %v2678 = vlaneseq
        %v2679 = vshrl.u32 %v2678, 7
        %v2680 = vsub.s32 5, %v2679
        %v2681 = vrot.slane %v420, %v2680
        %v2682 = vmul.f32 %v480, %v2681
        %v2683 = vmul.f32 %v481, %v2681
        %v2684 = vmul.f32 %v482, %v2681
        %v2685 = vmul.f32 %v483, %v2681
        %v2686 = vmul.f32 %v484, %v2681
        %v2687 = vmul.f32 %v485, %v2681
        %v2688 = vmul.f32 %v486, %v2681
        %v2689 = vmul.f32 %v487, %v2681
        %v2690 = vmul.f32 %v488, %v2681
        %v2691 = vmul.f32 %v489, %v2681
        %v2692 = vmul.f32 %v490, %v2681
        %v2693 = vmul.f32 %v491, %v2681
        %v2694 = vmul.f32 %v492, %v2681
        %v2695 = vmul.f32 %v493, %v2681
        %v2696 = vmul.f32 %v494, %v2681
        %v2697 = vmul.f32 %v495, %v2681
        %v2698 = vmul.f32 %v496, %v2681
        %v2699 = vmul.f32 %v497, %v2681
        %v2700 = vmul.f32 %v498, %v2681
        %v2701 = vmul.f32 %v499, %v2681
        %v2702 = vmul.f32 %v500, %v2681
        %v2703 = vmul.f32 %v501, %v2681
        %v2704 = vmul.f32 %v502, %v2681
        %v2705 = vmul.f32 %v503, %v2681
        %v2706 = vadd.f32 %v2654, %v2682
        %v2707 = vadd.f32 %v2655, %v2683
        %v2708 = vadd.f32 %v2656, %v2684
        %v2709 = vadd.f32 %v2657, %v2685
        %v2710 = vadd.f32 %v2658, %v2686
        %v2711 = vadd.f32 %v2659, %v2687
        %v2712 = vadd.f32 %v2660, %v2688
        %v2713 = vadd.f32 %v2661, %v2689
        %v2714 = vadd.f32 %v2662, %v2690
        %v2715 = vadd.f32 %v2663, %v2691
        %v2716 = vadd.f32 %v2664, %v2692
        %v2717 = vadd.f32 %v2665, %v2693
        %v2718 = vadd.f32 %v2666, %v2694
        %v2719 = vadd.f32 %v2667, %v2695
        %v2720 = vadd.f32 %v2668, %v2696
        %v2721 = vadd.f32 %v2669, %v2697
        %v2722 = vadd.f32 %v2670, %v2698
        %v2723 = vadd.f32 %v2671, %v2699
        %v2724 = vadd.f32 %v2672, %v2700
        %v2725 = vadd.f32 %v2673, %v2701
        %v2726 = vadd.f32 %v2674, %v2702
        %v2727 = vadd.f32 %v2675, %v2703
        %v2728 = vadd.f32 %v2676, %v2704
        %v2729 = vadd.f32 %v2677, %v2705
        %v2730 = vlaneseq
        %v2731 = vshrl.u32 %v2730, 7
        %v2732 = vsub.s32 5, %v2731
        %v2733 = vrot.slane %v421, %v2732
        %v2734 = vmul.f32 %v483, %v2733
        %v2735 = vmul.f32 %v484, %v2733
        %v2736 = vmul.f32 %v485, %v2733
        %v2737 = vmul.f32 %v486, %v2733
        %v2738 = vmul.f32 %v487, %v2733
        %v2739 = vmul.f32 %v488, %v2733
        %v2740 = vmul.f32 %v489, %v2733
        %v2741 = vmul.f32 %v490, %v2733
        %v2742 = vmul.f32 %v491, %v2733
        %v2743 = vmul.f32 %v492, %v2733
        %v2744 = vmul.f32 %v493, %v2733
        %v2745 = vmul.f32 %v494, %v2733
        %v2746 = vmul.f32 %v495, %v2733
        %v2747 = vmul.f32 %v496, %v2733
        %v2748 = vmul.f32 %v497, %v2733
        %v2749 = vmul.f32 %v498, %v2733
        %v2750 = vmul.f32 %v499, %v2733
        %v2751 = vmul.f32 %v500, %v2733
        %v2752 = vmul.f32 %v501, %v2733
        %v2753 = vmul.f32 %v502, %v2733
        %v2754 = vmul.f32 %v503, %v2733
        %v2755 = vmul.f32 %v504, %v2733
        %v2756 = vmul.f32 %v505, %v2733
        %v2757 = vmul.f32 %v506, %v2733
        %v2758 = vadd.f32 %v2706, %v2734
        %v2759 = vadd.f32 %v2707, %v2735
        %v2760 = vadd.f32 %v2708, %v2736
        %v2761 = vadd.f32 %v2709, %v2737
        %v2762 = vadd.f32 %v2710, %v2738
        %v2763 = vadd.f32 %v2711, %v2739
        %v2764 = vadd.f32 %v2712, %v2740
        %v2765 = vadd.f32 %v2713, %v2741
        %v2766 = vadd.f32 %v2714, %v2742
        %v2767 = vadd.f32 %v2715, %v2743
        %v2768 = vadd.f32 %v2716, %v2744
        %v2769 = vadd.f32 %v2717, %v2745
        %v2770 = vadd.f32 %v2718, %v2746
        %v2771 = vadd.f32 %v2719, %v2747
        %v2772 = vadd.f32 %v2720, %v2748
        %v2773 = vadd.f32 %v2721, %v2749
        %v2774 = vadd.f32 %v2722, %v2750
        %v2775 = vadd.f32 %v2723, %v2751
        %v2776 = vadd.f32 %v2724, %v2752
        %v2777 = vadd.f32 %v2725, %v2753
        %v2778 = vadd.f32 %v2726, %v2754
        %v2779 = vadd.f32 %v2727, %v2755
        %v2780 = vadd.f32 %v2728, %v2756
        %v2781 = vadd.f32 %v2729, %v2757
        %v2782 = vlaneseq
        %v2783 = vshrl.u32 %v2782, 7
        %v2784 = vsub.s32 5, %v2783
        %v2785 = vrot.slane %v422, %v2784
        %v2786 = vmul.f32 %v486, %v2785
        %v2787 = vmul.f32 %v487, %v2785
        %v2788 = vmul.f32 %v488, %v2785
        %v2789 = vmul.f32 %v489, %v2785
        %v2790 = vmul.f32 %v490, %v2785
        %v2791 = vmul.f32 %v491, %v2785
        %v2792 = vmul.f32 %v492, %v2785
        %v2793 = vmul.f32 %v493, %v2785
        %v2794 = vmul.f32 %v494, %v2785
        %v2795 = vmul.f32 %v495, %v2785
        %v2796 = vmul.f32 %v496, %v2785
        %v2797 = vmul.f32 %v497, %v2785
        %v2798 = vmul.f32 %v498, %v2785
        %v2799 = vmul.f32 %v499, %v2785
        %v2800 = vmul.f32 %v500, %v2785
        %v2801 = vmul.f32 %v501, %v2785
        %v2802 = vmul.f32 %v502, %v2785
        %v2803 = vmul.f32 %v503, %v2785
        %v2804 = vmul.f32 %v504, %v2785
        %v2805 = vmul.f32 %v505, %v2785
        %v2806 = vmul.f32 %v506, %v2785
        %v2807 = vmul.f32 %v507, %v2785
        %v2808 = vmul.f32 %v508, %v2785
        %v2809 = vmul.f32 %v509, %v2785
        %v2810 = vadd.f32 %v2758, %v2786
        %v2811 = vadd.f32 %v2759, %v2787
        %v2812 = vadd.f32 %v2760, %v2788
        %v2813 = vadd.f32 %v2761, %v2789
        %v2814 = vadd.f32 %v2762, %v2790
        %v2815 = vadd.f32 %v2763, %v2791
        %v2816 = vadd.f32 %v2764, %v2792
        %v2817 = vadd.f32 %v2765, %v2793
        %v2818 = vadd.f32 %v2766, %v2794
        %v2819 = vadd.f32 %v2767, %v2795
        %v2820 = vadd.f32 %v2768, %v2796
        %v2821 = vadd.f32 %v2769, %v2797
        %v2822 = vadd.f32 %v2770, %v2798
        %v2823 = vadd.f32 %v2771, %v2799
        %v2824 = vadd.f32 %v2772, %v2800
        %v2825 = vadd.f32 %v2773, %v2801
        %v2826 = vadd.f32 %v2774, %v2802
        %v2827 = vadd.f32 %v2775, %v2803
        %v2828 = vadd.f32 %v2776, %v2804
        %v2829 = vadd.f32 %v2777, %v2805
        %v2830 = vadd.f32 %v2778, %v2806
        %v2831 = vadd.f32 %v2779, %v2807
        %v2832 = vadd.f32 %v2780, %v2808
        %v2833 = vadd.f32 %v2781, %v2809
        %vm2858 = vcmask 1042432
        %v2859 = vrot.slane %v2810, 5
        %v2860 = vrot.slane %v2811, 5
        %v2861 = vsel %vm2858, %v2859, %v2860
        %v2862 = vrot.slane %v2812, 5
        %v2863 = vsel %vm2858, %v2860, %v2862
        %v2864 = vrot.slane %v2813, 5
        %v2865 = vrot.slane %v2814, 5
        %v2866 = vsel %vm2858, %v2864, %v2865
        %v2867 = vrot.slane %v2815, 5
        %v2868 = vsel %vm2858, %v2865, %v2867
        %v2869 = vrot.slane %v2816, 5
        %v2870 = vrot.slane %v2817, 5
        %v2871 = vsel %vm2858, %v2869, %v2870
        %v2872 = vrot.slane %v2818, 5
        %v2873 = vsel %vm2858, %v2870, %v2872
        %v2874 = vrot.slane %v2819, 5
        %v2875 = vrot.slane %v2820, 5
        %v2876 = vsel %vm2858, %v2874, %v2875
        %v2877 = vrot.slane %v2821, 5
        %v2878 = vsel %vm2858, %v2875, %v2877
        %v2879 = vrot.slane %v2822, 5
        %v2880 = vrot.slane %v2823, 5
        %v2881 = vsel %vm2858, %v2879, %v2880
        %v2882 = vrot.slane %v2824, 5
        %v2883 = vsel %vm2858, %v2880, %v2882
        %v2884 = vrot.slane %v2825, 5
        %v2885 = vrot.slane %v2826, 5
        %v2886 = vsel %vm2858, %v2884, %v2885
        %v2887 = vrot.slane %v2827, 5
        %v2888 = vsel %vm2858, %v2885, %v2887
        %v2889 = vrot.slane %v2828, 5
        %v2890 = vrot.slane %v2829, 5
        %v2891 = vsel %vm2858, %v2889, %v2890
        %v2892 = vrot.slane %v2830, 5
        %v2893 = vsel %vm2858, %v2890, %v2892
        %v2894 = vrot.slane %v2831, 5
        %v2895 = vrot.slane %v2832, 5
        %v2896 = vsel %vm2858, %v2894, %v2895
        %v2897 = vrot.slane %v2833, 5
        %v2898 = vsel %vm2858, %v2895, %v2897
        %v2915 = vadd.f32 %v2478, %v2861
        %v2916 = vadd.f32 %v2479, %v2863
        %v2917 = vadd.f32 %v2480, %v2866
        %v2918 = vadd.f32 %v2481, %v2868
        %v2919 = vadd.f32 %v2482, %v2871
        %v2920 = vadd.f32 %v2483, %v2873
        %v2921 = vadd.f32 %v2484, %v2876
        %v2922 = vadd.f32 %v2485, %v2878
        %v2923 = vadd.f32 %v2486, %v2881
        %v2924 = vadd.f32 %v2487, %v2883
        %v2925 = vadd.f32 %v2488, %v2886
        %v2926 = vadd.f32 %v2489, %v2888
        %v2927 = vadd.f32 %v2490, %v2891
        %v2928 = vadd.f32 %v2491, %v2893
        %v2929 = vadd.f32 %v2492, %v2896
        %v2930 = vadd.f32 %v2493, %v2898
        %v2931 = vlaneseq
        %v2932 = vshrl.u32 %v2931, 7
        %v2933 = vsub.s32 6, %v2932
        %v2934 = vrot.slane %v416, %v2933
        %v2935 = vmul.f32 %v468, %v2934
        %v2936 = vmul.f32 %v469, %v2934
        %v2937 = vmul.f32 %v470, %v2934
        %v2938 = vmul.f32 %v471, %v2934
        %v2939 = vmul.f32 %v472, %v2934
        %v2940 = vmul.f32 %v473, %v2934
        %v2941 = vmul.f32 %v474, %v2934
        %v2942 = vmul.f32 %v475, %v2934
        %v2943 = vmul.f32 %v476, %v2934
        %v2944 = vmul.f32 %v477, %v2934
        %v2945 = vmul.f32 %v478, %v2934
        %v2946 = vmul.f32 %v479, %v2934
        %v2947 = vmul.f32 %v480, %v2934
        %v2948 = vmul.f32 %v481, %v2934
        %v2949 = vmul.f32 %v482, %v2934
        %v2950 = vmul.f32 %v483, %v2934
        %v2951 = vmul.f32 %v484, %v2934
        %v2952 = vmul.f32 %v485, %v2934
        %v2953 = vmul.f32 %v486, %v2934
        %v2954 = vmul.f32 %v487, %v2934
        %v2955 = vmul.f32 %v488, %v2934
        %v2956 = vmul.f32 %v489, %v2934
        %v2957 = vmul.f32 %v490, %v2934
        %v2958 = vmul.f32 %v491, %v2934
        %v2959 = vlaneseq
        %v2960 = vshrl.u32 %v2959, 7
        %v2961 = vsub.s32 6, %v2960
        %v2962 = vrot.slane %v417, %v2961
        %v2963 = vmul.f32 %v471, %v2962
        %v2964 = vmul.f32 %v472, %v2962
        %v2965 = vmul.f32 %v473, %v2962
        %v2966 = vmul.f32 %v474, %v2962
        %v2967 = vmul.f32 %v475, %v2962
        %v2968 = vmul.f32 %v476, %v2962
        %v2969 = vmul.f32 %v477, %v2962
        %v2970 = vmul.f32 %v478, %v2962
        %v2971 = vmul.f32 %v479, %v2962
        %v2972 = vmul.f32 %v480, %v2962
        %v2973 = vmul.f32 %v481, %v2962
        %v2974 = vmul.f32 %v482, %v2962
        %v2975 = vmul.f32 %v483, %v2962
        %v2976 = vmul.f32 %v484, %v2962
        %v2977 = vmul.f32 %v485, %v2962
        %v2978 = vmul.f32 %v486, %v2962
        %v2979 = vmul.f32 %v487, %v2962
        %v2980 = vmul.f32 %v488, %v2962
        %v2981 = vmul.f32 %v489, %v2962
        %v2982 = vmul.f32 %v490, %v2962
        %v2983 = vmul.f32 %v491, %v2962
        %v2984 = vmul.f32 %v492, %v2962
        %v2985 = vmul.f32 %v493, %v2962
        %v2986 = vmul.f32 %v494, %v2962
        %v2987 = vadd.f32 %v2935, %v2963
        %v2988 = vadd.f32 %v2936, %v2964
        %v2989 = vadd.f32 %v2937, %v2965
        %v2990 = vadd.f32 %v2938, %v2966
        %v2991 = vadd.f32 %v2939, %v2967
        %v2992 = vadd.f32 %v2940, %v2968
        %v2993 = vadd.f32 %v2941, %v2969
        %v2994 = vadd.f32 %v2942, %v2970
        %v2995 = vadd.f32 %v2943, %v2971
        %v2996 = vadd.f32 %v2944, %v2972
        %v2997 = vadd.f32 %v2945, %v2973
        %v2998 = vadd.f32 %v2946, %v2974
        %v2999 = vadd.f32 %v2947, %v2975
        %v3000 = vadd.f32 %v2948, %v2976
        %v3001 = vadd.f32 %v2949, %v2977
        %v3002 = vadd.f32 %v2950, %v2978
        %v3003 = vadd.f32 %v2951, %v2979
        %v3004 = vadd.f32 %v2952, %v2980
        %v3005 = vadd.f32 %v2953, %v2981
        %v3006 = vadd.f32 %v2954, %v2982
        %v3007 = vadd.f32 %v2955, %v2983
        %v3008 = vadd.f32 %v2956, %v2984
        %v3009 = vadd.f32 %v2957, %v2985
        %v3010 = vadd.f32 %v2958, %v2986
        %v3011 = vlaneseq
        %v3012 = vshrl.u32 %v3011, 7
        %v3013 = vsub.s32 6, %v3012
        %v3014 = vrot.slane %v418, %v3013
        %v3015 = vmul.f32 %v474, %v3014
        %v3016 = vmul.f32 %v475, %v3014
        %v3017 = vmul.f32 %v476, %v3014
        %v3018 = vmul.f32 %v477, %v3014
        %v3019 = vmul.f32 %v478, %v3014
        %v3020 = vmul.f32 %v479, %v3014
        %v3021 = vmul.f32 %v480, %v3014
        %v3022 = vmul.f32 %v481, %v3014
        %v3023 = vmul.f32 %v482, %v3014
        %v3024 = vmul.f32 %v483, %v3014
        %v3025 = vmul.f32 %v484, %v3014
        %v3026 = vmul.f32 %v485, %v3014
        %v3027 = vmul.f32 %v486, %v3014
        %v3028 = vmul.f32 %v487, %v3014
        %v3029 = vmul.f32 %v488, %v3014
        %v3030 = vmul.f32 %v489, %v3014
        %v3031 = vmul.f32 %v490, %v3014
        %v3032 = vmul.f32 %v491, %v3014
        %v3033 = vmul.f32 %v492, %v3014
        %v3034 = vmul.f32 %v493, %v3014
        %v3035 = vmul.f32 %v494, %v3014
        %v3036 = vmul.f32 %v495, %v3014
        %v3037 = vmul.f32 %v496, %v3014
        %v3038 = vmul.f32 %v497, %v3014
        %v3039 = vadd.f32 %v2987, %v3015
        %v3040 = vadd.f32 %v2988, %v3016
        %v3041 = vadd.f32 %v2989, %v3017
        %v3042 = vadd.f32 %v2990, %v3018
        %v3043 = vadd.f32 %v2991, %v3019
        %v3044 = vadd.f32 %v2992, %v3020
        %v3045 = vadd.f32 %v2993, %v3021
        %v3046 = vadd.f32 %v2994, %v3022
        %v3047 = vadd.f32 %v2995, %v3023
        %v3048 = vadd.f32 %v2996, %v3024
        %v3049 = vadd.f32 %v2997, %v3025
        %v3050 = vadd.f32 %v2998, %v3026
        %v3051 = vadd.f32 %v2999, %v3027
        %v3052 = vadd.f32 %v3000, %v3028
        %v3053 = vadd.f32 %v3001, %v3029
        %v3054 = vadd.f32 %v3002, %v3030
        %v3055 = vadd.f32 %v3003, %v3031
        %v3056 = vadd.f32 %v3004, %v3032
        %v3057 = vadd.f32 %v3005, %v3033
        %v3058 = vadd.f32 %v3006, %v3034
        %v3059 = vadd.f32 %v3007, %v3035
        %v3060 = vadd.f32 %v3008, %v3036
        %v3061 = vadd.f32 %v3009, %v3037
        %v3062 = vadd.f32 %v3010, %v3038
        %v3063 = vlaneseq
        %v3064 = vshrl.u32 %v3063, 7
        %v3065 = vsub.s32 6, %v3064
        %v3066 = vrot.slane %v419, %v3065
        %v3067 = vmul.f32 %v477, %v3066
        %v3068 = vmul.f32 %v478, %v3066
        %v3069 = vmul.f32 %v479, %v3066
        %v3070 = vmul.f32 %v480, %v3066
        %v3071 = vmul.f32 %v481, %v3066
        %v3072 = vmul.f32 %v482, %v3066
        %v3073 = vmul.f32 %v483, %v3066
        %v3074 = vmul.f32 %v484, %v3066
        %v3075 = vmul.f32 %v485, %v3066
        %v3076 = vmul.f32 %v486, %v3066
        %v3077 = vmul.f32 %v487, %v3066
        %v3078 = vmul.f32 %v488, %v3066
        %v3079 = vmul.f32 %v489, %v3066
        %v3080 = vmul.f32 %v490, %v3066
        %v3081 = vmul.f32 %v491, %v3066
        %v3082 = vmul.f32 %v492, %v3066
        %v3083 = vmul.f32 %v493, %v3066
        %v3084 = vmul.f32 %v494, %v3066
        %v3085 = vmul.f32 %v495, %v3066
        %v3086 = vmul.f32 %v496, %v3066
        %v3087 = vmul.f32 %v497, %v3066
        %v3088 = vmul.f32 %v498, %v3066
        %v3089 = vmul.f32 %v499, %v3066
        %v3090 = vmul.f32 %v500, %v3066
        %v3091 = vadd.f32 %v3039, %v3067
        %v3092 = vadd.f32 %v3040, %v3068
        %v3093 = vadd.f32 %v3041, %v3069
        %v3094 = vadd.f32 %v3042, %v3070
        %v3095 = vadd.f32 %v3043, %v3071
        %v3096 = vadd.f32 %v3044, %v3072
        %v3097 = vadd.f32 %v3045, %v3073
        %v3098 = vadd.f32 %v3046, %v3074
        %v3099 = vadd.f32 %v3047, %v3075
        %v3100 = vadd.f32 %v3048, %v3076
        %v3101 = vadd.f32 %v3049, %v3077
        %v3102 = vadd.f32 %v3050, %v3078
        %v3103 = vadd.f32 %v3051, %v3079
        %v3104 = vadd.f32 %v3052, %v3080
        %v3105 = vadd.f32 %v3053, %v3081
        %v3106 = vadd.f32 %v3054, %v3082
        %v3107 = vadd.f32 %v3055, %v3083
        %v3108 = vadd.f32 %v3056, %v3084
        %v3109 = vadd.f32 %v3057, %v3085
        %v3110 = vadd.f32 %v3058, %v3086
        %v3111 = vadd.f32 %v3059, %v3087
        %v3112 = vadd.f32 %v3060, %v3088
        %v3113 = vadd.f32 %v3061, %v3089
        %v3114 = vadd.f32 %v3062, %v3090
        %v3115 = vlaneseq
        %v3116 = vshrl.u32 %v3115, 7
        %v3117 = vsub.s32 6, %v3116
        %v3118 = vrot.slane %v420, %v3117
        %v3119 = vmul.f32 %v480, %v3118
        %v3120 = vmul.f32 %v481, %v3118
        %v3121 = vmul.f32 %v482, %v3118
        %v3122 = vmul.f32 %v483, %v3118
        %v3123 = vmul.f32 %v484, %v3118
        %v3124 = vmul.f32 %v485, %v3118
        %v3125 = vmul.f32 %v486, %v3118
        %v3126 = vmul.f32 %v487, %v3118
        %v3127 = vmul.f32 %v488, %v3118
        %v3128 = vmul.f32 %v489, %v3118
        %v3129 = vmul.f32 %v490, %v3118
        %v3130 = vmul.f32 %v491, %v3118
        %v3131 = vmul.f32 %v492, %v3118
        %v3132 = vmul.f32 %v493, %v3118
        %v3133 = vmul.f32 %v494, %v3118
        %v3134 = vmul.f32 %v495, %v3118
        %v3135 = vmul.f32 %v496, %v3118
        %v3136 = vmul.f32 %v497, %v3118
        %v3137 = vmul.f32 %v498, %v3118
        %v3138 = vmul.f32 %v499, %v3118
        %v3139 = vmul.f32 %v500, %v3118
        %v3140 = vmul.f32 %v501, %v3118
        %v3141 = vmul.f32 %v502, %v3118
        %v3142 = vmul.f32 %v503, %v3118
        %v3143 = vadd.f32 %v3091, %v3119
        %v3144 = vadd.f32 %v3092, %v3120
        %v3145 = vadd.f32 %v3093, %v3121
        %v3146 = vadd.f32 %v3094, %v3122
        %v3147 = vadd.f32 %v3095, %v3123
        %v3148 = vadd.f32 %v3096, %v3124
        %v3149 = vadd.f32 %v3097, %v3125
        %v3150 = vadd.f32 %v3098, %v3126
        %v3151 = vadd.f32 %v3099, %v3127
        %v3152 = vadd.f32 %v3100, %v3128
        %v3153 = vadd.f32 %v3101, %v3129
        %v3154 = vadd.f32 %v3102, %v3130
        %v3155 = vadd.f32 %v3103, %v3131
        %v3156 = vadd.f32 %v3104, %v3132
        %v3157 = vadd.f32 %v3105, %v3133
        %v3158 = vadd.f32 %v3106, %v3134
        %v3159 = vadd.f32 %v3107, %v3135
        %v3160 = vadd.f32 %v3108, %v3136
        %v3161 = vadd.f32 %v3109, %v3137
        %v3162 = vadd.f32 %v3110, %v3138
        %v3163 = vadd.f32 %v3111, %v3139
        %v3164 = vadd.f32 %v3112, %v3140
        %v3165 = vadd.f32 %v3113, %v3141
        %v3166 = vadd.f32 %v3114, %v3142
        %v3167 = vlaneseq
        %v3168 = vshrl.u32 %v3167, 7
        %v3169 = vsub.s32 6, %v3168
        %v3170 = vrot.slane %v421, %v3169
        %v3171 = vmul.f32 %v483, %v3170
        %v3172 = vmul.f32 %v484, %v3170
        %v3173 = vmul.f32 %v485, %v3170
        %v3174 = vmul.f32 %v486, %v3170
        %v3175 = vmul.f32 %v487, %v3170
        %v3176 = vmul.f32 %v488, %v3170
        %v3177 = vmul.f32 %v489, %v3170
        %v3178 = vmul.f32 %v490, %v3170
        %v3179 = vmul.f32 %v491, %v3170
        %v3180 = vmul.f32 %v492, %v3170
        %v3181 = vmul.f32 %v493, %v3170
        %v3182 = vmul.f32 %v494, %v3170
        %v3183 = vmul.f32 %v495, %v3170
        %v3184 = vmul.f32 %v496, %v3170
        %v3185 = vmul.f32 %v497, %v3170
        %v3186 = vmul.f32 %v498, %v3170
        %v3187 = vmul.f32 %v499, %v3170
        %v3188 = vmul.f32 %v500, %v3170
        %v3189 = vmul.f32 %v501, %v3170
        %v3190 = vmul.f32 %v502, %v3170
        %v3191 = vmul.f32 %v503, %v3170
        %v3192 = vmul.f32 %v504, %v3170
        %v3193 = vmul.f32 %v505, %v3170
        %v3194 = vmul.f32 %v506, %v3170
        %v3195 = vadd.f32 %v3143, %v3171
        %v3196 = vadd.f32 %v3144, %v3172
        %v3197 = vadd.f32 %v3145, %v3173
        %v3198 = vadd.f32 %v3146, %v3174
        %v3199 = vadd.f32 %v3147, %v3175
        %v3200 = vadd.f32 %v3148, %v3176
        %v3201 = vadd.f32 %v3149, %v3177
        %v3202 = vadd.f32 %v3150, %v3178
        %v3203 = vadd.f32 %v3151, %v3179
        %v3204 = vadd.f32 %v3152, %v3180
        %v3205 = vadd.f32 %v3153, %v3181
        %v3206 = vadd.f32 %v3154, %v3182
        %v3207 = vadd.f32 %v3155, %v3183
        %v3208 = vadd.f32 %v3156, %v3184
        %v3209 = vadd.f32 %v3157, %v3185
        %v3210 = vadd.f32 %v3158, %v3186
        %v3211 = vadd.f32 %v3159, %v3187
        %v3212 = vadd.f32 %v3160, %v3188
        %v3213 = vadd.f32 %v3161, %v3189
        %v3214 = vadd.f32 %v3162, %v3190
        %v3215 = vadd.f32 %v3163, %v3191
        %v3216 = vadd.f32 %v3164, %v3192
        %v3217 = vadd.f32 %v3165, %v3193
        %v3218 = vadd.f32 %v3166, %v3194
        %v3219 = vlaneseq
        %v3220 = vshrl.u32 %v3219, 7
        %v3221 = vsub.s32 6, %v3220
        %v3222 = vrot.slane %v422, %v3221
        %v3223 = vmul.f32 %v486, %v3222
        %v3224 = vmul.f32 %v487, %v3222
        %v3225 = vmul.f32 %v488, %v3222
        %v3226 = vmul.f32 %v489, %v3222
        %v3227 = vmul.f32 %v490, %v3222
        %v3228 = vmul.f32 %v491, %v3222
        %v3229 = vmul.f32 %v492, %v3222
        %v3230 = vmul.f32 %v493, %v3222
        %v3231 = vmul.f32 %v494, %v3222
        %v3232 = vmul.f32 %v495, %v3222
        %v3233 = vmul.f32 %v496, %v3222
        %v3234 = vmul.f32 %v497, %v3222
        %v3235 = vmul.f32 %v498, %v3222
        %v3236 = vmul.f32 %v499, %v3222
        %v3237 = vmul.f32 %v500, %v3222
        %v3238 = vmul.f32 %v501, %v3222
        %v3239 = vmul.f32 %v502, %v3222
        %v3240 = vmul.f32 %v503, %v3222
        %v3241 = vmul.f32 %v504, %v3222
        %v3242 = vmul.f32 %v505, %v3222
        %v3243 = vmul.f32 %v506, %v3222
        %v3244 = vmul.f32 %v507, %v3222
        %v3245 = vmul.f32 %v508, %v3222
        %v3246 = vmul.f32 %v509, %v3222
        %v3247 = vadd.f32 %v3195, %v3223
        %v3248 = vadd.f32 %v3196, %v3224
        %v3249 = vadd.f32 %v3197, %v3225
        %v3250 = vadd.f32 %v3198, %v3226
        %v3251 = vadd.f32 %v3199, %v3227
        %v3252 = vadd.f32 %v3200, %v3228
        %v3253 = vadd.f32 %v3201, %v3229
        %v3254 = vadd.f32 %v3202, %v3230
        %v3255 = vadd.f32 %v3203, %v3231
        %v3256 = vadd.f32 %v3204, %v3232
        %v3257 = vadd.f32 %v3205, %v3233
        %v3258 = vadd.f32 %v3206, %v3234
        %v3259 = vadd.f32 %v3207, %v3235
        %v3260 = vadd.f32 %v3208, %v3236
        %v3261 = vadd.f32 %v3209, %v3237
        %v3262 = vadd.f32 %v3210, %v3238
        %v3263 = vadd.f32 %v3211, %v3239
        %v3264 = vadd.f32 %v3212, %v3240
        %v3265 = vadd.f32 %v3213, %v3241
        %v3266 = vadd.f32 %v3214, %v3242
        %v3267 = vadd.f32 %v3215, %v3243
        %v3268 = vadd.f32 %v3216, %v3244
        %v3269 = vadd.f32 %v3217, %v3245
        %v3270 = vadd.f32 %v3218, %v3246
        %vm3295 = vcmask 1041408
        %v3296 = vrot.slane %v3247, 6
        %v3297 = vrot.slane %v3248, 6
        %v3298 = vsel %vm3295, %v3296, %v3297
        %v3299 = vrot.slane %v3249, 6
        %v3300 = vsel %vm3295, %v3297, %v3299
        %v3301 = vrot.slane %v3250, 6
        %v3302 = vrot.slane %v3251, 6
        %v3303 = vsel %vm3295, %v3301, %v3302
        %v3304 = vrot.slane %v3252, 6
        %v3305 = vsel %vm3295, %v3302, %v3304
        %v3306 = vrot.slane %v3253, 6
        %v3307 = vrot.slane %v3254, 6
        %v3308 = vsel %vm3295, %v3306, %v3307
        %v3309 = vrot.slane %v3255, 6
        %v3310 = vsel %vm3295, %v3307, %v3309
        %v3311 = vrot.slane %v3256, 6
        %v3312 = vrot.slane %v3257, 6
        %v3313 = vsel %vm3295, %v3311, %v3312
        %v3314 = vrot.slane %v3258, 6
        %v3315 = vsel %vm3295, %v3312, %v3314
        %v3316 = vrot.slane %v3259, 6
        %v3317 = vrot.slane %v3260, 6
        %v3318 = vsel %vm3295, %v3316, %v3317
        %v3319 = vrot.slane %v3261, 6
        %v3320 = vsel %vm3295, %v3317, %v3319
        %v3321 = vrot.slane %v3262, 6
        %v3322 = vrot.slane %v3263, 6
        %v3323 = vsel %vm3295, %v3321, %v3322
        %v3324 = vrot.slane %v3264, 6
        %v3325 = vsel %vm3295, %v3322, %v3324
        %v3326 = vrot.slane %v3265, 6
        %v3327 = vrot.slane %v3266, 6
        %v3328 = vsel %vm3295, %v3326, %v3327
        %v3329 = vrot.slane %v3267, 6
        %v3330 = vsel %vm3295, %v3327, %v3329
        %v3331 = vrot.slane %v3268, 6
        %v3332 = vrot.slane %v3269, 6
        %v3333 = vsel %vm3295, %v3331, %v3332
        %v3334 = vrot.slane %v3270, 6
        %v3335 = vsel %vm3295, %v3332, %v3334
        %v3352 = vadd.f32 %v2915, %v3298
        %v3353 = vadd.f32 %v2916, %v3300
        %v3354 = vadd.f32 %v2917, %v3303
        %v3355 = vadd.f32 %v2918, %v3305
        %v3356 = vadd.f32 %v2919, %v3308
        %v3357 = vadd.f32 %v2920, %v3310
        %v3358 = vadd.f32 %v2921, %v3313
        %v3359 = vadd.f32 %v2922, %v3315
        %v3360 = vadd.f32 %v2923, %v3318
        %v3361 = vadd.f32 %v2924, %v3320
        %v3362 = vadd.f32 %v2925, %v3323
        %v3363 = vadd.f32 %v2926, %v3325
        %v3364 = vadd.f32 %v2927, %v3328
        %v3365 = vadd.f32 %v2928, %v3330
        %v3366 = vadd.f32 %v2929, %v3333
        %v3367 = vadd.f32 %v2930, %v3335
        %v3369 = vlaneseq
        %v3370 = vshrl.u32 %v3369, 7
        %v3371 = vsub.s32 0, %v3370
        %v3372 = vrot.slane %v423, %v3371
        %v3374 = vadd.f32 %v3352, %v3372
        %v3375 = vadd.f32 %v3353, %v3372
        %v3376 = vadd.f32 %v3354, %v3372
        %v3377 = vadd.f32 %v3355, %v3372
        %v3378 = vadd.f32 %v3356, %v3372
        %v3379 = vadd.f32 %v3357, %v3372
        %v3380 = vadd.f32 %v3358, %v3372
        %v3381 = vadd.f32 %v3359, %v3372
        %v3382 = vadd.f32 %v3360, %v3372
        %v3383 = vadd.f32 %v3361, %v3372
        %v3384 = vadd.f32 %v3362, %v3372
        %v3385 = vadd.f32 %v3363, %v3372
        %v3386 = vadd.f32 %v3364, %v3372
        %v3387 = vadd.f32 %v3365, %v3372
        %v3388 = vadd.f32 %v3366, %v3372
        %v3389 = vadd.f32 %v3367, %v3372
        %3390 = vadd.xlane.f32.xlu0 %v3374
        %v3391 = vpop.xlane.xlu0 %3390
        %3392 = vadd.xlane.f32.xlu0 %v3375
        %v3393 = vpop.xlane.xlu0 %3392
        %3394 = vadd.xlane.f32.xlu0 %v3376
        %v3395 = vpop.xlane.xlu0 %3394
        %3396 = vadd.xlane.f32.xlu0 %v3377
        %v3397 = vpop.xlane.xlu0 %3396
        %3398 = vadd.xlane.f32.xlu0 %v3378
        %v3399 = vpop.xlane.xlu0 %3398
        %3400 = vadd.xlane.f32.xlu0 %v3379
        %v3401 = vpop.xlane.xlu0 %3400
        %3402 = vadd.xlane.f32.xlu0 %v3380
        %v3403 = vpop.xlane.xlu0 %3402
        %3404 = vadd.xlane.f32.xlu0 %v3381
        %v3405 = vpop.xlane.xlu0 %3404
        %3406 = vadd.xlane.f32.xlu0 %v3382
        %v3407 = vpop.xlane.xlu0 %3406
        %3408 = vadd.xlane.f32.xlu0 %v3383
        %v3409 = vpop.xlane.xlu0 %3408
        %3410 = vadd.xlane.f32.xlu0 %v3384
        %v3411 = vpop.xlane.xlu0 %3410
        %3412 = vadd.xlane.f32.xlu0 %v3385
        %v3413 = vpop.xlane.xlu0 %3412
        %3414 = vadd.xlane.f32.xlu0 %v3386
        %v3415 = vpop.xlane.xlu0 %3414
        %3416 = vadd.xlane.f32.xlu0 %v3387
        %v3417 = vpop.xlane.xlu0 %3416
        %3418 = vadd.xlane.f32.xlu0 %v3388
        %v3419 = vpop.xlane.xlu0 %3418
        %3420 = vadd.xlane.f32.xlu0 %v3389
        %v3421 = vpop.xlane.xlu0 %3420
        %v3422 = vmul.f32 %v3391, 0.25
        %v3423 = vmul.f32 %v3393, 0.25
        %v3424 = vmul.f32 %v3395, 0.25
        %v3425 = vmul.f32 %v3397, 0.25
        %v3426 = vmul.f32 %v3399, 0.25
        %v3427 = vmul.f32 %v3401, 0.25
        %v3428 = vmul.f32 %v3403, 0.25
        %v3429 = vmul.f32 %v3405, 0.25
        %v3430 = vmul.f32 %v3407, 0.25
        %v3431 = vmul.f32 %v3409, 0.25
        %v3432 = vmul.f32 %v3411, 0.25
        %v3433 = vmul.f32 %v3413, 0.25
        %v3434 = vmul.f32 %v3415, 0.25
        %v3435 = vmul.f32 %v3417, 0.25
        %v3436 = vmul.f32 %v3419, 0.25
        %v3437 = vmul.f32 %v3421, 0.25
        %v3438 = vmul.f32 %v3374, %v3374
        %v3439 = vmul.f32 %v3375, %v3375
        %v3440 = vmul.f32 %v3376, %v3376
        %v3441 = vmul.f32 %v3377, %v3377
        %v3442 = vmul.f32 %v3378, %v3378
        %v3443 = vmul.f32 %v3379, %v3379
        %v3444 = vmul.f32 %v3380, %v3380
        %v3445 = vmul.f32 %v3381, %v3381
        %v3446 = vmul.f32 %v3382, %v3382
        %v3447 = vmul.f32 %v3383, %v3383
        %v3448 = vmul.f32 %v3384, %v3384
        %v3449 = vmul.f32 %v3385, %v3385
        %v3450 = vmul.f32 %v3386, %v3386
        %v3451 = vmul.f32 %v3387, %v3387
        %v3452 = vmul.f32 %v3388, %v3388
        %v3453 = vmul.f32 %v3389, %v3389
        %3454 = vadd.xlane.f32.xlu0 %v3438
        %v3455 = vpop.xlane.xlu0 %3454
        %3456 = vadd.xlane.f32.xlu0 %v3439
        %v3457 = vpop.xlane.xlu0 %3456
        %3458 = vadd.xlane.f32.xlu0 %v3440
        %v3459 = vpop.xlane.xlu0 %3458
        %3460 = vadd.xlane.f32.xlu0 %v3441
        %v3461 = vpop.xlane.xlu0 %3460
        %3462 = vadd.xlane.f32.xlu0 %v3442
        %v3463 = vpop.xlane.xlu0 %3462
        %3464 = vadd.xlane.f32.xlu0 %v3443
        %v3465 = vpop.xlane.xlu0 %3464
        %3466 = vadd.xlane.f32.xlu0 %v3444
        %v3467 = vpop.xlane.xlu0 %3466
        %3468 = vadd.xlane.f32.xlu0 %v3445
        %v3469 = vpop.xlane.xlu0 %3468
        %3470 = vadd.xlane.f32.xlu0 %v3446
        %v3471 = vpop.xlane.xlu0 %3470
        %3472 = vadd.xlane.f32.xlu0 %v3447
        %v3473 = vpop.xlane.xlu0 %3472
        %3474 = vadd.xlane.f32.xlu0 %v3448
        %v3475 = vpop.xlane.xlu0 %3474
        %3476 = vadd.xlane.f32.xlu0 %v3449
        %v3477 = vpop.xlane.xlu0 %3476
        %3478 = vadd.xlane.f32.xlu0 %v3450
        %v3479 = vpop.xlane.xlu0 %3478
        %3480 = vadd.xlane.f32.xlu0 %v3451
        %v3481 = vpop.xlane.xlu0 %3480
        %3482 = vadd.xlane.f32.xlu0 %v3452
        %v3483 = vpop.xlane.xlu0 %3482
        %3484 = vadd.xlane.f32.xlu0 %v3453
        %v3485 = vpop.xlane.xlu0 %3484
        %v3486 = vmul.f32 %v3455, 0.25
        %v3487 = vmul.f32 %v3457, 0.25
        %v3488 = vmul.f32 %v3459, 0.25
        %v3489 = vmul.f32 %v3461, 0.25
        %v3490 = vmul.f32 %v3463, 0.25
        %v3491 = vmul.f32 %v3465, 0.25
        %v3492 = vmul.f32 %v3467, 0.25
        %v3493 = vmul.f32 %v3469, 0.25
        %v3494 = vmul.f32 %v3471, 0.25
        %v3495 = vmul.f32 %v3473, 0.25
        %v3496 = vmul.f32 %v3475, 0.25
        %v3497 = vmul.f32 %v3477, 0.25
        %v3498 = vmul.f32 %v3479, 0.25
        %v3499 = vmul.f32 %v3481, 0.25
        %v3500 = vmul.f32 %v3483, 0.25
        %v3501 = vmul.f32 %v3485, 0.25
        %v3502 = vmul.f32 %v3422, %v3422
        %v3503 = vmul.f32 %v3423, %v3423
        %v3504 = vmul.f32 %v3424, %v3424
        %v3505 = vmul.f32 %v3425, %v3425
        %v3506 = vmul.f32 %v3426, %v3426
        %v3507 = vmul.f32 %v3427, %v3427
        %v3508 = vmul.f32 %v3428, %v3428
        %v3509 = vmul.f32 %v3429, %v3429
        %v3510 = vmul.f32 %v3430, %v3430
        %v3511 = vmul.f32 %v3431, %v3431
        %v3512 = vmul.f32 %v3432, %v3432
        %v3513 = vmul.f32 %v3433, %v3433
        %v3514 = vmul.f32 %v3434, %v3434
        %v3515 = vmul.f32 %v3435, %v3435
        %v3516 = vmul.f32 %v3436, %v3436
        %v3517 = vmul.f32 %v3437, %v3437
        %v3518 = vsub.f32 %v3486, %v3502
        %v3519 = vsub.f32 %v3487, %v3503
        %v3520 = vsub.f32 %v3488, %v3504
        %v3521 = vsub.f32 %v3489, %v3505
        %v3522 = vsub.f32 %v3490, %v3506
        %v3523 = vsub.f32 %v3491, %v3507
        %v3524 = vsub.f32 %v3492, %v3508
        %v3525 = vsub.f32 %v3493, %v3509
        %v3526 = vsub.f32 %v3494, %v3510
        %v3527 = vsub.f32 %v3495, %v3511
        %v3528 = vsub.f32 %v3496, %v3512
        %v3529 = vsub.f32 %v3497, %v3513
        %v3530 = vsub.f32 %v3498, %v3514
        %v3531 = vsub.f32 %v3499, %v3515
        %v3532 = vsub.f32 %v3500, %v3516
        %v3533 = vsub.f32 %v3501, %v3517
        %v3534 = vmax.f32 %v3518, 0.0
        %v3535 = vmax.f32 %v3519, 0.0
        %v3536 = vmax.f32 %v3520, 0.0
        %v3537 = vmax.f32 %v3521, 0.0
        %v3538 = vmax.f32 %v3522, 0.0
        %v3539 = vmax.f32 %v3523, 0.0
        %v3540 = vmax.f32 %v3524, 0.0
        %v3541 = vmax.f32 %v3525, 0.0
        %v3542 = vmax.f32 %v3526, 0.0
        %v3543 = vmax.f32 %v3527, 0.0
        %v3544 = vmax.f32 %v3528, 0.0
        %v3545 = vmax.f32 %v3529, 0.0
        %v3546 = vmax.f32 %v3530, 0.0
        %v3547 = vmax.f32 %v3531, 0.0
        %v3548 = vmax.f32 %v3532, 0.0
        %v3549 = vmax.f32 %v3533, 0.0
        %v3550 = vsub.f32 %v3374, %v3422
        %v3551 = vsub.f32 %v3375, %v3423
        %v3552 = vsub.f32 %v3376, %v3424
        %v3553 = vsub.f32 %v3377, %v3425
        %v3554 = vsub.f32 %v3378, %v3426
        %v3555 = vsub.f32 %v3379, %v3427
        %v3556 = vsub.f32 %v3380, %v3428
        %v3557 = vsub.f32 %v3381, %v3429
        %v3558 = vsub.f32 %v3382, %v3430
        %v3559 = vsub.f32 %v3383, %v3431
        %v3560 = vsub.f32 %v3384, %v3432
        %v3561 = vsub.f32 %v3385, %v3433
        %v3562 = vsub.f32 %v3386, %v3434
        %v3563 = vsub.f32 %v3387, %v3435
        %v3564 = vsub.f32 %v3388, %v3436
        %v3565 = vsub.f32 %v3389, %v3437
        %v3566 = vadd.f32 %v3534, 1e-05
        %v3567 = vadd.f32 %v3535, 1e-05
        %v3568 = vadd.f32 %v3536, 1e-05
        %v3569 = vadd.f32 %v3537, 1e-05
        %v3570 = vadd.f32 %v3538, 1e-05
        %v3571 = vadd.f32 %v3539, 1e-05
        %v3572 = vadd.f32 %v3540, 1e-05
        %v3573 = vadd.f32 %v3541, 1e-05
        %v3574 = vadd.f32 %v3542, 1e-05
        %v3575 = vadd.f32 %v3543, 1e-05
        %v3576 = vadd.f32 %v3544, 1e-05
        %v3577 = vadd.f32 %v3545, 1e-05
        %v3578 = vadd.f32 %v3546, 1e-05
        %v3579 = vadd.f32 %v3547, 1e-05
        %v3580 = vadd.f32 %v3548, 1e-05
        %v3581 = vadd.f32 %v3549, 1e-05
        %v3582 = vrsqrt.pop %v3566
        %v3583 = vrsqrt.pop %v3567
        %v3584 = vrsqrt.pop %v3568
        %v3585 = vrsqrt.pop %v3569
        %v3586 = vrsqrt.pop %v3570
        %v3587 = vrsqrt.pop %v3571
        %v3588 = vrsqrt.pop %v3572
        %v3589 = vrsqrt.pop %v3573
        %v3590 = vrsqrt.pop %v3574
        %v3591 = vrsqrt.pop %v3575
        %v3592 = vrsqrt.pop %v3576
        %v3593 = vrsqrt.pop %v3577
        %v3594 = vrsqrt.pop %v3578
        %v3595 = vrsqrt.pop %v3579
        %v3596 = vrsqrt.pop %v3580
        %v3597 = vrsqrt.pop %v3581
        %v3598 = vmul.f32 %v3550, %v3582
        %v3599 = vmul.f32 %v3551, %v3583
        %v3600 = vmul.f32 %v3552, %v3584
        %v3601 = vmul.f32 %v3553, %v3585
        %v3602 = vmul.f32 %v3554, %v3586
        %v3603 = vmul.f32 %v3555, %v3587
        %v3604 = vmul.f32 %v3556, %v3588
        %v3605 = vmul.f32 %v3557, %v3589
        %v3606 = vmul.f32 %v3558, %v3590
        %v3607 = vmul.f32 %v3559, %v3591
        %v3608 = vmul.f32 %v3560, %v3592
        %v3609 = vmul.f32 %v3561, %v3593
        %v3610 = vmul.f32 %v3562, %v3594
        %v3611 = vmul.f32 %v3563, %v3595
        %v3612 = vmul.f32 %v3564, %v3596
        %v3613 = vmul.f32 %v3565, %v3597
        %v3615 = vlaneseq
        %v3616 = vshrl.u32 %v3615, 7
        %v3617 = vsub.s32 0, %v3616
        %v3618 = vrot.slane %v424, %v3617
        %v3620 = vmul.f32 %v3598, %v3618
        %v3621 = vmul.f32 %v3599, %v3618
        %v3622 = vmul.f32 %v3600, %v3618
        %v3623 = vmul.f32 %v3601, %v3618
        %v3624 = vmul.f32 %v3602, %v3618
        %v3625 = vmul.f32 %v3603, %v3618
        %v3626 = vmul.f32 %v3604, %v3618
        %v3627 = vmul.f32 %v3605, %v3618
        %v3628 = vmul.f32 %v3606, %v3618
        %v3629 = vmul.f32 %v3607, %v3618
        %v3630 = vmul.f32 %v3608, %v3618
        %v3631 = vmul.f32 %v3609, %v3618
        %v3632 = vmul.f32 %v3610, %v3618
        %v3633 = vmul.f32 %v3611, %v3618
        %v3634 = vmul.f32 %v3612, %v3618
        %v3635 = vmul.f32 %v3613, %v3618
        %v3637 = vlaneseq
        %v3638 = vshrl.u32 %v3637, 7
        %v3639 = vsub.s32 0, %v3638
        %v3640 = vrot.slane %v425, %v3639
        %v3642 = vadd.f32 %v3620, %v3640
        %v3643 = vadd.f32 %v3621, %v3640
        %v3644 = vadd.f32 %v3622, %v3640
        %v3645 = vadd.f32 %v3623, %v3640
        %v3646 = vadd.f32 %v3624, %v3640
        %v3647 = vadd.f32 %v3625, %v3640
        %v3648 = vadd.f32 %v3626, %v3640
        %v3649 = vadd.f32 %v3627, %v3640
        %v3650 = vadd.f32 %v3628, %v3640
        %v3651 = vadd.f32 %v3629, %v3640
        %v3652 = vadd.f32 %v3630, %v3640
        %v3653 = vadd.f32 %v3631, %v3640
        %v3654 = vadd.f32 %v3632, %v3640
        %v3655 = vadd.f32 %v3633, %v3640
        %v3656 = vadd.f32 %v3634, %v3640
        %v3657 = vadd.f32 %v3635, %v3640
        %v3658 = vpack.c.bf16 %v3643, %v3642
        %v3659 = vpack.c.bf16 %v3645, %v3644
        %v3660 = vpack.c.bf16 %v3647, %v3646
        %v3661 = vpack.c.bf16 %v3649, %v3648
        %v3662 = vpack.c.bf16 %v3651, %v3650
        %v3663 = vpack.c.bf16 %v3653, %v3652
        %v3664 = vpack.c.bf16 %v3655, %v3654
        %v3665 = vpack.c.bf16 %v3657, %v3656
        %3666 = vst [vmem:[#allocation3] sm:$0xff] %v3658
        %3667 = vst [vmem:[#allocation3 + $0x8] sm:$0xff] %v3659
        %3668 = vst [vmem:[#allocation3 + $0x10] sm:$0xff] %v3660
        %3669 = vst [vmem:[#allocation3 + $0x18] sm:$0xff] %v3661
        %3670 = vst [vmem:[#allocation3 + $0x20] sm:$0xff] %v3662
        %3671 = vst [vmem:[#allocation3 + $0x28] sm:$0xff] %v3663
        %3672 = vst [vmem:[#allocation3 + $0x30] sm:$0xff] %v3664
        %3673 = vst [vmem:[#allocation3 + $0x38] sm:$0xff] %v3665
        %3674 = vst [vmem:[%s342 - $0x3] sm:$0xf8] %v477
        %3675 = vst [vmem:[%s342 + $0x5] sm:$0xff] %v478
        %3676 = vst [vmem:[%s342 + $0xd] sm:$0x7] %v479
        %3677 = vst [vmem:[%s342 + $0xd] sm:$0xf8] %v480
        %3678 = vst [vmem:[%s342 + $0x15] sm:$0xff] %v481
        %3679 = vst [vmem:[%s342 + $0x1d] sm:$0x7] %v482
        %3680 = vst [vmem:[%s342 + $0x1d] sm:$0xf8] %v483
        %3681 = vst [vmem:[%s342 + $0x25] sm:$0xff] %v484
        %3682 = vst [vmem:[%s342 + $0x2d] sm:$0x7] %v485
        %3683 = vst [vmem:[%s342 + $0x2d] sm:$0xf8] %v486
        %3684 = vst [vmem:[%s342 + $0x35] sm:$0xff] %v487
        %3685 = vst [vmem:[%s342 + $0x3d] sm:$0x7] %v488
        %3686 = vst [vmem:[%s342 + $0x3d] sm:$0xf8] %v489
        %3687 = vst [vmem:[%s342 + $0x45] sm:$0xff] %v490
        %3688 = vst [vmem:[%s342 + $0x4d] sm:$0x7] %v491
        %3689 = vst [vmem:[%s342 + $0x4d] sm:$0xf8] %v492
        %3690 = vst [vmem:[%s342 + $0x55] sm:$0xff] %v493
        %3691 = vst [vmem:[%s342 + $0x5d] sm:$0x7] %v494
        %3692 = vst [vmem:[%s342 + $0x5d] sm:$0xf8] %v495
        %3693 = vst [vmem:[%s342 + $0x65] sm:$0xff] %v496
        %3694 = vst [vmem:[%s342 + $0x6d] sm:$0x7] %v497
        %3695 = vst [vmem:[%s342 + $0x6d] sm:$0xf8] %v498
        %3696 = vst [vmem:[%s342 + $0x75] sm:$0xff] %v499
        %3697 = vst [vmem:[%s342 + $0x7d] sm:$0x7] %v500
        %v3698 = vld [vmem:[#allocation3] sm:$0xff]
        %v3699 = vld [vmem:[#allocation3 + $0x8] sm:$0xff]
        %v3700 = vld [vmem:[#allocation3 + $0x10] sm:$0xff]
        %v3701 = vld [vmem:[#allocation3 + $0x18] sm:$0xff]
        %v3702 = vld [vmem:[#allocation3 + $0x20] sm:$0xff]
        %v3703 = vld [vmem:[#allocation3 + $0x28] sm:$0xff]
        %v3704 = vld [vmem:[#allocation3 + $0x30] sm:$0xff]
        %v3705 = vld [vmem:[#allocation3 + $0x38] sm:$0xff]
        %v3706 = vld [vmem:[#allocation8] sm:$0xf]
        %v3707 = vld [vmem:[#allocation8 + $0x4] sm:$0xf]
        %v3708 = vld [vmem:[#allocation8 + $0x8] sm:$0xf]
        %v3709 = vld [vmem:[#allocation8 + $0xc] sm:$0xf]
        %v3710 = vld [vmem:[#allocation8 + $0x10] sm:$0xf]
        %v3711 = vld [vmem:[#allocation8 + $0x14] sm:$0xf]
        %v3712 = vld [vmem:[#allocation8 + $0x18] sm:$0xf]
        %v3713 = vld [vmem:[#allocation8 + $0x1c] sm:$0xf]
        %v3714 = vld [vmem:[#allocation8 + $0x20] sm:$0xf]
        %v3715 = vld [vmem:[#allocation8 + $0x24] sm:$0xf]
        %v3716 = vld [vmem:[#allocation8 + $0x28] sm:$0xf]
        %v3717 = vld [vmem:[#allocation8 + $0x2c] sm:$0xf]
        %v3718 = vld [vmem:[#allocation8 + $0x30] sm:$0xf]
        %v3719 = vld [vmem:[#allocation8 + $0x34] sm:$0xf]
        %v3720 = vld [vmem:[#allocation8 + $0x38] sm:$0xf]
        %v3721 = vld [vmem:[#allocation8 + $0x3c] sm:$0xf]
        %v3722 = vld [vmem:[%s6] sm:$0x1]
        %v3724 = vlaneseq
        %v3725 = vshrl.u32 %v3724, 7
        %v3726 = vsub.s32 0, %v3725
        %v3727 = vrot.slane %v3722, %v3726
        %v3745 = vunpack.c.l.b16 %v3706
        %v3746 = vunpack.c.l.b16 %v3707
        %v3747 = vunpack.c.l.b16 %v3708
        %v3748 = vunpack.c.l.b16 %v3709
        %v3749 = vunpack.c.l.b16 %v3710
        %v3750 = vunpack.c.l.b16 %v3711
        %v3751 = vunpack.c.l.b16 %v3712
        %v3752 = vunpack.c.l.b16 %v3713
        %v3753 = vunpack.c.l.b16 %v3714
        %v3754 = vunpack.c.l.b16 %v3715
        %v3755 = vunpack.c.l.b16 %v3716
        %v3756 = vunpack.c.l.b16 %v3717
        %v3757 = vunpack.c.l.b16 %v3718
        %v3758 = vunpack.c.l.b16 %v3719
        %v3759 = vunpack.c.l.b16 %v3720
        %v3760 = vunpack.c.l.b16 %v3721
        %v3761 = vpack.c.b16 %v3746, %v3745
        %v3762 = vpack.c.b16 %v3748, %v3747
        %v3763 = vpack.c.b16 %v3750, %v3749
        %v3764 = vpack.c.b16 %v3752, %v3751
        %v3765 = vpack.c.b16 %v3754, %v3753
        %v3766 = vpack.c.b16 %v3756, %v3755
        %v3767 = vpack.c.b16 %v3758, %v3757
        %v3768 = vpack.c.b16 %v3760, %v3759
        %3777 = vmatprep.subr.bf16.mxu0 0
        %3778 = vmatpush1.bf16.msra.mxu0 %v3761
        %3779 = vmatprep.subr.bf16.mxu0 0
        %3780 = vmatpush1.bf16.msra.mxu0 %v3762
        %3781 = vmatprep.subr.bf16.mxu0 0
        %3782 = vmatpush1.bf16.msra.mxu0 %v3763
        %3783 = vmatprep.subr.bf16.mxu0 0
        %3784 = vmatpush1.bf16.msra.mxu0 %v3764
        %3785 = vmatprep.subr.bf16.mxu0 0
        %3786 = vmatpush1.bf16.msra.mxu0 %v3765
        %3787 = vmatprep.subr.bf16.mxu0 0
        %3788 = vmatpush1.bf16.msra.mxu0 %v3766
        %3789 = vmatprep.subr.bf16.mxu0 0
        %3790 = vmatpush1.bf16.msra.mxu0 %v3767
        %3791 = vmatprep.subr.bf16.mxu0 0
        %3792 = vmatpush1.bf16.msra.mxu0 %v3768
        %3793 = vmatprep.subr.bf16.mxu0 0
        %3794 = vmatpush1.bf16.msra.mxu0 0
        %3795 = vmatprep.subr.bf16.mxu0 0
        %3796 = vmatpush1.bf16.msra.mxu0 0
        %3797 = vmatprep.subr.bf16.mxu0 0
        %3798 = vmatpush1.bf16.msra.mxu0 0
        %3799 = vmatprep.subr.bf16.mxu0 0
        %3800 = vmatpush1.bf16.msra.mxu0 0
        %3801 = vmatprep.subr.bf16.mxu0 0
        %3802 = vmatpush1.bf16.msra.mxu0 0
        %3803 = vmatprep.subr.bf16.mxu0 0
        %3804 = vmatpush1.bf16.msra.mxu0 0
        %3805 = vmatprep.subr.bf16.mxu0 0
        %3806 = vmatpush1.bf16.msra.mxu0 0
        %3807 = vmatprep.subr.bf16.mxu0 0
        %3808 = vmatpush1.bf16.msra.mxu0 0
        %3809 = vmatprep.mubr.bf16.mxu0 0
        %3810 = vmatmul.mubr.bf16.gmra.mrb[0].mxu0 %v3698
        %v3811 = vpop.f32.mrb[0].mxu0
        %v3812 = vadd.f32 %v3727, %v3811
        %v3813 = vpop.f32.mrb[0].mxu0
        %v3814 = vpop.f32.mrb[0].mxu0
        %v3815 = vadd.f32 %v3727, %v3814
        %v3816 = vpop.f32.mrb[0].mxu0
        %3817 = vmatprep.mubr.bf16.mxu0 0
        %3818 = vmatmul.mubr.bf16.gmra.mrb[0].mxu0 %v3699
        %v3819 = vpop.f32.mrb[0].mxu0
        %v3820 = vadd.f32 %v3727, %v3819
        %v3821 = vpop.f32.mrb[0].mxu0
        %v3822 = vpop.f32.mrb[0].mxu0
        %v3823 = vadd.f32 %v3727, %v3822
        %v3824 = vpop.f32.mrb[0].mxu0
        %3825 = vmatprep.mubr.bf16.mxu0 0
        %3826 = vmatmul.mubr.bf16.gmra.mrb[0].mxu0 %v3700
        %v3827 = vpop.f32.mrb[0].mxu0
        %v3828 = vadd.f32 %v3727, %v3827
        %v3829 = vpop.f32.mrb[0].mxu0
        %v3830 = vpop.f32.mrb[0].mxu0
        %v3831 = vadd.f32 %v3727, %v3830
        %v3832 = vpop.f32.mrb[0].mxu0
        %3833 = vmatprep.mubr.bf16.mxu0 0
        %3834 = vmatmul.mubr.bf16.gmra.mrb[0].mxu0 %v3701
        %v3835 = vpop.f32.mrb[0].mxu0
        %v3836 = vadd.f32 %v3727, %v3835
        %v3837 = vpop.f32.mrb[0].mxu0
        %v3838 = vpop.f32.mrb[0].mxu0
        %v3839 = vadd.f32 %v3727, %v3838
        %v3840 = vpop.f32.mrb[0].mxu0
        %3841 = vmatprep.mubr.bf16.mxu0 0
        %3842 = vmatmul.mubr.bf16.gmra.mrb[0].mxu0 %v3702
        %v3843 = vpop.f32.mrb[0].mxu0
        %v3844 = vadd.f32 %v3727, %v3843
        %v3845 = vpop.f32.mrb[0].mxu0
        %v3846 = vpop.f32.mrb[0].mxu0
        %v3847 = vadd.f32 %v3727, %v3846
        %v3848 = vpop.f32.mrb[0].mxu0
        %3849 = vmatprep.mubr.bf16.mxu0 0
        %3850 = vmatmul.mubr.bf16.gmra.mrb[0].mxu0 %v3703
        %v3851 = vpop.f32.mrb[0].mxu0
        %v3852 = vadd.f32 %v3727, %v3851
        %v3853 = vpop.f32.mrb[0].mxu0
        %v3854 = vpop.f32.mrb[0].mxu0
        %v3855 = vadd.f32 %v3727, %v3854
        %v3856 = vpop.f32.mrb[0].mxu0
        %3857 = vmatprep.mubr.bf16.mxu0 0
        %3858 = vmatmul.mubr.bf16.gmra.mrb[0].mxu0 %v3704
        %v3859 = vpop.f32.mrb[0].mxu0
        %v3860 = vadd.f32 %v3727, %v3859
        %v3861 = vpop.f32.mrb[0].mxu0
        %v3862 = vpop.f32.mrb[0].mxu0
        %v3863 = vadd.f32 %v3727, %v3862
        %v3864 = vpop.f32.mrb[0].mxu0
        %3865 = vmatprep.mubr.bf16.mxu0 0
        %3866 = vmatmul.mubr.bf16.gmra.mrb[0].mxu0 %v3705
        %v3867 = vpop.f32.mrb[0].mxu0
        %v3868 = vadd.f32 %v3727, %v3867
        %v3869 = vpop.f32.mrb[0].mxu0
        %v3870 = vpop.f32.mrb[0].mxu0
        %v3871 = vadd.f32 %v3727, %v3870
        %v3872 = vpop.f32.mrb[0].mxu0
        %3873 = vdwg.mxu0
        %v3874 = vpack.c.bf16 %v3815, %v3812
        %v3875 = vpack.c.bf16 %v3823, %v3820
        %v3876 = vpack.c.bf16 %v3831, %v3828
        %v3877 = vpack.c.bf16 %v3839, %v3836
        %v3878 = vpack.c.bf16 %v3847, %v3844
        %v3879 = vpack.c.bf16 %v3855, %v3852
        %v3880 = vpack.c.bf16 %v3863, %v3860
        %v3881 = vpack.c.bf16 %v3871, %v3868
        %v3882 = vmul.bf16 %v3874, 1056980736
        %v3883 = vmul.bf16 %v3875, 1056980736
        %v3884 = vmul.bf16 %v3876, 1056980736
        %v3885 = vmul.bf16 %v3877, 1056980736
        %v3886 = vmul.bf16 %v3878, 1056980736
        %v3887 = vmul.bf16 %v3879, 1056980736
        %v3888 = vmul.bf16 %v3880, 1056980736
        %v3889 = vmul.bf16 %v3881, 1056980736
        %v3890 = vmul.bf16 %v3874, %v3874
        %v3891 = vmul.bf16 %v3875, %v3875
        %v3892 = vmul.bf16 %v3876, %v3876
        %v3893 = vmul.bf16 %v3877, %v3877
        %v3894 = vmul.bf16 %v3878, %v3878
        %v3895 = vmul.bf16 %v3879, %v3879
        %v3896 = vmul.bf16 %v3880, %v3880
        %v3897 = vmul.bf16 %v3881, %v3881
        %v3898 = vmul.bf16 %v3890, %v3874
        %v3899 = vmul.bf16 %v3891, %v3875
        %v3900 = vmul.bf16 %v3892, %v3876
        %v3901 = vmul.bf16 %v3893, %v3877
        %v3902 = vmul.bf16 %v3894, %v3878
        %v3903 = vmul.bf16 %v3895, %v3879
        %v3904 = vmul.bf16 %v3896, %v3880
        %v3905 = vmul.bf16 %v3897, %v3881
        %v3906 = vmul.bf16 %v3898, 1027030327
        %v3907 = vmul.bf16 %v3899, 1027030327
        %v3908 = vmul.bf16 %v3900, 1027030327
        %v3909 = vmul.bf16 %v3901, 1027030327
        %v3910 = vmul.bf16 %v3902, 1027030327
        %v3911 = vmul.bf16 %v3903, 1027030327
        %v3912 = vmul.bf16 %v3904, 1027030327
        %v3913 = vmul.bf16 %v3905, 1027030327
        %v3914 = vadd.bf16 %v3874, %v3906
        %v3915 = vadd.bf16 %v3875, %v3907
        %v3916 = vadd.bf16 %v3876, %v3908
        %v3917 = vadd.bf16 %v3877, %v3909
        %v3918 = vadd.bf16 %v3878, %v3910
        %v3919 = vadd.bf16 %v3879, %v3911
        %v3920 = vadd.bf16 %v3880, %v3912
        %v3921 = vadd.bf16 %v3881, %v3913
        %v3922 = vmul.bf16 %v3914, 1061961548
        %v3923 = vmul.bf16 %v3915, 1061961548
        %v3924 = vmul.bf16 %v3916, 1061961548
        %v3925 = vmul.bf16 %v3917, 1061961548
        %v3926 = vmul.bf16 %v3918, 1061961548
        %v3927 = vmul.bf16 %v3919, 1061961548
        %v3928 = vmul.bf16 %v3920, 1061961548
        %v3929 = vmul.bf16 %v3921, 1061961548
        %v3930 = vtanh.bf16.pop %v3922
        %v3931 = vtanh.bf16.pop %v3923
        %v3932 = vtanh.bf16.pop %v3924
        %v3933 = vtanh.bf16.pop %v3925
        %v3934 = vtanh.bf16.pop %v3926
        %v3935 = vtanh.bf16.pop %v3927
        %v3936 = vtanh.bf16.pop %v3928
        %v3937 = vtanh.bf16.pop %v3929
        %v3938 = vadd.bf16 %v3930, 1065369472
        %v3939 = vadd.bf16 %v3931, 1065369472
        %v3940 = vadd.bf16 %v3932, 1065369472
        %v3941 = vadd.bf16 %v3933, 1065369472
        %v3942 = vadd.bf16 %v3934, 1065369472
        %v3943 = vadd.bf16 %v3935, 1065369472
        %v3944 = vadd.bf16 %v3936, 1065369472
        %v3945 = vadd.bf16 %v3937, 1065369472
        %v3946 = vmul.bf16 %v3882, %v3938
        %v3947 = vmul.bf16 %v3883, %v3939
        %v3948 = vmul.bf16 %v3884, %v3940
        %v3949 = vmul.bf16 %v3885, %v3941
        %v3950 = vmul.bf16 %v3886, %v3942
        %v3951 = vmul.bf16 %v3887, %v3943
        %v3952 = vmul.bf16 %v3888, %v3944
        %v3953 = vmul.bf16 %v3889, %v3945
        %v3954 = vld [vmem:[#allocation10] sm:$0xf]
        %v3955 = vld [vmem:[#allocation10 + $0x4] sm:$0xf]
        %v3956 = vld [vmem:[#allocation10 + $0x8] sm:$0xf]
        %v3957 = vld [vmem:[#allocation10 + $0xc] sm:$0xf]
        %v3958 = vld [vmem:[#allocation10 + $0x10] sm:$0xf]
        %v3959 = vld [vmem:[#allocation10 + $0x14] sm:$0xf]
        %v3960 = vld [vmem:[#allocation10 + $0x18] sm:$0xf]
        %v3961 = vld [vmem:[#allocation10 + $0x1c] sm:$0xf]
        %v3962 = vld [vmem:[#allocation10 + $0x20] sm:$0xf]
        %v3963 = vld [vmem:[#allocation10 + $0x24] sm:$0xf]
        %v3964 = vld [vmem:[#allocation10 + $0x28] sm:$0xf]
        %v3965 = vld [vmem:[#allocation10 + $0x2c] sm:$0xf]
        %v3966 = vld [vmem:[#allocation10 + $0x30] sm:$0xf]
        %v3967 = vld [vmem:[#allocation10 + $0x34] sm:$0xf]
        %v3968 = vld [vmem:[#allocation10 + $0x38] sm:$0xf]
        %v3969 = vld [vmem:[#allocation10 + $0x3c] sm:$0xf]
        %v3970 = vld [vmem:[%s8] sm:$0x1]
        %v3972 = vlaneseq
        %v3973 = vshrl.u32 %v3972, 7
        %v3974 = vsub.s32 0, %v3973
        %v3975 = vrot.slane %v3970, %v3974
        %v3993 = vunpack.c.l.b16 %v3954
        %v3994 = vunpack.c.l.b16 %v3955
        %v3995 = vunpack.c.l.b16 %v3956
        %v3996 = vunpack.c.l.b16 %v3957
        %v3997 = vunpack.c.l.b16 %v3958
        %v3998 = vunpack.c.l.b16 %v3959
        %v3999 = vunpack.c.l.b16 %v3960
        %v4000 = vunpack.c.l.b16 %v3961
        %v4001 = vunpack.c.l.b16 %v3962
        %v4002 = vunpack.c.l.b16 %v3963
        %v4003 = vunpack.c.l.b16 %v3964
        %v4004 = vunpack.c.l.b16 %v3965
        %v4005 = vunpack.c.l.b16 %v3966
        %v4006 = vunpack.c.l.b16 %v3967
        %v4007 = vunpack.c.l.b16 %v3968
        %v4008 = vunpack.c.l.b16 %v3969
        %v4009 = vpack.c.b16 %v3994, %v3993
        %v4010 = vpack.c.b16 %v3996, %v3995
        %v4011 = vpack.c.b16 %v3998, %v3997
        %v4012 = vpack.c.b16 %v4000, %v3999
        %v4013 = vpack.c.b16 %v4002, %v4001
        %v4014 = vpack.c.b16 %v4004, %v4003
        %v4015 = vpack.c.b16 %v4006, %v4005
        %v4016 = vpack.c.b16 %v4008, %v4007
        %4025 = vmatprep.subr.bf16.mxu0 0
        %4026 = vmatpush1.bf16.msra.mxu0 %v4009
        %4027 = vmatprep.subr.bf16.mxu0 0
        %4028 = vmatpush1.bf16.msra.mxu0 %v4010
        %4029 = vmatprep.subr.bf16.mxu0 0
        %4030 = vmatpush1.bf16.msra.mxu0 %v4011
        %4031 = vmatprep.subr.bf16.mxu0 0
        %4032 = vmatpush1.bf16.msra.mxu0 %v4012
        %4033 = vmatprep.subr.bf16.mxu0 0
        %4034 = vmatpush1.bf16.msra.mxu0 %v4013
        %4035 = vmatprep.subr.bf16.mxu0 0
        %4036 = vmatpush1.bf16.msra.mxu0 %v4014
        %4037 = vmatprep.subr.bf16.mxu0 0
        %4038 = vmatpush1.bf16.msra.mxu0 %v4015
        %4039 = vmatprep.subr.bf16.mxu0 0
        %4040 = vmatpush1.bf16.msra.mxu0 %v4016
        %4041 = vmatprep.subr.bf16.mxu0 0
        %4042 = vmatpush1.bf16.msra.mxu0 0
        %4043 = vmatprep.subr.bf16.mxu0 0
        %4044 = vmatpush1.bf16.msra.mxu0 0
        %4045 = vmatprep.subr.bf16.mxu0 0
        %4046 = vmatpush1.bf16.msra.mxu0 0
        %4047 = vmatprep.subr.bf16.mxu0 0
        %4048 = vmatpush1.bf16.msra.mxu0 0
        %4049 = vmatprep.subr.bf16.mxu0 0
        %4050 = vmatpush1.bf16.msra.mxu0 0
        %4051 = vmatprep.subr.bf16.mxu0 0
        %4052 = vmatpush1.bf16.msra.mxu0 0
        %4053 = vmatprep.subr.bf16.mxu0 0
        %4054 = vmatpush1.bf16.msra.mxu0 0
        %4055 = vmatprep.subr.bf16.mxu0 0
        %4056 = vmatpush1.bf16.msra.mxu0 0
        %4057 = vmatprep.mubr.bf16.mxu0 0
        %4058 = vmatmul.mubr.bf16.gmra.mrb[0].mxu0 %v3946
        %v4059 = vpop.f32.mrb[0].mxu0
        %v4060 = vadd.f32 %v3975, %v4059
        %v4061 = vpop.f32.mrb[0].mxu0
        %v4062 = vpop.f32.mrb[0].mxu0
        %v4063 = vadd.f32 %v3975, %v4062
        %v4064 = vpop.f32.mrb[0].mxu0
        %4065 = vmatprep.mubr.bf16.mxu0 0
        %4066 = vmatmul.mubr.bf16.gmra.mrb[0].mxu0 %v3947
        %v4067 = vpop.f32.mrb[0].mxu0
        %v4068 = vadd.f32 %v3975, %v4067
        %v4069 = vpop.f32.mrb[0].mxu0
        %v4070 = vpop.f32.mrb[0].mxu0
        %v4071 = vadd.f32 %v3975, %v4070
        %v4072 = vpop.f32.mrb[0].mxu0
        %4073 = vmatprep.mubr.bf16.mxu0 0
        %4074 = vmatmul.mubr.bf16.gmra.mrb[0].mxu0 %v3948
        %v4075 = vpop.f32.mrb[0].mxu0
        %v4076 = vadd.f32 %v3975, %v4075
        %v4077 = vpop.f32.mrb[0].mxu0
        %v4078 = vpop.f32.mrb[0].mxu0
        %v4079 = vadd.f32 %v3975, %v4078
        %v4080 = vpop.f32.mrb[0].mxu0
        %4081 = vmatprep.mubr.bf16.mxu0 0
        %4082 = vmatmul.mubr.bf16.gmra.mrb[0].mxu0 %v3949
        %v4083 = vpop.f32.mrb[0].mxu0
        %v4084 = vadd.f32 %v3975, %v4083
        %v4085 = vpop.f32.mrb[0].mxu0
        %v4086 = vpop.f32.mrb[0].mxu0
        %v4087 = vadd.f32 %v3975, %v4086
        %v4088 = vpop.f32.mrb[0].mxu0
        %4089 = vmatprep.mubr.bf16.mxu0 0
        %4090 = vmatmul.mubr.bf16.gmra.mrb[0].mxu0 %v3950
        %v4091 = vpop.f32.mrb[0].mxu0
        %v4092 = vadd.f32 %v3975, %v4091
        %v4093 = vpop.f32.mrb[0].mxu0
        %v4094 = vpop.f32.mrb[0].mxu0
        %v4095 = vadd.f32 %v3975, %v4094
        %v4096 = vpop.f32.mrb[0].mxu0
        %4097 = vmatprep.mubr.bf16.mxu0 0
        %4098 = vmatmul.mubr.bf16.gmra.mrb[0].mxu0 %v3951
        %v4099 = vpop.f32.mrb[0].mxu0
        %v4100 = vadd.f32 %v3975, %v4099
        %v4101 = vpop.f32.mrb[0].mxu0
        %v4102 = vpop.f32.mrb[0].mxu0
        %v4103 = vadd.f32 %v3975, %v4102
        %v4104 = vpop.f32.mrb[0].mxu0
        %4105 = vmatprep.mubr.bf16.mxu0 0
        %4106 = vmatmul.mubr.bf16.gmra.mrb[0].mxu0 %v3952
        %v4107 = vpop.f32.mrb[0].mxu0
        %v4108 = vadd.f32 %v3975, %v4107
        %v4109 = vpop.f32.mrb[0].mxu0
        %v4110 = vpop.f32.mrb[0].mxu0
        %v4111 = vadd.f32 %v3975, %v4110
        %v4112 = vpop.f32.mrb[0].mxu0
        %4113 = vmatprep.mubr.bf16.mxu0 0
        %4114 = vmatmul.mubr.bf16.gmra.mrb[0].mxu0 %v3953
        %v4115 = vpop.f32.mrb[0].mxu0
        %v4116 = vadd.f32 %v3975, %v4115
        %v4117 = vpop.f32.mrb[0].mxu0
        %v4118 = vpop.f32.mrb[0].mxu0
        %v4119 = vadd.f32 %v3975, %v4118
        %v4120 = vpop.f32.mrb[0].mxu0
        %4121 = vdwg.mxu0
        %v4122 = vld [vmem:[%s342] sm:$0xff]
        %v4123 = vld [vmem:[%s342 + $0x8] sm:$0xff]
        %v4124 = vld [vmem:[%s342 + $0x10] sm:$0xff]
        %v4125 = vld [vmem:[%s342 + $0x18] sm:$0xff]
        %v4126 = vld [vmem:[%s342 + $0x20] sm:$0xff]
        %v4127 = vld [vmem:[%s342 + $0x28] sm:$0xff]
        %v4128 = vld [vmem:[%s342 + $0x30] sm:$0xff]
        %v4129 = vld [vmem:[%s342 + $0x38] sm:$0xff]
        %v4130 = vld [vmem:[%s342 + $0x40] sm:$0xff]
        %v4131 = vld [vmem:[%s342 + $0x48] sm:$0xff]
        %v4132 = vld [vmem:[%s342 + $0x50] sm:$0xff]
        %v4133 = vld [vmem:[%s342 + $0x58] sm:$0xff]
        %v4134 = vld [vmem:[%s342 + $0x60] sm:$0xff]
        %v4135 = vld [vmem:[%s342 + $0x68] sm:$0xff]
        %v4136 = vld [vmem:[%s342 + $0x70] sm:$0xff]
        %v4137 = vld [vmem:[%s342 + $0x78] sm:$0xff]
        %v4138 = vadd.f32 %v4122, %v4060
        %v4139 = vadd.f32 %v4123, %v4063
        %v4140 = vadd.f32 %v4124, %v4068
        %v4141 = vadd.f32 %v4125, %v4071
        %v4142 = vadd.f32 %v4126, %v4076
        %v4143 = vadd.f32 %v4127, %v4079
        %v4144 = vadd.f32 %v4128, %v4084
        %v4145 = vadd.f32 %v4129, %v4087
        %v4146 = vadd.f32 %v4130, %v4092
        %v4147 = vadd.f32 %v4131, %v4095
        %v4148 = vadd.f32 %v4132, %v4100
        %v4149 = vadd.f32 %v4133, %v4103
        %v4150 = vadd.f32 %v4134, %v4108
        %v4151 = vadd.f32 %v4135, %v4111
        %v4152 = vadd.f32 %v4136, %v4116
        %v4153 = vadd.f32 %v4137, %v4119
        %4154 = vst [vmem:[%s342] sm:$0xff] %v4138
        %4155 = vst [vmem:[%s342 + $0x8] sm:$0xff] %v4139
        %4156 = vst [vmem:[%s342 + $0x10] sm:$0xff] %v4140
        %4157 = vst [vmem:[%s342 + $0x18] sm:$0xff] %v4141
        %4158 = vst [vmem:[%s342 + $0x20] sm:$0xff] %v4142
        %4159 = vst [vmem:[%s342 + $0x28] sm:$0xff] %v4143
        %4160 = vst [vmem:[%s342 + $0x30] sm:$0xff] %v4144
        %4161 = vst [vmem:[%s342 + $0x38] sm:$0xff] %v4145
        %4162 = vst [vmem:[%s342 + $0x40] sm:$0xff] %v4146
        %4163 = vst [vmem:[%s342 + $0x48] sm:$0xff] %v4147
        %4164 = vst [vmem:[%s342 + $0x50] sm:$0xff] %v4148
        %4165 = vst [vmem:[%s342 + $0x58] sm:$0xff] %v4149
        %4166 = vst [vmem:[%s342 + $0x60] sm:$0xff] %v4150
        %4167 = vst [vmem:[%s342 + $0x68] sm:$0xff] %v4151
        %4168 = vst [vmem:[%s342 + $0x70] sm:$0xff] %v4152
        %4169 = vst [vmem:[%s342 + $0x78] sm:$0xff] %v4153
        %s4170 = sand.u32 %s215, 1
        %s4171 = scalar_lea.sflag [#allocation7], %s4170
        %s4172 = sand.u32 %s215, 1
        %s4173 = smul.addr %s4172, 128
        %s4174 = scalar_lea.vmem [#allocation11], %s4173
        // Predicated region
        $region81: #{tpu_custom_call.1} parent=51 // pred_check
          %p4175 = pneg %p225
        $region82: #{tpu_custom_call.1} parent=51 // pred_check_branch
          %4177 = sbr.rel (%p4175) target = $region84
        $region83: #{tpu_custom_call.1} parent=51 // pred_region
          %s4178 = smul.u32 8, %s30
          %s4180 = ssub.s32 2048, 2048
          %4181 = vsyncadd %s4171, %s4180
          %s4182 = smul.addr %s4178, 2
          %s4183 = smul.addr %s29, 32
          %s4184 = sadd.s32 %s4182, %s4183
          %s4185 = smul.addr %s4184, 128
          %s4186 = scalar_lea.hbm %s9, %s4185
          %s4187 = sshll.u32 %s4174, 4
          %s4188 = int_to_ptr.vmem [resolvable:$true] %s4187
          %4193 = dma.vmem_to_hbm [thread:$0]  %s4188, 2048, %s4186, %s4171, 128, 128, 8
        $region84: #{tpu_custom_call.1} parent=51 // pred_fallthru
          _
      $region52: #{tpu_custom_call.1} parent=5 // pred_fallthru
        _
      %p4194 = scmp.le.s32.totalorder 2, %s20
      // Predicated region
      $region85: #{tpu_custom_call.1} parent=5 // pred_check
        %p4195 = pneg %p4194
      $region86: #{tpu_custom_call.1} parent=5 // pred_check_branch
        %4197 = sbr.rel (%p4195) target = $region88
      $region87: #{tpu_custom_call.1} parent=5 // pred_region
        %s4198 = ssub.s32 %s20, 2
        // Predicated region
        $region89: #{tpu_custom_call.1} parent=87 // pred_check
          %p4199 = pneg %p231
        $region90: #{tpu_custom_call.1} parent=87 // pred_check_branch
          %4201 = sbr.rel (%p4199) target = $region92
        $region91: #{tpu_custom_call.1} parent=87 // pred_region
          %s4202 = sand.u32 %s216, 1
          %s4203 = scalar_lea.sflag [#allocation7], %s4202
          %s4204 = sand.u32 %s216, 1
          %s4205 = smul.addr %s4204, 128
          %s4206 = scalar_lea.vmem [#allocation11], %s4205
          %4207 = dma.done %s4203, 2048
        $region92: #{tpu_custom_call.1} parent=87 // pred_fallthru
          _
      $region88: #{tpu_custom_call.1} parent=5 // pred_fallthru
        _
    $region6: #{tpu_custom_call.1} parent=1 // loop_footer
      %s24 = sadd.s32 1, %s20
    $region7: #{tpu_custom_call.1} parent=1 // loop_footer_branch
      %19 = sbr.rel target = $region3
    $region8: #{tpu_custom_call.1} parent=1 // loop_exit
      _
    %4208 = vsyncpa [#allocation6], 1
    %s4209 = scalar_lea.sflag [#allocation6], 1
    %4210 = vsyncpa %s4209, 1
    %4211 = vsyncpa [#allocation9], 1
    %4212 = vsyncpa [#allocation7], 1
    %s4213 = scalar_lea.sflag [#allocation7], 1
    %4214 = vsyncpa %s4213, 1
  %4215 = vsyncmov [#allocation4]
  %s4216 = vpop.sfrf %4215
  %p4217 = scmp.eq.s32.totalorder %s4216, 0
  %p4218 = pneg %p4217
  %4220 = shalt.err (%p4218)
  %s4221 = scalar_lea.sflag [#allocation4], 1
  %4222 = vsyncmov %s4221
  %s4223 = vpop.sfrf %4222
  %p4224 = scmp.eq.s32.totalorder %s4223, 0
  %p4225 = pneg %p4224
  %4227 = shalt.err (%p4225)

</llo_original>
